<compile_context>
chip_gen: v6e
topology: v6e:2x2x1
jax: 0.10.0
libtpu: 0.0.40
codegen_flags: <defaults>
</compile_context>

<pallas_src>
import jax
import jax.numpy as jnp
from jax.experimental import pallas as pl
from jax.experimental.pallas import tpu as pltpu


_LANE = 128
_TILE_CAP = 512           # keeps write-pass VMEM residency ~<12 MB on all gens
_VMEM_LIMIT = 32 << 20    # above v5e's 16 MiB default scoped, inside v7x's 64 MiB


def _is_v5e():
    """v5e has a 4x128^2 MXU: keep the split K=128 conv3 form there."""
    try:
        kind = jax.devices()[0].device_kind.lower()
        return ("v5e" in kind) or ("v5 lite" in kind) or ("v5lite" in kind)
    except Exception:
        return False


def _pick_tile_n(n_pad, cap=_TILE_CAP):
    """Largest multiple-of-128 divisor of n_pad that is <= cap."""
    t = min(n_pad, (cap // _LANE) * _LANE)
    while t > _LANE:
        if n_pad % t == 0:
            return t
        t -= _LANE
    return _LANE


def densefusion_forward(rgb_emb, pcld_emb, params, tile_n=None):
    """rgb_emb: (B, 128, N) f32, pcld_emb: (B, 3, N) f32  ->  (B, 1792, N) f32."""
    B, c_rgb, N = rgb_emb.shape
    assert c_rgb == 128 and pcld_emb.shape == (B, 3, N)
    (w1, b1, w2r, b2r, w2c, b2c, w3, b3, w4, b4) = params

    bf16 = jnp.bfloat16
    n_inv = 1.0 / float(N)

    # ---- Pad N to a multiple of 128 (lane-dense stores, real pipelining) ----
    N_pad = ((N + _LANE - 1) // _LANE) * _LANE
    padded = N_pad != N
    if padded:
        pad_cfg = ((0, 0), (0, 0), (0, N_pad - N))
        rgb_f32 = jnp.pad(rgb_emb, pad_cfg)
        pcld = jnp.pad(pcld_emb, pad_cfg)
    else:
        rgb_f32 = rgb_emb
        pcld = pcld_emb
    rgb_h = rgb_f32.astype(bf16)        # bf16 copy: pass 1 only ever needs bf16

    T = _pick_tile_n(N_pad) if tile_n is None else tile_n
    assert T % _LANE == 0 and N_pad % T == 0, (N, N_pad, T)
    nt = N_pad // T

    fuse_conv3 = not _is_v5e()          # single K=256 dot on v6e/v7x, split on v5e

    # bf16 weights for the MXU chain; biases stay f32.
    w2r_h = w2r.astype(bf16)
    w2c_h = w2c.astype(bf16)
    w3_h = w3.astype(bf16)              # (512, 256)
    w4_h = w4.astype(bf16)              # (1024, 512)

    def cld1_of(pcld_tile, w1_ref, b1_ref):
        # conv1_cld (Cin=3): 3 VPU broadcast-FMAs instead of a pad-heavy MXU dot.
        w = w1_ref[...]                                        # (128, 3) f32
        pre = (w[:, 0:1] * pcld_tile[0:1, :]
               + w[:, 1:2] * pcld_tile[1:2, :]
               + w[:, 2:3] * pcld_tile[2:3, :]
               + b1_ref[...])
        return jnp.maximum(pre, 0.0)                           # (128, T) f32

    # ---- Pass 1: accumulate sum_n(rgbd) per batch (for AvgPool1d) ------------
    # TODO(synk): for B=1 on v7x, split this reduction across both TensorCores
    # (per-core partial sums combined in the wrapper) to use the second TC.
    def reduce_kernel(rgb_ref, pcld_ref, w1_ref, b1_ref, w3_ref, b3_ref,
                      w4_ref, b4_ref, sum_ref):
        @pl.when(pl.program_id(1) == 0)
        def _():
            sum_ref[...] = jnp.zeros_like(sum_ref)

        rgb = rgb_ref[0]                                       # (128, T) bf16
        cld1 = cld1_of(pcld_ref[0], w1_ref, b1_ref)            # (128, T) f32
        cld1_h = cld1.astype(bf16)

        if fuse_conv3:
            # One K=256 contraction fills the 256-deep MXU (v6e / v7x).
            feat1 = jnp.concatenate([rgb, cld1_h], axis=0)     # (256, T) bf16
            h = jnp.dot(w3_ref[...], feat1,
                        preferred_element_type=jnp.float32)
        else:
            # v5e (4x128^2 MXU): K=128 already fits; skip the concat copy.
            w3f = w3_ref[...]
            h = jnp.dot(w3f[:, :128], rgb,
                        preferred_element_type=jnp.float32)
            h = h + jnp.dot(w3f[:, 128:], cld1_h,
                            preferred_element_type=jnp.float32)
        h = jnp.maximum(h + b3_ref[...], 0.0).astype(bf16)     # (512, T)
        rgbd = jnp.dot(w4_ref[...], h, preferred_element_type=jnp.float32)
        rgbd = jnp.maximum(rgbd + b4_ref[...], 0.0)            # (1024, T) f32

        if padded:
            # Zero contributions from padded columns so the mean uses only N.
            col = (pl.program_id(1) * T
                   + jax.lax.broadcasted_iota(jnp.int32, (1, T), 1))
            rgbd = rgbd * (col < N).astype(jnp.float32)

        sum_ref[...] += jnp.sum(rgbd, axis=1, keepdims=True)[None]

    # ---- Pass 2: write every output tile exactly once ------------------------
    def write_kernel(rgb_ref, pcld_ref, sum_ref, w1_ref, b1_ref, w2r_ref,
                     b2r_ref, w2c_ref, b2c_ref, out_ref):
        rgb = rgb_ref[0]                                       # (128, T) f32
        cld1 = cld1_of(pcld_ref[0], w1_ref, b1_ref)            # (128, T) f32
        rgb2 = jnp.maximum(
            jnp.dot(w2r_ref[...], rgb.astype(bf16),
                    preferred_element_type=jnp.float32) + b2r_ref[...], 0.0)
        cld2 = jnp.maximum(
            jnp.dot(w2c_ref[...], cld1.astype(bf16),
                    preferred_element_type=jnp.float32) + b2c_ref[...], 0.0)
        ap = sum_ref[0] * n_inv                                # (1024, 1) f32

        # Direct slice stores: sublane offsets are multiples of 8, lane dim T
        # is a multiple of 128 -> unmasked lane-dense vst.
        out_ref[0, 0:128, :] = rgb          # feat_1[:128]  (verbatim rgb_emb)
        out_ref[0, 128:256, :] = cld1       # feat_1[128:]
        out_ref[0, 256:512, :] = rgb2       # feat_2[:256]
        out_ref[0, 512:768, :] = cld2       # feat_2[256:]
        out_ref[0, 768:1792, :] = jnp.broadcast_to(ap, (1024, T))   # ap_x repeat

    def wspec(a):
        nd = a.ndim
        return pl.BlockSpec(a.shape, lambda b, j, _nd=nd: (0,) * _nd)

    rgb_spec = pl.BlockSpec((1, 128, T), lambda b, j: (b, 0, j))
    pcld_spec = pl.BlockSpec((1, 3, T), lambda b, j: (b, 0, j))
    sum_spec = pl.BlockSpec((1, 1024, 1), lambda b, j: (b, 0, 0))

    sums = pl.pallas_call(
        reduce_kernel,
        out_shape=jax.ShapeDtypeStruct((B, 1024, 1), jnp.float32),
        grid_spec=pltpu.PrefetchScalarGridSpec(
            num_scalar_prefetch=0,
            grid=(B, nt),
            in_specs=[rgb_spec, pcld_spec,
                      wspec(w1), wspec(b1), wspec(w3_h), wspec(b3),
                      wspec(w4_h), wspec(b4)],
            out_specs=sum_spec,
        ),
        compiler_params=pltpu.CompilerParams(
            dimension_semantics=("parallel", "arbitrary"),
            vmem_limit_bytes=_VMEM_LIMIT),
    )(rgb_h, pcld, w1, b1, w3_h, b3, w4_h, b4)

    out = pl.pallas_call(
        write_kernel,
        out_shape=jax.ShapeDtypeStruct((B, 1792, N_pad), jnp.float32),
        grid_spec=pltpu.PrefetchScalarGridSpec(
            num_scalar_prefetch=0,
            grid=(B, nt),
            in_specs=[rgb_spec, pcld_spec, sum_spec,
                      wspec(w1), wspec(b1), wspec(w2r_h), wspec(b2r),
                      wspec(w2c_h), wspec(b2c)],
            out_specs=pl.BlockSpec((1, 1792, T), lambda b, j: (b, 0, j)),
        ),
        compiler_params=pltpu.CompilerParams(
            dimension_semantics=("parallel", "parallel"),
            vmem_limit_bytes=_VMEM_LIMIT),
    )(rgb_f32, pcld, sums, w1, b1, w2r_h, b2r, w2c_h, b2c)

    if padded:
        out = out[:, :, :N]
    return out  # (B, 1792, N), same layout as the PyTorch module


def make_params(key):
    """Deterministic synthetic weights. Conv1d(i, o, 1): weight (o, i), bias (o, 1)."""
    def lin(k, cin, cout):
        kw, kb = jax.random.split(k)
        s = 1.0 / (cin ** 0.5)
        w = jax.random.uniform(kw, (cout, cin), jnp.float32, -s, s)
        b = jax.random.uniform(kb, (cout, 1), jnp.float32, -s, s)
        return w, b

    k1, k2, k3, k4, k5 = jax.random.split(key, 5)
    w1, b1 = lin(k1, 3, 128)       # conv1_cld
    w2r, b2r = lin(k2, 128, 256)   # conv2_rgb
    w2c, b2c = lin(k3, 128, 256)   # conv2_cld
    w3, b3 = lin(k4, 256, 512)     # conv3
    w4, b4 = lin(k5, 512, 1024)    # conv4
    return (w1, b1, w2r, b2r, w2c, b2c, w3, b3, w4, b4)


def densefusion_reference(rgb_emb, pcld_emb, params):
    """Plain-JAX f32 reference mirroring the PyTorch forward (for validation)."""
    (w1, b1, w2r, b2r, w2c, b2c, w3, b3, w4, b4) = params

    def conv1x1(x, w, b):          # x: (B, Cin, N), w: (Cout, Cin), b: (Cout, 1)
        return jnp.maximum(jnp.einsum("oc,bcn->bon", w, x) + b[None], 0.0)

    cld1 = conv1x1(pcld_emb, w1, b1)
    feat_1 = jnp.concatenate([rgb_emb, cld1], axis=1)
    rgb2 = conv1x1(rgb_emb, w2r, b2r)
    cld2 = conv1x1(cld1, w2c, b2c)
    feat_2 = jnp.concatenate([rgb2, cld2], axis=1)
    rgbd = conv1x1(feat_1, w3, b3)
    rgbd = conv1x1(rgbd, w4, b4)
    ap = jnp.mean(rgbd, axis=2, keepdims=True)
    ap = jnp.broadcast_to(ap, rgbd.shape)
    return jnp.concatenate([feat_1, feat_2, ap], axis=1)


if __name__ == "__main__":
    key = jax.random.PRNGKey(0)
    k_rgb, k_pcld, k_params = jax.random.split(key, 3)
    params = make_params(k_params)

    # Case 1: single N tile (num_points = 128).
    # Case 2: multi-tile reduce-then-write path (N = 256, TILE_N = 128).
    # Case 3: non-multiple-of-128 N (200 -> padded to 256) + masked last tile.
    for (B, N, tile_n) in [(2, 128, None), (2, 256, 128), (1, 200, 128)]:
        rgb_emb = jax.random.normal(k_rgb, (B, 128, N), jnp.float32)
        pcld_emb = jax.random.normal(k_pcld, (B, 3, N), jnp.float32)

        out = jax.block_until_ready(
            densefusion_forward(rgb_emb, pcld_emb, params, tile_n=tile_n))
        ref = jax.block_until_ready(
            densefusion_reference(rgb_emb, pcld_emb, params))

        assert out.shape == (B, 1792, N), out.shape
        # bf16 MXU chain vs f32 reference -> loose tolerance.
        assert jnp.allclose(out, ref, atol=5e-2, rtol=5e-2), "mismatch vs reference"

    print("KERNEL_OK")
</pallas_src>

<mosaic_0001>
module attributes {stable_mosaic.version = 11 : i64} {
  func.func @reduce_kernel(%arg0: i32, %arg1: i32, %arg2: memref<1x128x128xbf16, #tpu.memory_space<vmem>>, %arg3: memref<1x3x128xf32, #tpu.memory_space<vmem>>, %arg4: memref<128x3xf32, #tpu.memory_space<vmem>>, %arg5: memref<128x1xf32, #tpu.memory_space<vmem>>, %arg6: memref<512x256xbf16, #tpu.memory_space<vmem>>, %arg7: memref<512x1xf32, #tpu.memory_space<vmem>>, %arg8: memref<1024x512xbf16, #tpu.memory_space<vmem>>, %arg9: memref<1024x1xf32, #tpu.memory_space<vmem>>, %arg10: memref<1x1024x1xf32, #tpu.memory_space<vmem>>) attributes {dimension_semantics = [#tpu.dimension_semantics<parallel>, #tpu.dimension_semantics<arbitrary>], iteration_bounds = array<i64: 2, 1>, scalar_prefetch = 0 : i64, scratch_operands = 0 : i64, tpu.core_type = #tpu.core_type<tc>, window_params = [{transform_indices = @transform_0, window_bounds = array<i64: 1, 128, 128>}, {transform_indices = @transform_1, window_bounds = array<i64: 1, 3, 128>}, {pipeline_mode = #tpu.pipeline_mode<synchronous>, transform_indices = @transform_2, window_bounds = array<i64: 128, 3>}, {pipeline_mode = #tpu.pipeline_mode<synchronous>, transform_indices = @transform_3, window_bounds = array<i64: 128, 1>}, {pipeline_mode = #tpu.pipeline_mode<synchronous>, transform_indices = @transform_4, window_bounds = array<i64: 512, 256>}, {pipeline_mode = #tpu.pipeline_mode<synchronous>, transform_indices = @transform_5, window_bounds = array<i64: 512, 1>}, {pipeline_mode = #tpu.pipeline_mode<synchronous>, transform_indices = @transform_6, window_bounds = array<i64: 1024, 512>}, {pipeline_mode = #tpu.pipeline_mode<synchronous>, transform_indices = @transform_7, window_bounds = array<i64: 1024, 1>}, {transform_indices = @transform_8, window_bounds = array<i64: 1, 1024, 1>}]} {
    %c0_i32 = arith.constant 0 : i32
    %0 = arith.cmpi eq, %arg1, %c0_i32 : i32
    %1 = arith.extui %0 : i1 to i32
    %c0_i32_0 = arith.constant 0 : i32
    %2 = arith.cmpi ne, %1, %c0_i32_0 : i32
    scf.if %2 {
      %cst_29 = arith.constant 0.000000e+00 : f32
      %53 = vector.broadcast %cst_29 : f32 to vector<1x1024x1xf32>
      %c0_30 = arith.constant 0 : index
      %c0_31 = arith.constant 0 : index
      %c0_32 = arith.constant 0 : index
      %54 = vector.load %arg10[%c0_30, %c0_31, %c0_32] : memref<1x1024x1xf32, #tpu.memory_space<vmem>>, vector<1x1024x1xf32>
      tpu.vector_store %arg10[%c0_30, %c0_31, %c0_32], %53 {strides = array<i32>} : memref<1x1024x1xf32, #tpu.memory_space<vmem>>, vector<1x1024x1xf32>,
    } else {
    }
    %c0 = arith.constant 0 : index
    %c0_1 = arith.constant 0 : index
    %c0_2 = arith.constant 0 : index
    %3 = vector.load %arg2[%c0, %c0_1, %c0_2] : memref<1x128x128xbf16, #tpu.memory_space<vmem>>, vector<1x128x128xbf16>
    %4 = vector.shape_cast %3 : vector<1x128x128xbf16> to vector<128x128xbf16>
    %c0_3 = arith.constant 0 : index
    %c0_4 = arith.constant 0 : index
    %c0_5 = arith.constant 0 : index
    %5 = vector.load %arg3[%c0_3, %c0_4, %c0_5] : memref<1x3x128xf32, #tpu.memory_space<vmem>>, vector<1x3x128xf32>
    %6 = vector.shape_cast %5 : vector<1x3x128xf32> to vector<3x128xf32>
    %c0_6 = arith.constant 0 : index
    %c0_7 = arith.constant 0 : index
    %7 = vector.load %arg4[%c0_6, %c0_7] : memref<128x3xf32, #tpu.memory_space<vmem>>, vector<128x3xf32>
    %8 = vector.extract_strided_slice %7 {offsets = [0, 0], sizes = [128, 1], strides = [1, 1]} : vector<128x3xf32> to vector<128x1xf32>
    %9 = vector.extract_strided_slice %6 {offsets = [0, 0], sizes = [1, 128], strides = [1, 1]} : vector<3x128xf32> to vector<1x128xf32>
    %10 = vector.broadcast %8 : vector<128x1xf32> to vector<128x128xf32>
    %11 = vector.broadcast %9 : vector<1x128xf32> to vector<128x128xf32>
    %12 = arith.mulf %10, %11 : vector<128x128xf32>
    %13 = vector.extract_strided_slice %7 {offsets = [0, 1], sizes = [128, 1], strides = [1, 1]} : vector<128x3xf32> to vector<128x1xf32>
    %14 = vector.extract_strided_slice %6 {offsets = [1, 0], sizes = [1, 128], strides = [1, 1]} : vector<3x128xf32> to vector<1x128xf32>
    %15 = vector.broadcast %13 : vector<128x1xf32> to vector<128x128xf32>
    %16 = vector.broadcast %14 : vector<1x128xf32> to vector<128x128xf32>
    %17 = arith.mulf %15, %16 : vector<128x128xf32>
    %18 = arith.addf %12, %17 : vector<128x128xf32>
    %19 = vector.extract_strided_slice %7 {offsets = [0, 2], sizes = [128, 1], strides = [1, 1]} : vector<128x3xf32> to vector<128x1xf32>
    %20 = vector.extract_strided_slice %6 {offsets = [2, 0], sizes = [1, 128], strides = [1, 1]} : vector<3x128xf32> to vector<1x128xf32>
    %21 = vector.broadcast %19 : vector<128x1xf32> to vector<128x128xf32>
    %22 = vector.broadcast %20 : vector<1x128xf32> to vector<128x128xf32>
    %23 = arith.mulf %21, %22 : vector<128x128xf32>
    %24 = arith.addf %18, %23 : vector<128x128xf32>
    %c0_8 = arith.constant 0 : index
    %c0_9 = arith.constant 0 : index
    %25 = vector.load %arg5[%c0_8, %c0_9] : memref<128x1xf32, #tpu.memory_space<vmem>>, vector<128x1xf32>
    %26 = vector.broadcast %25 : vector<128x1xf32> to vector<128x128xf32>
    %27 = arith.addf %24, %26 : vector<128x128xf32>
    %cst = arith.constant 0.000000e+00 : f32
    %28 = vector.broadcast %cst : f32 to vector<128x128xf32>
    %29 = arith.maximumf %27, %28 : vector<128x128xf32>
    %30 = arith.truncf %29 : vector<128x128xf32> to vector<128x128xbf16>
    %31 = tpu.concatenate %4, %30 in 0 : vector<128x128xbf16>, vector<128x128xbf16> -> vector<256x128xbf16>
    %c0_10 = arith.constant 0 : index
    %c0_11 = arith.constant 0 : index
    %32 = vector.load %arg6[%c0_10, %c0_11] : memref<512x256xbf16, #tpu.memory_space<vmem>>, vector<512x256xbf16>
    %cst_12 = arith.constant dense<0.000000e+00> : vector<512x128xf32>
    %33 = tpu.matmul %32, %31, %cst_12 {dimension_numbers = #tpu.dot_dimension_numbers<[1], [0], [0], [1], [0, 0, 1, 1], [], []>} : vector<512x256xbf16>, vector<256x128xbf16>, vector<512x128xf32> -> vector<512x128xf32>
    %c0_13 = arith.constant 0 : index
    %c0_14 = arith.constant 0 : index
    %34 = vector.load %arg7[%c0_13, %c0_14] : memref<512x1xf32, #tpu.memory_space<vmem>>, vector<512x1xf32>
    %35 = vector.broadcast %34 : vector<512x1xf32> to vector<512x128xf32>
    %36 = arith.addf %33, %35 : vector<512x128xf32>
    %cst_15 = arith.constant 0.000000e+00 : f32
    %37 = vector.broadcast %cst_15 : f32 to vector<512x128xf32>
    %38 = arith.maximumf %36, %37 : vector<512x128xf32>
    %39 = arith.truncf %38 : vector<512x128xf32> to vector<512x128xbf16>
    %c0_16 = arith.constant 0 : index
    %c0_17 = arith.constant 0 : index
    %40 = vector.load %arg8[%c0_16, %c0_17] : memref<1024x512xbf16, #tpu.memory_space<vmem>>, vector<1024x512xbf16>
    %cst_18 = arith.constant dense<0.000000e+00> : vector<1024x128xf32>
    %41 = tpu.matmul %40, %39, %cst_18 {dimension_numbers = #tpu.dot_dimension_numbers<[1], [0], [0], [1], [0, 0, 1, 1], [], []>} : vector<1024x512xbf16>, vector<512x128xbf16>, vector<1024x128xf32> -> vector<1024x128xf32>
    %c0_19 = arith.constant 0 : index
    %c0_20 = arith.constant 0 : index
    %42 = vector.load %arg9[%c0_19, %c0_20] : memref<1024x1xf32, #tpu.memory_space<vmem>>, vector<1024x1xf32>
    %43 = vector.broadcast %42 : vector<1024x1xf32> to vector<1024x128xf32>
    %44 = arith.addf %41, %43 : vector<1024x128xf32>
    %cst_21 = arith.constant 0.000000e+00 : f32
    %45 = vector.broadcast %cst_21 : f32 to vector<1024x128xf32>
    %46 = arith.maximumf %44, %45 : vector<1024x128xf32>
    %c0_22 = arith.constant 0 : index
    %c0_23 = arith.constant 0 : index
    %c0_24 = arith.constant 0 : index
    %47 = vector.load %arg10[%c0_22, %c0_23, %c0_24] : memref<1x1024x1xf32, #tpu.memory_space<vmem>>, vector<1x1024x1xf32>
    %cst_25 = arith.constant dense<0.000000e+00> : vector<1024xf32>
    %48 = vector.multi_reduction <add>, %46, %cst_25 [1] : vector<1024x128xf32> to vector<1024xf32>
    %49 = vector.shape_cast %48 : vector<1024xf32> to vector<1024x1xf32>
    %50 = vector.shape_cast %49 : vector<1024x1xf32> to vector<1x1024x1xf32>
    %51 = arith.addf %47, %50 : vector<1x1024x1xf32>
    %c0_26 = arith.constant 0 : index
    %c0_27 = arith.constant 0 : index
    %c0_28 = arith.constant 0 : index
    %52 = vector.load %arg10[%c0_26, %c0_27, %c0_28] : memref<1x1024x1xf32, #tpu.memory_space<vmem>>, vector<1x1024x1xf32>
    tpu.vector_store %arg10[%c0_26, %c0_27, %c0_28], %51 {strides = array<i32>} : memref<1x1024x1xf32, #tpu.memory_space<vmem>>, vector<1x1024x1xf32>,
    return
  }
  func.func @transform_0(%arg0: i32, %arg1: i32) -> (i32, i32, i32) {
    %c0_i32 = arith.constant 0 : i32
    %c0_i32_0 = arith.constant 0 : i32
    return %arg0, %c0_i32, %arg1 : i32, i32, i32
  }
  func.func @transform_1(%arg0: i32, %arg1: i32) -> (i32, i32, i32) {
    %c0_i32 = arith.constant 0 : i32
    %c0_i32_0 = arith.constant 0 : i32
    return %arg0, %c0_i32, %arg1 : i32, i32, i32
  }
  func.func @transform_2(%arg0: i32, %arg1: i32) -> (i32, i32) {
    %c0_i32 = arith.constant 0 : i32
    %c0_i32_0 = arith.constant 0 : i32
    %c0_i32_1 = arith.constant 0 : i32
    return %c0_i32, %c0_i32_0 : i32, i32
  }
  func.func @transform_3(%arg0: i32, %arg1: i32) -> (i32, i32) {
    %c0_i32 = arith.constant 0 : i32
    %c0_i32_0 = arith.constant 0 : i32
    %c0_i32_1 = arith.constant 0 : i32
    return %c0_i32, %c0_i32_0 : i32, i32
  }
  func.func @transform_4(%arg0: i32, %arg1: i32) -> (i32, i32) {
    %c0_i32 = arith.constant 0 : i32
    %c0_i32_0 = arith.constant 0 : i32
    %c0_i32_1 = arith.constant 0 : i32
    return %c0_i32, %c0_i32_0 : i32, i32
  }
  func.func @transform_5(%arg0: i32, %arg1: i32) -> (i32, i32) {
    %c0_i32 = arith.constant 0 : i32
    %c0_i32_0 = arith.constant 0 : i32
    %c0_i32_1 = arith.constant 0 : i32
    return %c0_i32, %c0_i32_0 : i32, i32
  }
  func.func @transform_6(%arg0: i32, %arg1: i32) -> (i32, i32) {
    %c0_i32 = arith.constant 0 : i32
    %c0_i32_0 = arith.constant 0 : i32
    %c0_i32_1 = arith.constant 0 : i32
    return %c0_i32, %c0_i32_0 : i32, i32
  }
  func.func @transform_7(%arg0: i32, %arg1: i32) -> (i32, i32) {
    %c0_i32 = arith.constant 0 : i32
    %c0_i32_0 = arith.constant 0 : i32
    %c0_i32_1 = arith.constant 0 : i32
    return %c0_i32, %c0_i32_0 : i32, i32
  }
  func.func @transform_8(%arg0: i32, %arg1: i32) -> (i32, i32, i32) {
    %c0_i32 = arith.constant 0 : i32
    %c0_i32_0 = arith.constant 0 : i32
    %c0_i32_1 = arith.constant 0 : i32
    return %arg0, %c0_i32, %c0_i32_0 : i32, i32, i32
  }
}

</mosaic_0001>

<llo_original>
// kernel: tpu_custom_call.1
$region0: #{tpu_custom_call.1}
  #allocation0 [shape = 'u32[]', space=smem, size = 0x4, offset = 0x4, fixed_abs, tag = 'smem constant byte address 0x4 - core index']
  #allocation1 [shape = 'u32[144,128]{1,0:T(1,128)}', space=vmem, size = 0x12000, scoped, tag = 'internal scratch']
  %s0 = inlined_call_operand.vmem [shape: bf16[2,128,128], index: 0, kind: input, shape index: {}]
  %s1 = inlined_call_operand.vmem [shape: f32[2,3,128], index: 1, kind: input, shape index: {}]
  %s2 = inlined_call_operand.vmem [shape: f32[128,3], index: 2, kind: input, shape index: {}]
  %s3 = inlined_call_operand.vmem [shape: f32[128,1], index: 3, kind: input, shape index: {}]
  %s4 = inlined_call_operand.vmem [shape: bf16[512,256], index: 4, kind: input, shape index: {}]
  %s5 = inlined_call_operand.vmem [shape: f32[512,1], index: 5, kind: input, shape index: {}]
  %s6 = inlined_call_operand.hbm [shape: bf16[1024,512], index: 6, kind: input, shape index: {}]
  %s7 = inlined_call_operand.vmem [shape: f32[1024,1], index: 7, kind: input, shape index: {}]
  %s8 = inlined_call_operand.vmem [shape: f32[2,1024,1], index: 8, kind: output, shape index: {}]
  %s9 = sld [smem:[#allocation0]]
  $region73: #{tpu_custom_call.1} parent=0
    _
  %s11 = ssub.s32 1, %s9
  %s12 = scalar_select 0, %s11, %s9
  $region1: #{tpu_custom_call.1} parent=0
    #allocation2 [shape = 'u8[1048576]{0}', space=vmem, size = 0x100000, scoped, tag = 'input window, operand 6, single buffered']
    #allocation3 [shape = 's32[2]{0}', space=sflag, size = 0x8, scoped, tag = 'scoped memory for tpu_custom_call.1']
    %13 = vsyncpa [#allocation3], 0
    loop: start=0, step=1, limit=4
    $region2: #{tpu_custom_call.1} parent=1 // loop_pre_header
      _
    $region3: #{tpu_custom_call.1} parent=1 // loop_header
      %s15 = sphi 0, %s19
      %p16 = scmp.ge.s32.totalorder %s15, 4
      %s22 = sphi 0, %s34
      %s23 = sphi 0, %s30
      %s24 = sphi 0, %s22
      %s25 = sphi 0, %s23
      %s26 = sphi 0, %s24
      %s27 = sphi 0, %s25
      %s39 = sphi 0, %s41
      %s42 = sphi 0, %s39
      %s43 = sphi 0, %s42
      %s59 = sphi 0, %s43
      %s67 = sphi 0, %s69
      %s70 = sphi 0, %s67
      %s71 = sphi 0, %s70
      %s87 = sphi 0, %s71
      %s91 = sphi 0, %s91
      %s93 = sphi 0, %s91
      %s94 = sphi 0, %s93
      %s108 = sphi 0, %s94
      %s112 = sphi 0, %s112
      %s114 = sphi 0, %s112
      %s115 = sphi 0, %s114
      %s129 = sphi 0, %s115
      %s133 = sphi 0, %s133
      %s135 = sphi 0, %s133
      %s136 = sphi 0, %s135
      %s150 = sphi 0, %s136
      %s154 = sphi 0, %s154
      %s156 = sphi 0, %s154
      %s157 = sphi 0, %s156
      %s171 = sphi 0, %s157
      %s175 = sphi 0, %s175
      %s177 = sphi 0, %s175
      %s178 = sphi 0, %s177
      %s192 = sphi 0, %s178
      %s196 = sphi 0, %s196
      %s198 = sphi 0, %s196
      %s199 = sphi 0, %s198
      %s213 = sphi 0, %s199
      %s219 = sphi 0, %s221
      %s222 = sphi 0, %s219
      %s223 = sphi 0, %s222
      %s239 = sphi 0, %s223
    $region4: #{tpu_custom_call.1} parent=1 // loop_header_branch
      %18 = sbr.rel (%p16) target = $region8
    $region5: #{tpu_custom_call.1} parent=1 // loop_body
      %s20 = ssub.s32 %s15, 1
      %s21 = ssub.s32 %s15, 2
      %s28 = sadd.s32 1, %s23
      %p29 = scmp.ge.s32.totalorder %s28, 1
      %s30 = scalar_select %p29, 0, %s28
      %s31 = sadd.s32 1, %s22
      %s32 = scalar_select %p29, %s31, %s22
      %p33 = scmp.ge.s32.totalorder %s32, 2
      %s34 = scalar_select %p33, 0, %s32
      %s35 = ssub.s32 %s22, %s34
      %s36 = ssub.s32 %s23, %s30
      %s37 = sor.u32 %s35, %s36
      %p38 = scmp.eq.s32.totalorder %s37, 0
      %s40 = sadd.s32 %s39, 1
      %s41 = scalar_select %p38, %s39, %s40
      %p44 = pneg %p38
      %p45 = scmp.eq.s32.totalorder %s15, 1
      %p46 = por %p44, %p45
      %p47 = scmp.ne.s32.totalorder %s39, %s42
      %p48 = scmp.eq.s32.totalorder %s15, 0
      %p49 = por %p47, %p48
      %p50 = scmp.ne.s32.totalorder %s39, %s42
      %p51 = scmp.eq.s32.totalorder %s20, 1
      %p52 = por %p50, %p51
      %p53 = scmp.ne.s32.totalorder %s42, %s43
      %p54 = scmp.eq.s32.totalorder %s20, 0
      %p55 = por %p53, %p54
      %p56 = scmp.ne.s32.totalorder %s42, %s43
      %p57 = scmp.eq.s32.totalorder %s21, 1
      %p58 = por %p56, %p57
      %p60 = scmp.ne.s32.totalorder %s43, %s59
      %p61 = scmp.eq.s32.totalorder %s21, 0
      %p62 = por %p60, %p61
      %s63 = ssub.s32 %s22, %s34
      %s64 = ssub.s32 %s23, %s30
      %s65 = sor.u32 %s63, %s64
      %p66 = scmp.eq.s32.totalorder %s65, 0
      %s68 = sadd.s32 %s67, 1
      %s69 = scalar_select %p66, %s67, %s68
      %p72 = pneg %p66
      %p73 = scmp.eq.s32.totalorder %s15, 1
      %p74 = por %p72, %p73
      %p75 = scmp.ne.s32.totalorder %s67, %s70
      %p76 = scmp.eq.s32.totalorder %s15, 0
      %p77 = por %p75, %p76
      %p78 = scmp.ne.s32.totalorder %s67, %s70
      %p79 = scmp.eq.s32.totalorder %s20, 1
      %p80 = por %p78, %p79
      %p81 = scmp.ne.s32.totalorder %s70, %s71
      %p82 = scmp.eq.s32.totalorder %s20, 0
      %p83 = por %p81, %p82
      %p84 = scmp.ne.s32.totalorder %s70, %s71
      %p85 = scmp.eq.s32.totalorder %s21, 1
      %p86 = por %p84, %p85
      %p88 = scmp.ne.s32.totalorder %s71, %s87
      %p89 = scmp.eq.s32.totalorder %s21, 0
      %p90 = por %p88, %p89
      %s92 = sadd.s32 %s91, 1
      %p95 = scmp.eq.s32.totalorder %s15, 1
      %p96 = scmp.ne.s32.totalorder %s91, %s93
      %p97 = scmp.eq.s32.totalorder %s15, 0
      %p98 = por %p96, %p97
      %p99 = scmp.ne.s32.totalorder %s91, %s93
      %p100 = scmp.eq.s32.totalorder %s20, 1
      %p101 = por %p99, %p100
      %p102 = scmp.ne.s32.totalorder %s93, %s94
      %p103 = scmp.eq.s32.totalorder %s20, 0
      %p104 = por %p102, %p103
      %p105 = scmp.ne.s32.totalorder %s93, %s94
      %p106 = scmp.eq.s32.totalorder %s21, 1
      %p107 = por %p105, %p106
      %p109 = scmp.ne.s32.totalorder %s94, %s108
      %p110 = scmp.eq.s32.totalorder %s21, 0
      %p111 = por %p109, %p110
      %s113 = sadd.s32 %s112, 1
      %p116 = scmp.eq.s32.totalorder %s15, 1
      %p117 = scmp.ne.s32.totalorder %s112, %s114
      %p118 = scmp.eq.s32.totalorder %s15, 0
      %p119 = por %p117, %p118
      %p120 = scmp.ne.s32.totalorder %s112, %s114
      %p121 = scmp.eq.s32.totalorder %s20, 1
      %p122 = por %p120, %p121
      %p123 = scmp.ne.s32.totalorder %s114, %s115
      %p124 = scmp.eq.s32.totalorder %s20, 0
      %p125 = por %p123, %p124
      %p126 = scmp.ne.s32.totalorder %s114, %s115
      %p127 = scmp.eq.s32.totalorder %s21, 1
      %p128 = por %p126, %p127
      %p130 = scmp.ne.s32.totalorder %s115, %s129
      %p131 = scmp.eq.s32.totalorder %s21, 0
      %p132 = por %p130, %p131
      %s134 = sadd.s32 %s133, 1
      %p137 = scmp.eq.s32.totalorder %s15, 1
      %p138 = scmp.ne.s32.totalorder %s133, %s135
      %p139 = scmp.eq.s32.totalorder %s15, 0
      %p140 = por %p138, %p139
      %p141 = scmp.ne.s32.totalorder %s133, %s135
      %p142 = scmp.eq.s32.totalorder %s20, 1
      %p143 = por %p141, %p142
      %p144 = scmp.ne.s32.totalorder %s135, %s136
      %p145 = scmp.eq.s32.totalorder %s20, 0
      %p146 = por %p144, %p145
      %p147 = scmp.ne.s32.totalorder %s135, %s136
      %p148 = scmp.eq.s32.totalorder %s21, 1
      %p149 = por %p147, %p148
      %p151 = scmp.ne.s32.totalorder %s136, %s150
      %p152 = scmp.eq.s32.totalorder %s21, 0
      %p153 = por %p151, %p152
      %s155 = sadd.s32 %s154, 1
      %p158 = scmp.eq.s32.totalorder %s15, 1
      %p159 = scmp.ne.s32.totalorder %s154, %s156
      %p160 = scmp.eq.s32.totalorder %s15, 0
      %p161 = por %p159, %p160
      %p162 = scmp.ne.s32.totalorder %s154, %s156
      %p163 = scmp.eq.s32.totalorder %s20, 1
      %p164 = por %p162, %p163
      %p165 = scmp.ne.s32.totalorder %s156, %s157
      %p166 = scmp.eq.s32.totalorder %s20, 0
      %p167 = por %p165, %p166
      %p168 = scmp.ne.s32.totalorder %s156, %s157
      %p169 = scmp.eq.s32.totalorder %s21, 1
      %p170 = por %p168, %p169
      %p172 = scmp.ne.s32.totalorder %s157, %s171
      %p173 = scmp.eq.s32.totalorder %s21, 0
      %p174 = por %p172, %p173
      %s176 = sadd.s32 %s175, 1
      %p179 = scmp.eq.s32.totalorder %s15, 1
      %p180 = scmp.ne.s32.totalorder %s175, %s177
      %p181 = scmp.eq.s32.totalorder %s15, 0
      %p182 = por %p180, %p181
      %p183 = scmp.ne.s32.totalorder %s175, %s177
      %p184 = scmp.eq.s32.totalorder %s20, 1
      %p185 = por %p183, %p184
      %p186 = scmp.ne.s32.totalorder %s177, %s178
      %p187 = scmp.eq.s32.totalorder %s20, 0
      %p188 = por %p186, %p187
      %p189 = scmp.ne.s32.totalorder %s177, %s178
      %p190 = scmp.eq.s32.totalorder %s21, 1
      %p191 = por %p189, %p190
      %p193 = scmp.ne.s32.totalorder %s178, %s192
      %p194 = scmp.eq.s32.totalorder %s21, 0
      %p195 = por %p193, %p194
      %s197 = sadd.s32 %s196, 1
      %p200 = scmp.eq.s32.totalorder %s15, 1
      %p201 = scmp.ne.s32.totalorder %s196, %s198
      %p202 = scmp.eq.s32.totalorder %s15, 0
      %p203 = por %p201, %p202
      %p204 = scmp.ne.s32.totalorder %s196, %s198
      %p205 = scmp.eq.s32.totalorder %s20, 1
      %p206 = por %p204, %p205
      %p207 = scmp.ne.s32.totalorder %s198, %s199
      %p208 = scmp.eq.s32.totalorder %s20, 0
      %p209 = por %p207, %p208
      %p210 = scmp.ne.s32.totalorder %s198, %s199
      %p211 = scmp.eq.s32.totalorder %s21, 1
      %p212 = por %p210, %p211
      %p214 = scmp.ne.s32.totalorder %s199, %s213
      %p215 = scmp.eq.s32.totalorder %s21, 0
      %p216 = por %p214, %p215
      %s217 = ssub.s32 %s22, %s34
      %p218 = scmp.eq.s32.totalorder %s217, 0
      %s220 = sadd.s32 %s219, 1
      %s221 = scalar_select %p218, %s219, %s220
      %p224 = pneg %p218
      %p225 = scmp.eq.s32.totalorder %s15, 1
      %p226 = por %p224, %p225
      %p227 = scmp.ne.s32.totalorder %s219, %s222
      %p228 = scmp.eq.s32.totalorder %s15, 0
      %p229 = por %p227, %p228
      %p230 = scmp.ne.s32.totalorder %s219, %s222
      %p231 = scmp.eq.s32.totalorder %s20, 1
      %p232 = por %p230, %p231
      %p233 = scmp.ne.s32.totalorder %s222, %s223
      %p234 = scmp.eq.s32.totalorder %s20, 0
      %p235 = por %p233, %p234
      %p236 = scmp.ne.s32.totalorder %s222, %s223
      %p237 = scmp.eq.s32.totalorder %s21, 1
      %p238 = por %p236, %p237
      %p240 = scmp.ne.s32.totalorder %s223, %s239
      %p241 = scmp.eq.s32.totalorder %s21, 0
      %p242 = por %p240, %p241
      %p243 = scmp.le.s32.totalorder 1, %s15
      %p244 = scmp.lt.s32.totalorder %s15, 3
      %p245 = pnand %p243, %p244
      %p246 = pneg %p245
      // Predicated region
      $region9: #{tpu_custom_call.1} parent=5 // pred_check
        _
      $region10: #{tpu_custom_call.1} parent=5 // pred_check_branch
        %248 = sbr.rel (%p245) target = $region12
      $region11: #{tpu_custom_call.1} parent=5 // pred_region
        %s249 = ssub.s32 %s15, 1
        // Predicated region
        $region13: #{tpu_custom_call.1} parent=11 // pred_check
          %p250 = pneg %p104
        $region14: #{tpu_custom_call.1} parent=11 // pred_check_branch
          %252 = sbr.rel (%p250) target = $region16
        $region15: #{tpu_custom_call.1} parent=11 // pred_region
          _
        $region16: #{tpu_custom_call.1} parent=11 // pred_fallthru
          _
        // Predicated region
        $region17: #{tpu_custom_call.1} parent=11 // pred_check
          %p253 = pneg %p125
        $region18: #{tpu_custom_call.1} parent=11 // pred_check_branch
          %255 = sbr.rel (%p253) target = $region20
        $region19: #{tpu_custom_call.1} parent=11 // pred_region
          _
        $region20: #{tpu_custom_call.1} parent=11 // pred_fallthru
          _
        // Predicated region
        $region21: #{tpu_custom_call.1} parent=11 // pred_check
          %p256 = pneg %p146
        $region22: #{tpu_custom_call.1} parent=11 // pred_check_branch
          %258 = sbr.rel (%p256) target = $region24
        $region23: #{tpu_custom_call.1} parent=11 // pred_region
          _
        $region24: #{tpu_custom_call.1} parent=11 // pred_fallthru
          _
        // Predicated region
        $region25: #{tpu_custom_call.1} parent=11 // pred_check
          %p259 = pneg %p167
        $region26: #{tpu_custom_call.1} parent=11 // pred_check_branch
          %261 = sbr.rel (%p259) target = $region28
        $region27: #{tpu_custom_call.1} parent=11 // pred_region
          _
        $region28: #{tpu_custom_call.1} parent=11 // pred_fallthru
          _
        // Predicated region
        $region29: #{tpu_custom_call.1} parent=11 // pred_check
          %p262 = pneg %p188
        $region30: #{tpu_custom_call.1} parent=11 // pred_check_branch
          %264 = sbr.rel (%p262) target = $region32
        $region31: #{tpu_custom_call.1} parent=11 // pred_region
          %s266 = ssub.s32 32768, 32768
          %267 = vsyncadd [#allocation3], %s266
          %s268 = sshll.u32 [#allocation2], 4
          %s269 = int_to_ptr.vmem [resolvable:$true] %s268
          %274 = dma.hbm_to_vmem [thread:$0]  %s6, 32768, %s269, [#allocation3], 256, 256, 16
        $region32: #{tpu_custom_call.1} parent=11 // pred_fallthru
          _
        // Predicated region
        $region33: #{tpu_custom_call.1} parent=11 // pred_check
          %p275 = pneg %p209
        $region34: #{tpu_custom_call.1} parent=11 // pred_check_branch
          %277 = sbr.rel (%p275) target = $region36
        $region35: #{tpu_custom_call.1} parent=11 // pred_region
          _
        $region36: #{tpu_custom_call.1} parent=11 // pred_fallthru
          _
      $region12: #{tpu_custom_call.1} parent=5 // pred_fallthru
        _
      %p278 = scmp.lt.s32.totalorder %s15, 2
      // Predicated region
      $region37: #{tpu_custom_call.1} parent=5 // pred_check
        %p279 = pneg %p278
      $region38: #{tpu_custom_call.1} parent=5 // pred_check_branch
        %281 = sbr.rel (%p279) target = $region40
      $region39: #{tpu_custom_call.1} parent=5 // pred_region
        // Predicated region
        $region41: #{tpu_custom_call.1} parent=39 // pred_check
          %p282 = pneg %p49
        $region42: #{tpu_custom_call.1} parent=39 // pred_check_branch
          %284 = sbr.rel (%p282) target = $region44
        $region43: #{tpu_custom_call.1} parent=39 // pred_region
          %p285 = scmp.lt.s32.totalorder %s22, 1
          %s286 = scalar_select %p285, %s22, 1
          %p287 = scmp.lt.s32.totalorder %s23, 0
          %s288 = scalar_select %p287, %s23, 0
          %s289 = smul.addr %s286, 16
          %s290 = sadd.s32 %s288, %s289
          %s291 = smul.addr %s290, 4
          %s292 = scalar_lea.vmem %s0, %s291
        $region44: #{tpu_custom_call.1} parent=39 // pred_fallthru
          _
        // Predicated region
        $region45: #{tpu_custom_call.1} parent=39 // pred_check
          %p293 = pneg %p77
        $region46: #{tpu_custom_call.1} parent=39 // pred_check_branch
          %295 = sbr.rel (%p293) target = $region48
        $region47: #{tpu_custom_call.1} parent=39 // pred_region
          %p296 = scmp.lt.s32.totalorder %s22, 1
          %s297 = scalar_select %p296, %s22, 1
          %p298 = scmp.lt.s32.totalorder %s23, 0
          %s299 = scalar_select %p298, %s23, 0
          %s300 = sadd.s32 %s299, %s297
          %s301 = smul.addr %s300, 4
          %s302 = scalar_lea.vmem %s1, %s301
        $region48: #{tpu_custom_call.1} parent=39 // pred_fallthru
          _
      $region40: #{tpu_custom_call.1} parent=5 // pred_fallthru
        _
      %p303 = scmp.le.s32.totalorder 1, %s15
      %p304 = scmp.lt.s32.totalorder %s15, 3
      %p305 = pnand %p303, %p304
      %p306 = pneg %p305
      // Predicated region
      $region49: #{tpu_custom_call.1} parent=5 // pred_check
        _
      $region50: #{tpu_custom_call.1} parent=5 // pred_check_branch
        %308 = sbr.rel (%p305) target = $region52
      $region51: #{tpu_custom_call.1} parent=5 // pred_region
        %s309 = ssub.s32 %s15, 1
        // Predicated region
        $region53: #{tpu_custom_call.1} parent=51 // pred_check
          %p310 = pneg %p188
        $region54: #{tpu_custom_call.1} parent=51 // pred_check_branch
          %312 = sbr.rel (%p310) target = $region56
        $region55: #{tpu_custom_call.1} parent=51 // pred_region
          %313 = dma.done [#allocation3], 32768
        $region56: #{tpu_custom_call.1} parent=51 // pred_fallthru
          _
        %p314 = scmp.lt.s32.totalorder %s24, 1
        %s315 = scalar_select %p314, %s24, 1
        %p316 = scmp.lt.s32.totalorder %s25, 0
        %s317 = scalar_select %p316, %s25, 0
        %s318 = smul.addr %s315, 16
        %s319 = sadd.s32 %s317, %s318
        %s320 = smul.addr %s319, 4
        %s321 = scalar_lea.vmem %s0, %s320
        %p322 = pneg %p55
        %p323 = pneg %p52
        %p324 = scmp.lt.s32.totalorder %s24, 1
        %s325 = scalar_select %p324, %s24, 1
        %p326 = scmp.lt.s32.totalorder %s25, 0
        %s327 = scalar_select %p326, %s25, 0
        %s328 = sadd.s32 %s327, %s325
        %s329 = smul.addr %s328, 4
        %s330 = scalar_lea.vmem %s1, %s329
        %p331 = pneg %p83
        %p332 = pneg %p80
        %p333 = pneg %p104
        %p334 = pneg %p101
        %p335 = pneg %p125
        %p336 = pneg %p122
        %p337 = pneg %p146
        %p338 = pneg %p143
        %p339 = pneg %p167
        %p340 = pneg %p164
        %p341 = pneg %p188
        %p342 = pneg %p185
        %p343 = pneg %p209
        %p344 = pneg %p206
        %p345 = pneg %p235
        %p346 = pneg %p232
        %p347 = scmp.lt.s32.totalorder %s24, 1
        %s348 = scalar_select %p347, %s24, 1
        %s349 = smul.addr %s348, 128
        %s350 = smul.addr %s349, 8
        %s351 = scalar_lea.vmem %s8, %s350
        %p352 = scmp.lt.s32.totalorder %s24, 1
        %s353 = scalar_select %p352, %s24, 1
        %p354 = scmp.lt.s32.totalorder %s25, 0
        %s355 = scalar_select %p354, %s25, 0
        %s356 = smul.addr %s353, 16
        %s357 = sadd.s32 %s355, %s356
        %s358 = smul.addr %s357, 4
        %s359 = scalar_lea.vmem %s0, %s358
        %p360 = scmp.lt.s32.totalorder %s24, 1
        %s361 = scalar_select %p360, %s24, 1
        %p362 = scmp.lt.s32.totalorder %s25, 0
        %s363 = scalar_select %p362, %s25, 0
        %s364 = sadd.s32 %s363, %s361
        %s365 = smul.addr %s364, 4
        %s366 = scalar_lea.vmem %s1, %s365
        %p367 = scmp.lt.s32.totalorder %s24, 1
        %s368 = scalar_select %p367, %s24, 1
        %s369 = smul.addr %s368, 128
        %s370 = smul.addr %s369, 8
        %s371 = scalar_lea.vmem %s8, %s370
        %p373 = scmp.eq.s32.totalorder %s25, 0
        // Predicated region
        $region57: #{tpu_custom_call.1} parent=51 // pred_check
          %p374 = pneg %p373
        $region58: #{tpu_custom_call.1} parent=51 // pred_check_branch
          %376 = sbr.rel (%p374) target = $region60
        $region59: #{tpu_custom_call.1} parent=51 // pred_region
          %vm377 = vcmask 7168
          %378 = vst.msk [vmem:[%s371] sm:$0xff] %vm377, 0.0
          %379 = vst.msk [vmem:[%s371 + $0x8] sm:$0xff] %vm377, 0.0
          %380 = vst.msk [vmem:[%s371 + $0x10] sm:$0xff] %vm377, 0.0
          %381 = vst.msk [vmem:[%s371 + $0x18] sm:$0xff] %vm377, 0.0
          %382 = vst.msk [vmem:[%s371 + $0x20] sm:$0xff] %vm377, 0.0
          %383 = vst.msk [vmem:[%s371 + $0x28] sm:$0xff] %vm377, 0.0
          %384 = vst.msk [vmem:[%s371 + $0x30] sm:$0xff] %vm377, 0.0
          %385 = vst.msk [vmem:[%s371 + $0x38] sm:$0xff] %vm377, 0.0
          %386 = vst.msk [vmem:[%s371 + $0x40] sm:$0xff] %vm377, 0.0
          %387 = vst.msk [vmem:[%s371 + $0x48] sm:$0xff] %vm377, 0.0
          %388 = vst.msk [vmem:[%s371 + $0x50] sm:$0xff] %vm377, 0.0
          %389 = vst.msk [vmem:[%s371 + $0x58] sm:$0xff] %vm377, 0.0
          %390 = vst.msk [vmem:[%s371 + $0x60] sm:$0xff] %vm377, 0.0
          %391 = vst.msk [vmem:[%s371 + $0x68] sm:$0xff] %vm377, 0.0
          %392 = vst.msk [vmem:[%s371 + $0x70] sm:$0xff] %vm377, 0.0
          %393 = vst.msk [vmem:[%s371 + $0x78] sm:$0xff] %vm377, 0.0
          %394 = vst.msk [vmem:[%s371 + $0x80] sm:$0xff] %vm377, 0.0
          %395 = vst.msk [vmem:[%s371 + $0x88] sm:$0xff] %vm377, 0.0
          %396 = vst.msk [vmem:[%s371 + $0x90] sm:$0xff] %vm377, 0.0
          %397 = vst.msk [vmem:[%s371 + $0x98] sm:$0xff] %vm377, 0.0
          %398 = vst.msk [vmem:[%s371 + $0xa0] sm:$0xff] %vm377, 0.0
          %399 = vst.msk [vmem:[%s371 + $0xa8] sm:$0xff] %vm377, 0.0
          %400 = vst.msk [vmem:[%s371 + $0xb0] sm:$0xff] %vm377, 0.0
          %401 = vst.msk [vmem:[%s371 + $0xb8] sm:$0xff] %vm377, 0.0
          %402 = vst.msk [vmem:[%s371 + $0xc0] sm:$0xff] %vm377, 0.0
          %403 = vst.msk [vmem:[%s371 + $0xc8] sm:$0xff] %vm377, 0.0
          %404 = vst.msk [vmem:[%s371 + $0xd0] sm:$0xff] %vm377, 0.0
          %405 = vst.msk [vmem:[%s371 + $0xd8] sm:$0xff] %vm377, 0.0
          %406 = vst.msk [vmem:[%s371 + $0xe0] sm:$0xff] %vm377, 0.0
          %407 = vst.msk [vmem:[%s371 + $0xe8] sm:$0xff] %vm377, 0.0
          %408 = vst.msk [vmem:[%s371 + $0xf0] sm:$0xff] %vm377, 0.0
          %409 = vst.msk [vmem:[%s371 + $0xf8] sm:$0xff] %vm377, 0.0
          %410 = vst.msk [vmem:[%s371 + $0x100] sm:$0xff] %vm377, 0.0
          %411 = vst.msk [vmem:[%s371 + $0x108] sm:$0xff] %vm377, 0.0
          %412 = vst.msk [vmem:[%s371 + $0x110] sm:$0xff] %vm377, 0.0
          %413 = vst.msk [vmem:[%s371 + $0x118] sm:$0xff] %vm377, 0.0
          %414 = vst.msk [vmem:[%s371 + $0x120] sm:$0xff] %vm377, 0.0
          %415 = vst.msk [vmem:[%s371 + $0x128] sm:$0xff] %vm377, 0.0
          %416 = vst.msk [vmem:[%s371 + $0x130] sm:$0xff] %vm377, 0.0
          %417 = vst.msk [vmem:[%s371 + $0x138] sm:$0xff] %vm377, 0.0
          %418 = vst.msk [vmem:[%s371 + $0x140] sm:$0xff] %vm377, 0.0
          %419 = vst.msk [vmem:[%s371 + $0x148] sm:$0xff] %vm377, 0.0
          %420 = vst.msk [vmem:[%s371 + $0x150] sm:$0xff] %vm377, 0.0
          %421 = vst.msk [vmem:[%s371 + $0x158] sm:$0xff] %vm377, 0.0
          %422 = vst.msk [vmem:[%s371 + $0x160] sm:$0xff] %vm377, 0.0
          %423 = vst.msk [vmem:[%s371 + $0x168] sm:$0xff] %vm377, 0.0
          %424 = vst.msk [vmem:[%s371 + $0x170] sm:$0xff] %vm377, 0.0
          %425 = vst.msk [vmem:[%s371 + $0x178] sm:$0xff] %vm377, 0.0
          %426 = vst.msk [vmem:[%s371 + $0x180] sm:$0xff] %vm377, 0.0
          %427 = vst.msk [vmem:[%s371 + $0x188] sm:$0xff] %vm377, 0.0
          %428 = vst.msk [vmem:[%s371 + $0x190] sm:$0xff] %vm377, 0.0
          %429 = vst.msk [vmem:[%s371 + $0x198] sm:$0xff] %vm377, 0.0
          %430 = vst.msk [vmem:[%s371 + $0x1a0] sm:$0xff] %vm377, 0.0
          %431 = vst.msk [vmem:[%s371 + $0x1a8] sm:$0xff] %vm377, 0.0
          %432 = vst.msk [vmem:[%s371 + $0x1b0] sm:$0xff] %vm377, 0.0
          %433 = vst.msk [vmem:[%s371 + $0x1b8] sm:$0xff] %vm377, 0.0
          %434 = vst.msk [vmem:[%s371 + $0x1c0] sm:$0xff] %vm377, 0.0
          %435 = vst.msk [vmem:[%s371 + $0x1c8] sm:$0xff] %vm377, 0.0
          %436 = vst.msk [vmem:[%s371 + $0x1d0] sm:$0xff] %vm377, 0.0
          %437 = vst.msk [vmem:[%s371 + $0x1d8] sm:$0xff] %vm377, 0.0
          %438 = vst.msk [vmem:[%s371 + $0x1e0] sm:$0xff] %vm377, 0.0
          %439 = vst.msk [vmem:[%s371 + $0x1e8] sm:$0xff] %vm377, 0.0
          %440 = vst.msk [vmem:[%s371 + $0x1f0] sm:$0xff] %vm377, 0.0
          %441 = vst.msk [vmem:[%s371 + $0x1f8] sm:$0xff] %vm377, 0.0
          %442 = vst.msk [vmem:[%s371 + $0x200] sm:$0xff] %vm377, 0.0
          %443 = vst.msk [vmem:[%s371 + $0x208] sm:$0xff] %vm377, 0.0
          %444 = vst.msk [vmem:[%s371 + $0x210] sm:$0xff] %vm377, 0.0
          %445 = vst.msk [vmem:[%s371 + $0x218] sm:$0xff] %vm377, 0.0
          %446 = vst.msk [vmem:[%s371 + $0x220] sm:$0xff] %vm377, 0.0
          %447 = vst.msk [vmem:[%s371 + $0x228] sm:$0xff] %vm377, 0.0
          %448 = vst.msk [vmem:[%s371 + $0x230] sm:$0xff] %vm377, 0.0
          %449 = vst.msk [vmem:[%s371 + $0x238] sm:$0xff] %vm377, 0.0
          %450 = vst.msk [vmem:[%s371 + $0x240] sm:$0xff] %vm377, 0.0
          %451 = vst.msk [vmem:[%s371 + $0x248] sm:$0xff] %vm377, 0.0
          %452 = vst.msk [vmem:[%s371 + $0x250] sm:$0xff] %vm377, 0.0
          %453 = vst.msk [vmem:[%s371 + $0x258] sm:$0xff] %vm377, 0.0
          %454 = vst.msk [vmem:[%s371 + $0x260] sm:$0xff] %vm377, 0.0
          %455 = vst.msk [vmem:[%s371 + $0x268] sm:$0xff] %vm377, 0.0
          %456 = vst.msk [vmem:[%s371 + $0x270] sm:$0xff] %vm377, 0.0
          %457 = vst.msk [vmem:[%s371 + $0x278] sm:$0xff] %vm377, 0.0
          %458 = vst.msk [vmem:[%s371 + $0x280] sm:$0xff] %vm377, 0.0
          %459 = vst.msk [vmem:[%s371 + $0x288] sm:$0xff] %vm377, 0.0
          %460 = vst.msk [vmem:[%s371 + $0x290] sm:$0xff] %vm377, 0.0
          %461 = vst.msk [vmem:[%s371 + $0x298] sm:$0xff] %vm377, 0.0
          %462 = vst.msk [vmem:[%s371 + $0x2a0] sm:$0xff] %vm377, 0.0
          %463 = vst.msk [vmem:[%s371 + $0x2a8] sm:$0xff] %vm377, 0.0
          %464 = vst.msk [vmem:[%s371 + $0x2b0] sm:$0xff] %vm377, 0.0
          %465 = vst.msk [vmem:[%s371 + $0x2b8] sm:$0xff] %vm377, 0.0
          %466 = vst.msk [vmem:[%s371 + $0x2c0] sm:$0xff] %vm377, 0.0
          %467 = vst.msk [vmem:[%s371 + $0x2c8] sm:$0xff] %vm377, 0.0
          %468 = vst.msk [vmem:[%s371 + $0x2d0] sm:$0xff] %vm377, 0.0
          %469 = vst.msk [vmem:[%s371 + $0x2d8] sm:$0xff] %vm377, 0.0
          %470 = vst.msk [vmem:[%s371 + $0x2e0] sm:$0xff] %vm377, 0.0
          %471 = vst.msk [vmem:[%s371 + $0x2e8] sm:$0xff] %vm377, 0.0
          %472 = vst.msk [vmem:[%s371 + $0x2f0] sm:$0xff] %vm377, 0.0
          %473 = vst.msk [vmem:[%s371 + $0x2f8] sm:$0xff] %vm377, 0.0
          %474 = vst.msk [vmem:[%s371 + $0x300] sm:$0xff] %vm377, 0.0
          %475 = vst.msk [vmem:[%s371 + $0x308] sm:$0xff] %vm377, 0.0
          %476 = vst.msk [vmem:[%s371 + $0x310] sm:$0xff] %vm377, 0.0
          %477 = vst.msk [vmem:[%s371 + $0x318] sm:$0xff] %vm377, 0.0
          %478 = vst.msk [vmem:[%s371 + $0x320] sm:$0xff] %vm377, 0.0
          %479 = vst.msk [vmem:[%s371 + $0x328] sm:$0xff] %vm377, 0.0
          %480 = vst.msk [vmem:[%s371 + $0x330] sm:$0xff] %vm377, 0.0
          %481 = vst.msk [vmem:[%s371 + $0x338] sm:$0xff] %vm377, 0.0
          %482 = vst.msk [vmem:[%s371 + $0x340] sm:$0xff] %vm377, 0.0
          %483 = vst.msk [vmem:[%s371 + $0x348] sm:$0xff] %vm377, 0.0
          %484 = vst.msk [vmem:[%s371 + $0x350] sm:$0xff] %vm377, 0.0
          %485 = vst.msk [vmem:[%s371 + $0x358] sm:$0xff] %vm377, 0.0
          %486 = vst.msk [vmem:[%s371 + $0x360] sm:$0xff] %vm377, 0.0
          %487 = vst.msk [vmem:[%s371 + $0x368] sm:$0xff] %vm377, 0.0
          %488 = vst.msk [vmem:[%s371 + $0x370] sm:$0xff] %vm377, 0.0
          %489 = vst.msk [vmem:[%s371 + $0x378] sm:$0xff] %vm377, 0.0
          %490 = vst.msk [vmem:[%s371 + $0x380] sm:$0xff] %vm377, 0.0
          %491 = vst.msk [vmem:[%s371 + $0x388] sm:$0xff] %vm377, 0.0
          %492 = vst.msk [vmem:[%s371 + $0x390] sm:$0xff] %vm377, 0.0
          %493 = vst.msk [vmem:[%s371 + $0x398] sm:$0xff] %vm377, 0.0
          %494 = vst.msk [vmem:[%s371 + $0x3a0] sm:$0xff] %vm377, 0.0
          %495 = vst.msk [vmem:[%s371 + $0x3a8] sm:$0xff] %vm377, 0.0
          %496 = vst.msk [vmem:[%s371 + $0x3b0] sm:$0xff] %vm377, 0.0
          %497 = vst.msk [vmem:[%s371 + $0x3b8] sm:$0xff] %vm377, 0.0
          %498 = vst.msk [vmem:[%s371 + $0x3c0] sm:$0xff] %vm377, 0.0
          %499 = vst.msk [vmem:[%s371 + $0x3c8] sm:$0xff] %vm377, 0.0
          %500 = vst.msk [vmem:[%s371 + $0x3d0] sm:$0xff] %vm377, 0.0
          %501 = vst.msk [vmem:[%s371 + $0x3d8] sm:$0xff] %vm377, 0.0
          %502 = vst.msk [vmem:[%s371 + $0x3e0] sm:$0xff] %vm377, 0.0
          %503 = vst.msk [vmem:[%s371 + $0x3e8] sm:$0xff] %vm377, 0.0
          %504 = vst.msk [vmem:[%s371 + $0x3f0] sm:$0xff] %vm377, 0.0
          %505 = vst.msk [vmem:[%s371 + $0x3f8] sm:$0xff] %vm377, 0.0
        $region60: #{tpu_custom_call.1} parent=51 // pred_fallthru
          _
        %v506 = vld [vmem:[%s359] sm:$0xf]
        %v507 = vld [vmem:[%s359 + $0x4] sm:$0xf]
        %v508 = vld [vmem:[%s359 + $0x8] sm:$0xf]
        %v509 = vld [vmem:[%s359 + $0xc] sm:$0xf]
        %v510 = vld [vmem:[%s359 + $0x10] sm:$0xf]
        %v511 = vld [vmem:[%s359 + $0x14] sm:$0xf]
        %v512 = vld [vmem:[%s359 + $0x18] sm:$0xf]
        %v513 = vld [vmem:[%s359 + $0x1c] sm:$0xf]
        %v514 = vld [vmem:[%s359 + $0x20] sm:$0xf]
        %v515 = vld [vmem:[%s359 + $0x24] sm:$0xf]
        %v516 = vld [vmem:[%s359 + $0x28] sm:$0xf]
        %v517 = vld [vmem:[%s359 + $0x2c] sm:$0xf]
        %v518 = vld [vmem:[%s359 + $0x30] sm:$0xf]
        %v519 = vld [vmem:[%s359 + $0x34] sm:$0xf]
        %v520 = vld [vmem:[%s359 + $0x38] sm:$0xf]
        %v521 = vld [vmem:[%s359 + $0x3c] sm:$0xf]
        %v522 = vld [vmem:[%s366] sm:$0x7]
        %v523 = vld [vmem:[%s2] sm:$0xff]
        %v524 = vld [vmem:[%s2 + $0x8] sm:$0xff]
        %v525 = vld [vmem:[%s2 + $0x10] sm:$0xff]
        %v526 = vld [vmem:[%s2 + $0x18] sm:$0xff]
        %v527 = vld [vmem:[%s2 + $0x20] sm:$0xff]
        %v528 = vld [vmem:[%s2 + $0x28] sm:$0xff]
        %v529 = vld [vmem:[%s2 + $0x30] sm:$0xff]
        %v530 = vld [vmem:[%s2 + $0x38] sm:$0xff]
        %v531 = vld [vmem:[%s2 + $0x40] sm:$0xff]
        %v532 = vld [vmem:[%s2 + $0x48] sm:$0xff]
        %v533 = vld [vmem:[%s2 + $0x50] sm:$0xff]
        %v534 = vld [vmem:[%s2 + $0x58] sm:$0xff]
        %v535 = vld [vmem:[%s2 + $0x60] sm:$0xff]
        %v536 = vld [vmem:[%s2 + $0x68] sm:$0xff]
        %v537 = vld [vmem:[%s2 + $0x70] sm:$0xff]
        %v538 = vld [vmem:[%s2 + $0x78] sm:$0xff]
        %540 = vset.pattern.permute.xlu0 0
        %541 = vperm.xlu0 %540, %v523
        %v542 = vpop.permute.xlu0 %541
        %545 = vset.pattern.permute.xlu0 0
        %546 = vperm.xlu0 %545, %v524
        %v547 = vpop.permute.xlu0 %546
        %550 = vset.pattern.permute.xlu0 0
        %551 = vperm.xlu0 %550, %v525
        %v552 = vpop.permute.xlu0 %551
        %555 = vset.pattern.permute.xlu0 0
        %556 = vperm.xlu0 %555, %v526
        %v557 = vpop.permute.xlu0 %556
        %560 = vset.pattern.permute.xlu0 0
        %561 = vperm.xlu0 %560, %v527
        %v562 = vpop.permute.xlu0 %561
        %565 = vset.pattern.permute.xlu0 0
        %566 = vperm.xlu0 %565, %v528
        %v567 = vpop.permute.xlu0 %566
        %570 = vset.pattern.permute.xlu0 0
        %571 = vperm.xlu0 %570, %v529
        %v572 = vpop.permute.xlu0 %571
        %575 = vset.pattern.permute.xlu0 0
        %576 = vperm.xlu0 %575, %v530
        %v577 = vpop.permute.xlu0 %576
        %580 = vset.pattern.permute.xlu0 0
        %581 = vperm.xlu0 %580, %v531
        %v582 = vpop.permute.xlu0 %581
        %585 = vset.pattern.permute.xlu0 0
        %586 = vperm.xlu0 %585, %v532
        %v587 = vpop.permute.xlu0 %586
        %590 = vset.pattern.permute.xlu0 0
        %591 = vperm.xlu0 %590, %v533
        %v592 = vpop.permute.xlu0 %591
        %595 = vset.pattern.permute.xlu0 0
        %596 = vperm.xlu0 %595, %v534
        %v597 = vpop.permute.xlu0 %596
        %600 = vset.pattern.permute.xlu0 0
        %601 = vperm.xlu0 %600, %v535
        %v602 = vpop.permute.xlu0 %601
        %605 = vset.pattern.permute.xlu0 0
        %606 = vperm.xlu0 %605, %v536
        %v607 = vpop.permute.xlu0 %606
        %610 = vset.pattern.permute.xlu0 0
        %611 = vperm.xlu0 %610, %v537
        %v612 = vpop.permute.xlu0 %611
        %615 = vset.pattern.permute.xlu0 0
        %616 = vperm.xlu0 %615, %v538
        %v617 = vpop.permute.xlu0 %616
        %v619 = vlaneseq
        %v620 = vshrl.u32 %v619, 7
        %v621 = vsub.s32 0, %v620
        %v622 = vrot.slane %v522, %v621
        %v623 = vmul.f32 %v542, %v622
        %v624 = vmul.f32 %v547, %v622
        %v625 = vmul.f32 %v552, %v622
        %v626 = vmul.f32 %v557, %v622
        %v627 = vmul.f32 %v562, %v622
        %v628 = vmul.f32 %v567, %v622
        %v629 = vmul.f32 %v572, %v622
        %v630 = vmul.f32 %v577, %v622
        %v631 = vmul.f32 %v582, %v622
        %v632 = vmul.f32 %v587, %v622
        %v633 = vmul.f32 %v592, %v622
        %v634 = vmul.f32 %v597, %v622
        %v635 = vmul.f32 %v602, %v622
        %v636 = vmul.f32 %v607, %v622
        %v637 = vmul.f32 %v612, %v622
        %v638 = vmul.f32 %v617, %v622
        %639 = vset.pattern.permute.xlu0 1
        %640 = vperm.xlu0 %639, %v523
        %v641 = vpop.permute.xlu0 %640
        %643 = vset.pattern.permute.xlu0 1
        %644 = vperm.xlu0 %643, %v524
        %v645 = vpop.permute.xlu0 %644
        %647 = vset.pattern.permute.xlu0 1
        %648 = vperm.xlu0 %647, %v525
        %v649 = vpop.permute.xlu0 %648
        %651 = vset.pattern.permute.xlu0 1
        %652 = vperm.xlu0 %651, %v526
        %v653 = vpop.permute.xlu0 %652
        %655 = vset.pattern.permute.xlu0 1
        %656 = vperm.xlu0 %655, %v527
        %v657 = vpop.permute.xlu0 %656
        %659 = vset.pattern.permute.xlu0 1
        %660 = vperm.xlu0 %659, %v528
        %v661 = vpop.permute.xlu0 %660
        %663 = vset.pattern.permute.xlu0 1
        %664 = vperm.xlu0 %663, %v529
        %v665 = vpop.permute.xlu0 %664
        %667 = vset.pattern.permute.xlu0 1
        %668 = vperm.xlu0 %667, %v530
        %v669 = vpop.permute.xlu0 %668
        %671 = vset.pattern.permute.xlu0 1
        %672 = vperm.xlu0 %671, %v531
        %v673 = vpop.permute.xlu0 %672
        %675 = vset.pattern.permute.xlu0 1
        %676 = vperm.xlu0 %675, %v532
        %v677 = vpop.permute.xlu0 %676
        %679 = vset.pattern.permute.xlu0 1
        %680 = vperm.xlu0 %679, %v533
        %v681 = vpop.permute.xlu0 %680
        %683 = vset.pattern.permute.xlu0 1
        %684 = vperm.xlu0 %683, %v534
        %v685 = vpop.permute.xlu0 %684
        %687 = vset.pattern.permute.xlu0 1
        %688 = vperm.xlu0 %687, %v535
        %v689 = vpop.permute.xlu0 %688
        %691 = vset.pattern.permute.xlu0 1
        %692 = vperm.xlu0 %691, %v536
        %v693 = vpop.permute.xlu0 %692
        %695 = vset.pattern.permute.xlu0 1
        %696 = vperm.xlu0 %695, %v537
        %v697 = vpop.permute.xlu0 %696
        %699 = vset.pattern.permute.xlu0 1
        %700 = vperm.xlu0 %699, %v538
        %v701 = vpop.permute.xlu0 %700
        %v703 = vlaneseq
        %v704 = vshrl.u32 %v703, 7
        %v705 = vsub.s32 1, %v704
        %v706 = vrot.slane %v522, %v705
        %v707 = vmul.f32 %v641, %v706
        %v708 = vmul.f32 %v645, %v706
        %v709 = vmul.f32 %v649, %v706
        %v710 = vmul.f32 %v653, %v706
        %v711 = vmul.f32 %v657, %v706
        %v712 = vmul.f32 %v661, %v706
        %v713 = vmul.f32 %v665, %v706
        %v714 = vmul.f32 %v669, %v706
        %v715 = vmul.f32 %v673, %v706
        %v716 = vmul.f32 %v677, %v706
        %v717 = vmul.f32 %v681, %v706
        %v718 = vmul.f32 %v685, %v706
        %v719 = vmul.f32 %v689, %v706
        %v720 = vmul.f32 %v693, %v706
        %v721 = vmul.f32 %v697, %v706
        %v722 = vmul.f32 %v701, %v706
        %v723 = vadd.f32 %v623, %v707
        %v724 = vadd.f32 %v624, %v708
        %v725 = vadd.f32 %v625, %v709
        %v726 = vadd.f32 %v626, %v710
        %v727 = vadd.f32 %v627, %v711
        %v728 = vadd.f32 %v628, %v712
        %v729 = vadd.f32 %v629, %v713
        %v730 = vadd.f32 %v630, %v714
        %v731 = vadd.f32 %v631, %v715
        %v732 = vadd.f32 %v632, %v716
        %v733 = vadd.f32 %v633, %v717
        %v734 = vadd.f32 %v634, %v718
        %v735 = vadd.f32 %v635, %v719
        %v736 = vadd.f32 %v636, %v720
        %v737 = vadd.f32 %v637, %v721
        %v738 = vadd.f32 %v638, %v722
        %739 = vset.pattern.permute.xlu0 2
        %740 = vperm.xlu0 %739, %v523
        %v741 = vpop.permute.xlu0 %740
        %743 = vset.pattern.permute.xlu0 2
        %744 = vperm.xlu0 %743, %v524
        %v745 = vpop.permute.xlu0 %744
        %747 = vset.pattern.permute.xlu0 2
        %748 = vperm.xlu0 %747, %v525
        %v749 = vpop.permute.xlu0 %748
        %751 = vset.pattern.permute.xlu0 2
        %752 = vperm.xlu0 %751, %v526
        %v753 = vpop.permute.xlu0 %752
        %755 = vset.pattern.permute.xlu0 2
        %756 = vperm.xlu0 %755, %v527
        %v757 = vpop.permute.xlu0 %756
        %759 = vset.pattern.permute.xlu0 2
        %760 = vperm.xlu0 %759, %v528
        %v761 = vpop.permute.xlu0 %760
        %763 = vset.pattern.permute.xlu0 2
        %764 = vperm.xlu0 %763, %v529
        %v765 = vpop.permute.xlu0 %764
        %767 = vset.pattern.permute.xlu0 2
        %768 = vperm.xlu0 %767, %v530
        %v769 = vpop.permute.xlu0 %768
        %771 = vset.pattern.permute.xlu0 2
        %772 = vperm.xlu0 %771, %v531
        %v773 = vpop.permute.xlu0 %772
        %775 = vset.pattern.permute.xlu0 2
        %776 = vperm.xlu0 %775, %v532
        %v777 = vpop.permute.xlu0 %776
        %779 = vset.pattern.permute.xlu0 2
        %780 = vperm.xlu0 %779, %v533
        %v781 = vpop.permute.xlu0 %780
        %783 = vset.pattern.permute.xlu0 2
        %784 = vperm.xlu0 %783, %v534
        %v785 = vpop.permute.xlu0 %784
        %787 = vset.pattern.permute.xlu0 2
        %788 = vperm.xlu0 %787, %v535
        %v789 = vpop.permute.xlu0 %788
        %791 = vset.pattern.permute.xlu0 2
        %792 = vperm.xlu0 %791, %v536
        %v793 = vpop.permute.xlu0 %792
        %795 = vset.pattern.permute.xlu0 2
        %796 = vperm.xlu0 %795, %v537
        %v797 = vpop.permute.xlu0 %796
        %799 = vset.pattern.permute.xlu0 2
        %800 = vperm.xlu0 %799, %v538
        %v801 = vpop.permute.xlu0 %800
        %v803 = vlaneseq
        %v804 = vshrl.u32 %v803, 7
        %v805 = vsub.s32 2, %v804
        %v806 = vrot.slane %v522, %v805
        %v807 = vmul.f32 %v741, %v806
        %v808 = vmul.f32 %v745, %v806
        %v809 = vmul.f32 %v749, %v806
        %v810 = vmul.f32 %v753, %v806
        %v811 = vmul.f32 %v757, %v806
        %v812 = vmul.f32 %v761, %v806
        %v813 = vmul.f32 %v765, %v806
        %v814 = vmul.f32 %v769, %v806
        %v815 = vmul.f32 %v773, %v806
        %v816 = vmul.f32 %v777, %v806
        %v817 = vmul.f32 %v781, %v806
        %v818 = vmul.f32 %v785, %v806
        %v819 = vmul.f32 %v789, %v806
        %v820 = vmul.f32 %v793, %v806
        %v821 = vmul.f32 %v797, %v806
        %v822 = vmul.f32 %v801, %v806
        %v823 = vadd.f32 %v723, %v807
        %v824 = vadd.f32 %v724, %v808
        %v825 = vadd.f32 %v725, %v809
        %v826 = vadd.f32 %v726, %v810
        %v827 = vadd.f32 %v727, %v811
        %v828 = vadd.f32 %v728, %v812
        %v829 = vadd.f32 %v729, %v813
        %v830 = vadd.f32 %v730, %v814
        %v831 = vadd.f32 %v731, %v815
        %v832 = vadd.f32 %v732, %v816
        %v833 = vadd.f32 %v733, %v817
        %v834 = vadd.f32 %v734, %v818
        %v835 = vadd.f32 %v735, %v819
        %v836 = vadd.f32 %v736, %v820
        %v837 = vadd.f32 %v737, %v821
        %v838 = vadd.f32 %v738, %v822
        %v839 = vld [vmem:[%s3] sm:$0xff]
        %v840 = vld [vmem:[%s3 + $0x8] sm:$0xff]
        %v841 = vld [vmem:[%s3 + $0x10] sm:$0xff]
        %v842 = vld [vmem:[%s3 + $0x18] sm:$0xff]
        %v843 = vld [vmem:[%s3 + $0x20] sm:$0xff]
        %v844 = vld [vmem:[%s3 + $0x28] sm:$0xff]
        %v845 = vld [vmem:[%s3 + $0x30] sm:$0xff]
        %v846 = vld [vmem:[%s3 + $0x38] sm:$0xff]
        %v847 = vld [vmem:[%s3 + $0x40] sm:$0xff]
        %v848 = vld [vmem:[%s3 + $0x48] sm:$0xff]
        %v849 = vld [vmem:[%s3 + $0x50] sm:$0xff]
        %v850 = vld [vmem:[%s3 + $0x58] sm:$0xff]
        %v851 = vld [vmem:[%s3 + $0x60] sm:$0xff]
        %v852 = vld [vmem:[%s3 + $0x68] sm:$0xff]
        %v853 = vld [vmem:[%s3 + $0x70] sm:$0xff]
        %v854 = vld [vmem:[%s3 + $0x78] sm:$0xff]
        %856 = vset.pattern.permute.xlu0 0
        %857 = vperm.xlu0 %856, %v839
        %v858 = vpop.permute.xlu0 %857
        %861 = vset.pattern.permute.xlu0 0
        %862 = vperm.xlu0 %861, %v840
        %v863 = vpop.permute.xlu0 %862
        %866 = vset.pattern.permute.xlu0 0
        %867 = vperm.xlu0 %866, %v841
        %v868 = vpop.permute.xlu0 %867
        %871 = vset.pattern.permute.xlu0 0
        %872 = vperm.xlu0 %871, %v842
        %v873 = vpop.permute.xlu0 %872
        %876 = vset.pattern.permute.xlu0 0
        %877 = vperm.xlu0 %876, %v843
        %v878 = vpop.permute.xlu0 %877
        %881 = vset.pattern.permute.xlu0 0
        %882 = vperm.xlu0 %881, %v844
        %v883 = vpop.permute.xlu0 %882
        %886 = vset.pattern.permute.xlu0 0
        %887 = vperm.xlu0 %886, %v845
        %v888 = vpop.permute.xlu0 %887
        %891 = vset.pattern.permute.xlu0 0
        %892 = vperm.xlu0 %891, %v846
        %v893 = vpop.permute.xlu0 %892
        %896 = vset.pattern.permute.xlu0 0
        %897 = vperm.xlu0 %896, %v847
        %v898 = vpop.permute.xlu0 %897
        %901 = vset.pattern.permute.xlu0 0
        %902 = vperm.xlu0 %901, %v848
        %v903 = vpop.permute.xlu0 %902
        %906 = vset.pattern.permute.xlu0 0
        %907 = vperm.xlu0 %906, %v849
        %v908 = vpop.permute.xlu0 %907
        %911 = vset.pattern.permute.xlu0 0
        %912 = vperm.xlu0 %911, %v850
        %v913 = vpop.permute.xlu0 %912
        %916 = vset.pattern.permute.xlu0 0
        %917 = vperm.xlu0 %916, %v851
        %v918 = vpop.permute.xlu0 %917
        %921 = vset.pattern.permute.xlu0 0
        %922 = vperm.xlu0 %921, %v852
        %v923 = vpop.permute.xlu0 %922
        %926 = vset.pattern.permute.xlu0 0
        %927 = vperm.xlu0 %926, %v853
        %v928 = vpop.permute.xlu0 %927
        %931 = vset.pattern.permute.xlu0 0
        %932 = vperm.xlu0 %931, %v854
        %v933 = vpop.permute.xlu0 %932
        %v935 = vadd.f32 %v823, %v858
        %v936 = vadd.f32 %v824, %v863
        %v937 = vadd.f32 %v825, %v868
        %v938 = vadd.f32 %v826, %v873
        %v939 = vadd.f32 %v827, %v878
        %v940 = vadd.f32 %v828, %v883
        %v941 = vadd.f32 %v829, %v888
        %v942 = vadd.f32 %v830, %v893
        %v943 = vadd.f32 %v831, %v898
        %v944 = vadd.f32 %v832, %v903
        %v945 = vadd.f32 %v833, %v908
        %v946 = vadd.f32 %v834, %v913
        %v947 = vadd.f32 %v835, %v918
        %v948 = vadd.f32 %v836, %v923
        %v949 = vadd.f32 %v837, %v928
        %v950 = vadd.f32 %v838, %v933
        %v951 = vmax.f32 %v935, 0.0
        %v952 = vmax.f32 %v936, 0.0
        %v953 = vmax.f32 %v937, 0.0
        %v954 = vmax.f32 %v938, 0.0
        %v955 = vmax.f32 %v939, 0.0
        %v956 = vmax.f32 %v940, 0.0
        %v957 = vmax.f32 %v941, 0.0
        %v958 = vmax.f32 %v942, 0.0
        %v959 = vmax.f32 %v943, 0.0
        %v960 = vmax.f32 %v944, 0.0
        %v961 = vmax.f32 %v945, 0.0
        %v962 = vmax.f32 %v946, 0.0
        %v963 = vmax.f32 %v947, 0.0
        %v964 = vmax.f32 %v948, 0.0
        %v965 = vmax.f32 %v949, 0.0
        %v966 = vmax.f32 %v950, 0.0
        %v967 = vpack.c.bf16 %v952, %v951
        %v968 = vpack.c.bf16 %v954, %v953
        %v969 = vpack.c.bf16 %v956, %v955
        %v970 = vpack.c.bf16 %v958, %v957
        %v971 = vpack.c.bf16 %v960, %v959
        %v972 = vpack.c.bf16 %v962, %v961
        %v973 = vpack.c.bf16 %v964, %v963
        %v974 = vpack.c.bf16 %v966, %v965
        %v991 = vunpack.c.l.b16 %v506
        %v992 = vunpack.c.l.b16 %v507
        %v993 = vunpack.c.l.b16 %v508
        %v994 = vunpack.c.l.b16 %v509
        %v995 = vunpack.c.l.b16 %v510
        %v996 = vunpack.c.l.b16 %v511
        %v997 = vunpack.c.l.b16 %v512
        %v998 = vunpack.c.l.b16 %v513
        %v999 = vunpack.c.l.b16 %v514
        %v1000 = vunpack.c.l.b16 %v515
        %v1001 = vunpack.c.l.b16 %v516
        %v1002 = vunpack.c.l.b16 %v517
        %v1003 = vunpack.c.l.b16 %v518
        %v1004 = vunpack.c.l.b16 %v519
        %v1005 = vunpack.c.l.b16 %v520
        %v1006 = vunpack.c.l.b16 %v521
        %v1007 = vpack.c.b16 %v992, %v991
        %v1008 = vpack.c.b16 %v994, %v993
        %v1009 = vpack.c.b16 %v996, %v995
        %v1010 = vpack.c.b16 %v998, %v997
        %v1011 = vpack.c.b16 %v1000, %v999
        %v1012 = vpack.c.b16 %v1002, %v1001
        %v1013 = vpack.c.b16 %v1004, %v1003
        %v1014 = vpack.c.b16 %v1006, %v1005
        %v1023 = vld [vmem:[%s4] sm:$0xff]
        %v1024 = vld [vmem:[%s4 + $0x8] sm:$0xff]
        %v1025 = vld [vmem:[%s4 + $0x10] sm:$0xff]
        %v1026 = vld [vmem:[%s4 + $0x18] sm:$0xff]
        %v1027 = vld [vmem:[%s4 + $0x20] sm:$0xff]
        %v1028 = vld [vmem:[%s4 + $0x28] sm:$0xff]
        %v1029 = vld [vmem:[%s4 + $0x30] sm:$0xff]
        %v1030 = vld [vmem:[%s4 + $0x38] sm:$0xff]
        %v1031 = vld [vmem:[%s4 + $0x40] sm:$0xff]
        %v1032 = vld [vmem:[%s4 + $0x48] sm:$0xff]
        %v1033 = vld [vmem:[%s4 + $0x50] sm:$0xff]
        %v1034 = vld [vmem:[%s4 + $0x58] sm:$0xff]
        %v1035 = vld [vmem:[%s4 + $0x60] sm:$0xff]
        %v1036 = vld [vmem:[%s4 + $0x68] sm:$0xff]
        %v1037 = vld [vmem:[%s4 + $0x70] sm:$0xff]
        %v1038 = vld [vmem:[%s4 + $0x78] sm:$0xff]
        %v1039 = vld [vmem:[%s4 + $0x80] sm:$0xff]
        %v1040 = vld [vmem:[%s4 + $0x88] sm:$0xff]
        %v1041 = vld [vmem:[%s4 + $0x90] sm:$0xff]
        %v1042 = vld [vmem:[%s4 + $0x98] sm:$0xff]
        %v1043 = vld [vmem:[%s4 + $0xa0] sm:$0xff]
        %v1044 = vld [vmem:[%s4 + $0xa8] sm:$0xff]
        %v1045 = vld [vmem:[%s4 + $0xb0] sm:$0xff]
        %v1046 = vld [vmem:[%s4 + $0xb8] sm:$0xff]
        %v1047 = vld [vmem:[%s4 + $0xc0] sm:$0xff]
        %v1048 = vld [vmem:[%s4 + $0xc8] sm:$0xff]
        %v1049 = vld [vmem:[%s4 + $0xd0] sm:$0xff]
        %v1050 = vld [vmem:[%s4 + $0xd8] sm:$0xff]
        %v1051 = vld [vmem:[%s4 + $0xe0] sm:$0xff]
        %v1052 = vld [vmem:[%s4 + $0xe8] sm:$0xff]
        %v1053 = vld [vmem:[%s4 + $0xf0] sm:$0xff]
        %v1054 = vld [vmem:[%s4 + $0xf8] sm:$0xff]
        %v1055 = vld [vmem:[%s4 + $0x100] sm:$0xff]
        %v1056 = vld [vmem:[%s4 + $0x108] sm:$0xff]
        %v1057 = vld [vmem:[%s4 + $0x110] sm:$0xff]
        %v1058 = vld [vmem:[%s4 + $0x118] sm:$0xff]
        %v1059 = vld [vmem:[%s4 + $0x120] sm:$0xff]
        %v1060 = vld [vmem:[%s4 + $0x128] sm:$0xff]
        %v1061 = vld [vmem:[%s4 + $0x130] sm:$0xff]
        %v1062 = vld [vmem:[%s4 + $0x138] sm:$0xff]
        %v1063 = vld [vmem:[%s4 + $0x140] sm:$0xff]
        %v1064 = vld [vmem:[%s4 + $0x148] sm:$0xff]
        %v1065 = vld [vmem:[%s4 + $0x150] sm:$0xff]
        %v1066 = vld [vmem:[%s4 + $0x158] sm:$0xff]
        %v1067 = vld [vmem:[%s4 + $0x160] sm:$0xff]
        %v1068 = vld [vmem:[%s4 + $0x168] sm:$0xff]
        %v1069 = vld [vmem:[%s4 + $0x170] sm:$0xff]
        %v1070 = vld [vmem:[%s4 + $0x178] sm:$0xff]
        %v1071 = vld [vmem:[%s4 + $0x180] sm:$0xff]
        %v1072 = vld [vmem:[%s4 + $0x188] sm:$0xff]
        %v1073 = vld [vmem:[%s4 + $0x190] sm:$0xff]
        %v1074 = vld [vmem:[%s4 + $0x198] sm:$0xff]
        %v1075 = vld [vmem:[%s4 + $0x1a0] sm:$0xff]
        %v1076 = vld [vmem:[%s4 + $0x1a8] sm:$0xff]
        %v1077 = vld [vmem:[%s4 + $0x1b0] sm:$0xff]
        %v1078 = vld [vmem:[%s4 + $0x1b8] sm:$0xff]
        %v1079 = vld [vmem:[%s4 + $0x1c0] sm:$0xff]
        %v1080 = vld [vmem:[%s4 + $0x1c8] sm:$0xff]
        %v1081 = vld [vmem:[%s4 + $0x1d0] sm:$0xff]
        %v1082 = vld [vmem:[%s4 + $0x1d8] sm:$0xff]
        %v1083 = vld [vmem:[%s4 + $0x1e0] sm:$0xff]
        %v1084 = vld [vmem:[%s4 + $0x1e8] sm:$0xff]
        %v1085 = vld [vmem:[%s4 + $0x1f0] sm:$0xff]
        %v1086 = vld [vmem:[%s4 + $0x1f8] sm:$0xff]
        %v1087 = vld [vmem:[%s5] sm:$0xff]
        %v1088 = vld [vmem:[%s5 + $0x8] sm:$0xff]
        %v1089 = vld [vmem:[%s5 + $0x10] sm:$0xff]
        %v1090 = vld [vmem:[%s5 + $0x18] sm:$0xff]
        %v1091 = vld [vmem:[%s5 + $0x20] sm:$0xff]
        %v1092 = vld [vmem:[%s5 + $0x28] sm:$0xff]
        %v1093 = vld [vmem:[%s5 + $0x30] sm:$0xff]
        %v1094 = vld [vmem:[%s5 + $0x38] sm:$0xff]
        %v1095 = vld [vmem:[%s5 + $0x40] sm:$0xff]
        %v1096 = vld [vmem:[%s5 + $0x48] sm:$0xff]
        %v1097 = vld [vmem:[%s5 + $0x50] sm:$0xff]
        %v1098 = vld [vmem:[%s5 + $0x58] sm:$0xff]
        %v1099 = vld [vmem:[%s5 + $0x60] sm:$0xff]
        %v1100 = vld [vmem:[%s5 + $0x68] sm:$0xff]
        %v1101 = vld [vmem:[%s5 + $0x70] sm:$0xff]
        %v1102 = vld [vmem:[%s5 + $0x78] sm:$0xff]
        %v1103 = vld [vmem:[%s5 + $0x80] sm:$0xff]
        %v1104 = vld [vmem:[%s5 + $0x88] sm:$0xff]
        %v1105 = vld [vmem:[%s5 + $0x90] sm:$0xff]
        %v1106 = vld [vmem:[%s5 + $0x98] sm:$0xff]
        %v1107 = vld [vmem:[%s5 + $0xa0] sm:$0xff]
        %v1108 = vld [vmem:[%s5 + $0xa8] sm:$0xff]
        %v1109 = vld [vmem:[%s5 + $0xb0] sm:$0xff]
        %v1110 = vld [vmem:[%s5 + $0xb8] sm:$0xff]
        %v1111 = vld [vmem:[%s5 + $0xc0] sm:$0xff]
        %v1112 = vld [vmem:[%s5 + $0xc8] sm:$0xff]
        %v1113 = vld [vmem:[%s5 + $0xd0] sm:$0xff]
        %v1114 = vld [vmem:[%s5 + $0xd8] sm:$0xff]
        %v1115 = vld [vmem:[%s5 + $0xe0] sm:$0xff]
        %v1116 = vld [vmem:[%s5 + $0xe8] sm:$0xff]
        %v1117 = vld [vmem:[%s5 + $0xf0] sm:$0xff]
        %v1118 = vld [vmem:[%s5 + $0xf8] sm:$0xff]
        %v1119 = vld [vmem:[%s5 + $0x100] sm:$0xff]
        %v1120 = vld [vmem:[%s5 + $0x108] sm:$0xff]
        %v1121 = vld [vmem:[%s5 + $0x110] sm:$0xff]
        %v1122 = vld [vmem:[%s5 + $0x118] sm:$0xff]
        %v1123 = vld [vmem:[%s5 + $0x120] sm:$0xff]
        %v1124 = vld [vmem:[%s5 + $0x128] sm:$0xff]
        %v1125 = vld [vmem:[%s5 + $0x130] sm:$0xff]
        %v1126 = vld [vmem:[%s5 + $0x138] sm:$0xff]
        %v1127 = vld [vmem:[%s5 + $0x140] sm:$0xff]
        %v1128 = vld [vmem:[%s5 + $0x148] sm:$0xff]
        %v1129 = vld [vmem:[%s5 + $0x150] sm:$0xff]
        %v1130 = vld [vmem:[%s5 + $0x158] sm:$0xff]
        %v1131 = vld [vmem:[%s5 + $0x160] sm:$0xff]
        %v1132 = vld [vmem:[%s5 + $0x168] sm:$0xff]
        %v1133 = vld [vmem:[%s5 + $0x170] sm:$0xff]
        %v1134 = vld [vmem:[%s5 + $0x178] sm:$0xff]
        %v1135 = vld [vmem:[%s5 + $0x180] sm:$0xff]
        %v1136 = vld [vmem:[%s5 + $0x188] sm:$0xff]
        %v1137 = vld [vmem:[%s5 + $0x190] sm:$0xff]
        %v1138 = vld [vmem:[%s5 + $0x198] sm:$0xff]
        %v1139 = vld [vmem:[%s5 + $0x1a0] sm:$0xff]
        %v1140 = vld [vmem:[%s5 + $0x1a8] sm:$0xff]
        %v1141 = vld [vmem:[%s5 + $0x1b0] sm:$0xff]
        %v1142 = vld [vmem:[%s5 + $0x1b8] sm:$0xff]
        %v1143 = vld [vmem:[%s5 + $0x1c0] sm:$0xff]
        %v1144 = vld [vmem:[%s5 + $0x1c8] sm:$0xff]
        %v1145 = vld [vmem:[%s5 + $0x1d0] sm:$0xff]
        %v1146 = vld [vmem:[%s5 + $0x1d8] sm:$0xff]
        %v1147 = vld [vmem:[%s5 + $0x1e0] sm:$0xff]
        %v1148 = vld [vmem:[%s5 + $0x1e8] sm:$0xff]
        %v1149 = vld [vmem:[%s5 + $0x1f0] sm:$0xff]
        %v1150 = vld [vmem:[%s5 + $0x1f8] sm:$0xff]
        %1152 = vset.pattern.permute.xlu0 0
        %1153 = vperm.xlu0 %1152, %v1087
        %v1154 = vpop.permute.xlu0 %1153
        %1157 = vset.pattern.permute.xlu0 0
        %1158 = vperm.xlu0 %1157, %v1088
        %v1159 = vpop.permute.xlu0 %1158
        %1162 = vset.pattern.permute.xlu0 0
        %1163 = vperm.xlu0 %1162, %v1089
        %v1164 = vpop.permute.xlu0 %1163
        %1167 = vset.pattern.permute.xlu0 0
        %1168 = vperm.xlu0 %1167, %v1090
        %v1169 = vpop.permute.xlu0 %1168
        %1172 = vset.pattern.permute.xlu0 0
        %1173 = vperm.xlu0 %1172, %v1091
        %v1174 = vpop.permute.xlu0 %1173
        %1177 = vset.pattern.permute.xlu0 0
        %1178 = vperm.xlu0 %1177, %v1092
        %v1179 = vpop.permute.xlu0 %1178
        %1182 = vset.pattern.permute.xlu0 0
        %1183 = vperm.xlu0 %1182, %v1093
        %v1184 = vpop.permute.xlu0 %1183
        %1187 = vset.pattern.permute.xlu0 0
        %1188 = vperm.xlu0 %1187, %v1094
        %v1189 = vpop.permute.xlu0 %1188
        %1192 = vset.pattern.permute.xlu0 0
        %1193 = vperm.xlu0 %1192, %v1095
        %v1194 = vpop.permute.xlu0 %1193
        %1197 = vset.pattern.permute.xlu0 0
        %1198 = vperm.xlu0 %1197, %v1096
        %v1199 = vpop.permute.xlu0 %1198
        %1202 = vset.pattern.permute.xlu0 0
        %1203 = vperm.xlu0 %1202, %v1097
        %v1204 = vpop.permute.xlu0 %1203
        %1207 = vset.pattern.permute.xlu0 0
        %1208 = vperm.xlu0 %1207, %v1098
        %v1209 = vpop.permute.xlu0 %1208
        %1212 = vset.pattern.permute.xlu0 0
        %1213 = vperm.xlu0 %1212, %v1099
        %v1214 = vpop.permute.xlu0 %1213
        %1217 = vset.pattern.permute.xlu0 0
        %1218 = vperm.xlu0 %1217, %v1100
        %v1219 = vpop.permute.xlu0 %1218
        %1222 = vset.pattern.permute.xlu0 0
        %1223 = vperm.xlu0 %1222, %v1101
        %v1224 = vpop.permute.xlu0 %1223
        %1227 = vset.pattern.permute.xlu0 0
        %1228 = vperm.xlu0 %1227, %v1102
        %v1229 = vpop.permute.xlu0 %1228
        %1232 = vset.pattern.permute.xlu0 0
        %1233 = vperm.xlu0 %1232, %v1103
        %v1234 = vpop.permute.xlu0 %1233
        %1237 = vset.pattern.permute.xlu0 0
        %1238 = vperm.xlu0 %1237, %v1104
        %v1239 = vpop.permute.xlu0 %1238
        %1242 = vset.pattern.permute.xlu0 0
        %1243 = vperm.xlu0 %1242, %v1105
        %v1244 = vpop.permute.xlu0 %1243
        %1247 = vset.pattern.permute.xlu0 0
        %1248 = vperm.xlu0 %1247, %v1106
        %v1249 = vpop.permute.xlu0 %1248
        %1252 = vset.pattern.permute.xlu0 0
        %1253 = vperm.xlu0 %1252, %v1107
        %v1254 = vpop.permute.xlu0 %1253
        %1257 = vset.pattern.permute.xlu0 0
        %1258 = vperm.xlu0 %1257, %v1108
        %v1259 = vpop.permute.xlu0 %1258
        %1262 = vset.pattern.permute.xlu0 0
        %1263 = vperm.xlu0 %1262, %v1109
        %v1264 = vpop.permute.xlu0 %1263
        %1267 = vset.pattern.permute.xlu0 0
        %1268 = vperm.xlu0 %1267, %v1110
        %v1269 = vpop.permute.xlu0 %1268
        %1272 = vset.pattern.permute.xlu0 0
        %1273 = vperm.xlu0 %1272, %v1111
        %v1274 = vpop.permute.xlu0 %1273
        %1277 = vset.pattern.permute.xlu0 0
        %1278 = vperm.xlu0 %1277, %v1112
        %v1279 = vpop.permute.xlu0 %1278
        %1282 = vset.pattern.permute.xlu0 0
        %1283 = vperm.xlu0 %1282, %v1113
        %v1284 = vpop.permute.xlu0 %1283
        %1287 = vset.pattern.permute.xlu0 0
        %1288 = vperm.xlu0 %1287, %v1114
        %v1289 = vpop.permute.xlu0 %1288
        %1292 = vset.pattern.permute.xlu0 0
        %1293 = vperm.xlu0 %1292, %v1115
        %v1294 = vpop.permute.xlu0 %1293
        %1297 = vset.pattern.permute.xlu0 0
        %1298 = vperm.xlu0 %1297, %v1116
        %v1299 = vpop.permute.xlu0 %1298
        %1302 = vset.pattern.permute.xlu0 0
        %1303 = vperm.xlu0 %1302, %v1117
        %v1304 = vpop.permute.xlu0 %1303
        %1307 = vset.pattern.permute.xlu0 0
        %1308 = vperm.xlu0 %1307, %v1118
        %v1309 = vpop.permute.xlu0 %1308
        %1312 = vset.pattern.permute.xlu0 0
        %1313 = vperm.xlu0 %1312, %v1119
        %v1314 = vpop.permute.xlu0 %1313
        %1317 = vset.pattern.permute.xlu0 0
        %1318 = vperm.xlu0 %1317, %v1120
        %v1319 = vpop.permute.xlu0 %1318
        %1322 = vset.pattern.permute.xlu0 0
        %1323 = vperm.xlu0 %1322, %v1121
        %v1324 = vpop.permute.xlu0 %1323
        %1327 = vset.pattern.permute.xlu0 0
        %1328 = vperm.xlu0 %1327, %v1122
        %v1329 = vpop.permute.xlu0 %1328
        %1332 = vset.pattern.permute.xlu0 0
        %1333 = vperm.xlu0 %1332, %v1123
        %v1334 = vpop.permute.xlu0 %1333
        %1337 = vset.pattern.permute.xlu0 0
        %1338 = vperm.xlu0 %1337, %v1124
        %v1339 = vpop.permute.xlu0 %1338
        %1342 = vset.pattern.permute.xlu0 0
        %1343 = vperm.xlu0 %1342, %v1125
        %v1344 = vpop.permute.xlu0 %1343
        %1347 = vset.pattern.permute.xlu0 0
        %1348 = vperm.xlu0 %1347, %v1126
        %v1349 = vpop.permute.xlu0 %1348
        %1352 = vset.pattern.permute.xlu0 0
        %1353 = vperm.xlu0 %1352, %v1127
        %v1354 = vpop.permute.xlu0 %1353
        %1357 = vset.pattern.permute.xlu0 0
        %1358 = vperm.xlu0 %1357, %v1128
        %v1359 = vpop.permute.xlu0 %1358
        %1362 = vset.pattern.permute.xlu0 0
        %1363 = vperm.xlu0 %1362, %v1129
        %v1364 = vpop.permute.xlu0 %1363
        %1367 = vset.pattern.permute.xlu0 0
        %1368 = vperm.xlu0 %1367, %v1130
        %v1369 = vpop.permute.xlu0 %1368
        %1372 = vset.pattern.permute.xlu0 0
        %1373 = vperm.xlu0 %1372, %v1131
        %v1374 = vpop.permute.xlu0 %1373
        %1377 = vset.pattern.permute.xlu0 0
        %1378 = vperm.xlu0 %1377, %v1132
        %v1379 = vpop.permute.xlu0 %1378
        %1382 = vset.pattern.permute.xlu0 0
        %1383 = vperm.xlu0 %1382, %v1133
        %v1384 = vpop.permute.xlu0 %1383
        %1387 = vset.pattern.permute.xlu0 0
        %1388 = vperm.xlu0 %1387, %v1134
        %v1389 = vpop.permute.xlu0 %1388
        %1392 = vset.pattern.permute.xlu0 0
        %1393 = vperm.xlu0 %1392, %v1135
        %v1394 = vpop.permute.xlu0 %1393
        %1397 = vset.pattern.permute.xlu0 0
        %1398 = vperm.xlu0 %1397, %v1136
        %v1399 = vpop.permute.xlu0 %1398
        %1402 = vset.pattern.permute.xlu0 0
        %1403 = vperm.xlu0 %1402, %v1137
        %v1404 = vpop.permute.xlu0 %1403
        %1407 = vset.pattern.permute.xlu0 0
        %1408 = vperm.xlu0 %1407, %v1138
        %v1409 = vpop.permute.xlu0 %1408
        %1412 = vset.pattern.permute.xlu0 0
        %1413 = vperm.xlu0 %1412, %v1139
        %v1414 = vpop.permute.xlu0 %1413
        %1417 = vset.pattern.permute.xlu0 0
        %1418 = vperm.xlu0 %1417, %v1140
        %v1419 = vpop.permute.xlu0 %1418
        %1422 = vset.pattern.permute.xlu0 0
        %1423 = vperm.xlu0 %1422, %v1141
        %v1424 = vpop.permute.xlu0 %1423
        %1427 = vset.pattern.permute.xlu0 0
        %1428 = vperm.xlu0 %1427, %v1142
        %v1429 = vpop.permute.xlu0 %1428
        %1432 = vset.pattern.permute.xlu0 0
        %1433 = vperm.xlu0 %1432, %v1143
        %v1434 = vpop.permute.xlu0 %1433
        %1437 = vset.pattern.permute.xlu0 0
        %1438 = vperm.xlu0 %1437, %v1144
        %v1439 = vpop.permute.xlu0 %1438
        %1442 = vset.pattern.permute.xlu0 0
        %1443 = vperm.xlu0 %1442, %v1145
        %v1444 = vpop.permute.xlu0 %1443
        %1447 = vset.pattern.permute.xlu0 0
        %1448 = vperm.xlu0 %1447, %v1146
        %v1449 = vpop.permute.xlu0 %1448
        %1452 = vset.pattern.permute.xlu0 0
        %1453 = vperm.xlu0 %1452, %v1147
        %v1454 = vpop.permute.xlu0 %1453
        %1457 = vset.pattern.permute.xlu0 0
        %1458 = vperm.xlu0 %1457, %v1148
        %v1459 = vpop.permute.xlu0 %1458
        %1462 = vset.pattern.permute.xlu0 0
        %1463 = vperm.xlu0 %1462, %v1149
        %v1464 = vpop.permute.xlu0 %1463
        %1467 = vset.pattern.permute.xlu0 0
        %1468 = vperm.xlu0 %1467, %v1150
        %v1469 = vpop.permute.xlu0 %1468
        %v1535 = vunpack.c.l.b16 %v1023
        %v1536 = vunpack.c.h.b16 %v1023
        %v1537 = vunpack.c.l.b16 %v1024
        %v1538 = vunpack.c.h.b16 %v1024
        %v1539 = vunpack.c.l.b16 %v1025
        %v1540 = vunpack.c.h.b16 %v1025
        %v1541 = vunpack.c.l.b16 %v1026
        %v1542 = vunpack.c.h.b16 %v1026
        %v1543 = vunpack.c.l.b16 %v1027
        %v1544 = vunpack.c.h.b16 %v1027
        %v1545 = vunpack.c.l.b16 %v1028
        %v1546 = vunpack.c.h.b16 %v1028
        %v1547 = vunpack.c.l.b16 %v1029
        %v1548 = vunpack.c.h.b16 %v1029
        %v1549 = vunpack.c.l.b16 %v1030
        %v1550 = vunpack.c.h.b16 %v1030
        %v1551 = vunpack.c.l.b16 %v1031
        %v1552 = vunpack.c.h.b16 %v1031
        %v1553 = vunpack.c.l.b16 %v1032
        %v1554 = vunpack.c.h.b16 %v1032
        %v1555 = vunpack.c.l.b16 %v1033
        %v1556 = vunpack.c.h.b16 %v1033
        %v1557 = vunpack.c.l.b16 %v1034
        %v1558 = vunpack.c.h.b16 %v1034
        %v1559 = vunpack.c.l.b16 %v1035
        %v1560 = vunpack.c.h.b16 %v1035
        %v1561 = vunpack.c.l.b16 %v1036
        %v1562 = vunpack.c.h.b16 %v1036
        %v1563 = vunpack.c.l.b16 %v1037
        %v1564 = vunpack.c.h.b16 %v1037
        %v1565 = vunpack.c.l.b16 %v1038
        %v1566 = vunpack.c.h.b16 %v1038
        %v1567 = vunpack.c.l.b16 %v1039
        %v1568 = vunpack.c.h.b16 %v1039
        %v1569 = vunpack.c.l.b16 %v1040
        %v1570 = vunpack.c.h.b16 %v1040
        %v1571 = vunpack.c.l.b16 %v1041
        %v1572 = vunpack.c.h.b16 %v1041
        %v1573 = vunpack.c.l.b16 %v1042
        %v1574 = vunpack.c.h.b16 %v1042
        %v1575 = vunpack.c.l.b16 %v1043
        %v1576 = vunpack.c.h.b16 %v1043
        %v1577 = vunpack.c.l.b16 %v1044
        %v1578 = vunpack.c.h.b16 %v1044
        %v1579 = vunpack.c.l.b16 %v1045
        %v1580 = vunpack.c.h.b16 %v1045
        %v1581 = vunpack.c.l.b16 %v1046
        %v1582 = vunpack.c.h.b16 %v1046
        %v1583 = vunpack.c.l.b16 %v1047
        %v1584 = vunpack.c.h.b16 %v1047
        %v1585 = vunpack.c.l.b16 %v1048
        %v1586 = vunpack.c.h.b16 %v1048
        %v1587 = vunpack.c.l.b16 %v1049
        %v1588 = vunpack.c.h.b16 %v1049
        %v1589 = vunpack.c.l.b16 %v1050
        %v1590 = vunpack.c.h.b16 %v1050
        %v1591 = vunpack.c.l.b16 %v1051
        %v1592 = vunpack.c.h.b16 %v1051
        %v1593 = vunpack.c.l.b16 %v1052
        %v1594 = vunpack.c.h.b16 %v1052
        %v1595 = vunpack.c.l.b16 %v1053
        %v1596 = vunpack.c.h.b16 %v1053
        %v1597 = vunpack.c.l.b16 %v1054
        %v1598 = vunpack.c.h.b16 %v1054
        %v1599 = vunpack.c.l.b16 %v1055
        %v1600 = vunpack.c.h.b16 %v1055
        %v1601 = vunpack.c.l.b16 %v1056
        %v1602 = vunpack.c.h.b16 %v1056
        %v1603 = vunpack.c.l.b16 %v1057
        %v1604 = vunpack.c.h.b16 %v1057
        %v1605 = vunpack.c.l.b16 %v1058
        %v1606 = vunpack.c.h.b16 %v1058
        %v1607 = vunpack.c.l.b16 %v1059
        %v1608 = vunpack.c.h.b16 %v1059
        %v1609 = vunpack.c.l.b16 %v1060
        %v1610 = vunpack.c.h.b16 %v1060
        %v1611 = vunpack.c.l.b16 %v1061
        %v1612 = vunpack.c.h.b16 %v1061
        %v1613 = vunpack.c.l.b16 %v1062
        %v1614 = vunpack.c.h.b16 %v1062
        %v1615 = vunpack.c.l.b16 %v1063
        %v1616 = vunpack.c.h.b16 %v1063
        %v1617 = vunpack.c.l.b16 %v1064
        %v1618 = vunpack.c.h.b16 %v1064
        %v1619 = vunpack.c.l.b16 %v1065
        %v1620 = vunpack.c.h.b16 %v1065
        %v1621 = vunpack.c.l.b16 %v1066
        %v1622 = vunpack.c.h.b16 %v1066
        %v1623 = vunpack.c.l.b16 %v1067
        %v1624 = vunpack.c.h.b16 %v1067
        %v1625 = vunpack.c.l.b16 %v1068
        %v1626 = vunpack.c.h.b16 %v1068
        %v1627 = vunpack.c.l.b16 %v1069
        %v1628 = vunpack.c.h.b16 %v1069
        %v1629 = vunpack.c.l.b16 %v1070
        %v1630 = vunpack.c.h.b16 %v1070
        %v1631 = vunpack.c.l.b16 %v1071
        %v1632 = vunpack.c.h.b16 %v1071
        %v1633 = vunpack.c.l.b16 %v1072
        %v1634 = vunpack.c.h.b16 %v1072
        %v1635 = vunpack.c.l.b16 %v1073
        %v1636 = vunpack.c.h.b16 %v1073
        %v1637 = vunpack.c.l.b16 %v1074
        %v1638 = vunpack.c.h.b16 %v1074
        %v1639 = vunpack.c.l.b16 %v1075
        %v1640 = vunpack.c.h.b16 %v1075
        %v1641 = vunpack.c.l.b16 %v1076
        %v1642 = vunpack.c.h.b16 %v1076
        %v1643 = vunpack.c.l.b16 %v1077
        %v1644 = vunpack.c.h.b16 %v1077
        %v1645 = vunpack.c.l.b16 %v1078
        %v1646 = vunpack.c.h.b16 %v1078
        %v1647 = vunpack.c.l.b16 %v1079
        %v1648 = vunpack.c.h.b16 %v1079
        %v1649 = vunpack.c.l.b16 %v1080
        %v1650 = vunpack.c.h.b16 %v1080
        %v1651 = vunpack.c.l.b16 %v1081
        %v1652 = vunpack.c.h.b16 %v1081
        %v1653 = vunpack.c.l.b16 %v1082
        %v1654 = vunpack.c.h.b16 %v1082
        %v1655 = vunpack.c.l.b16 %v1083
        %v1656 = vunpack.c.h.b16 %v1083
        %v1657 = vunpack.c.l.b16 %v1084
        %v1658 = vunpack.c.h.b16 %v1084
        %v1659 = vunpack.c.l.b16 %v1085
        %v1660 = vunpack.c.h.b16 %v1085
        %v1661 = vunpack.c.l.b16 %v1086
        %v1662 = vunpack.c.h.b16 %v1086
        %v1663 = vpack.c.b16 %v1537, %v1535
        %v1664 = vpack.c.b16 %v1538, %v1536
        %v1665 = vpack.c.b16 %v1541, %v1539
        %v1666 = vpack.c.b16 %v1542, %v1540
        %v1667 = vpack.c.b16 %v1545, %v1543
        %v1668 = vpack.c.b16 %v1546, %v1544
        %v1669 = vpack.c.b16 %v1549, %v1547
        %v1670 = vpack.c.b16 %v1550, %v1548
        %v1671 = vpack.c.b16 %v1553, %v1551
        %v1672 = vpack.c.b16 %v1554, %v1552
        %v1673 = vpack.c.b16 %v1557, %v1555
        %v1674 = vpack.c.b16 %v1558, %v1556
        %v1675 = vpack.c.b16 %v1561, %v1559
        %v1676 = vpack.c.b16 %v1562, %v1560
        %v1677 = vpack.c.b16 %v1565, %v1563
        %v1678 = vpack.c.b16 %v1566, %v1564
        %v1679 = vpack.c.b16 %v1569, %v1567
        %v1680 = vpack.c.b16 %v1570, %v1568
        %v1681 = vpack.c.b16 %v1573, %v1571
        %v1682 = vpack.c.b16 %v1574, %v1572
        %v1683 = vpack.c.b16 %v1577, %v1575
        %v1684 = vpack.c.b16 %v1578, %v1576
        %v1685 = vpack.c.b16 %v1581, %v1579
        %v1686 = vpack.c.b16 %v1582, %v1580
        %v1687 = vpack.c.b16 %v1585, %v1583
        %v1688 = vpack.c.b16 %v1586, %v1584
        %v1689 = vpack.c.b16 %v1589, %v1587
        %v1690 = vpack.c.b16 %v1590, %v1588
        %v1691 = vpack.c.b16 %v1593, %v1591
        %v1692 = vpack.c.b16 %v1594, %v1592
        %v1693 = vpack.c.b16 %v1597, %v1595
        %v1694 = vpack.c.b16 %v1598, %v1596
        %v1695 = vpack.c.b16 %v1601, %v1599
        %v1696 = vpack.c.b16 %v1602, %v1600
        %v1697 = vpack.c.b16 %v1605, %v1603
        %v1698 = vpack.c.b16 %v1606, %v1604
        %v1699 = vpack.c.b16 %v1609, %v1607
        %v1700 = vpack.c.b16 %v1610, %v1608
        %v1701 = vpack.c.b16 %v1613, %v1611
        %v1702 = vpack.c.b16 %v1614, %v1612
        %v1703 = vpack.c.b16 %v1617, %v1615
        %v1704 = vpack.c.b16 %v1618, %v1616
        %v1705 = vpack.c.b16 %v1621, %v1619
        %v1706 = vpack.c.b16 %v1622, %v1620
        %v1707 = vpack.c.b16 %v1625, %v1623
        %v1708 = vpack.c.b16 %v1626, %v1624
        %v1709 = vpack.c.b16 %v1629, %v1627
        %v1710 = vpack.c.b16 %v1630, %v1628
        %v1711 = vpack.c.b16 %v1633, %v1631
        %v1712 = vpack.c.b16 %v1634, %v1632
        %v1713 = vpack.c.b16 %v1637, %v1635
        %v1714 = vpack.c.b16 %v1638, %v1636
        %v1715 = vpack.c.b16 %v1641, %v1639
        %v1716 = vpack.c.b16 %v1642, %v1640
        %v1717 = vpack.c.b16 %v1645, %v1643
        %v1718 = vpack.c.b16 %v1646, %v1644
        %v1719 = vpack.c.b16 %v1649, %v1647
        %v1720 = vpack.c.b16 %v1650, %v1648
        %v1721 = vpack.c.b16 %v1653, %v1651
        %v1722 = vpack.c.b16 %v1654, %v1652
        %v1723 = vpack.c.b16 %v1657, %v1655
        %v1724 = vpack.c.b16 %v1658, %v1656
        %v1725 = vpack.c.b16 %v1661, %v1659
        %v1726 = vpack.c.b16 %v1662, %v1660
        %1791 = vmatprep.subr.bf16.mxu0 0
        %1792 = vmatpush1.bf16.msra.mxu0 %v1014
        %1793 = vmatprep.subr.bf16.mxu0 0
        %1794 = vmatpush1.bf16.msra.mxu0 %v1013
        %1795 = vmatprep.subr.bf16.mxu0 0
        %1796 = vmatpush1.bf16.msra.mxu0 %v1012
        %1797 = vmatprep.subr.bf16.mxu0 0
        %1798 = vmatpush1.bf16.msra.mxu0 %v1011
        %1799 = vmatprep.subr.bf16.mxu0 0
        %1800 = vmatpush1.bf16.msra.mxu0 %v1010
        %1801 = vmatprep.subr.bf16.mxu0 0
        %1802 = vmatpush1.bf16.msra.mxu0 %v1009
        %1803 = vmatprep.subr.bf16.mxu0 0
        %1804 = vmatpush1.bf16.msra.mxu0 %v1008
        %1805 = vmatprep.subr.bf16.mxu0 0
        %1806 = vmatpush1.bf16.msra.mxu0 %v1007
        %1807 = vmatprep.subr.bf16.mxu0 0
        %1808 = vmatpush2.bf16.msra.mxu0 %v974
        %1809 = vmatprep.subr.bf16.mxu0 0
        %1810 = vmatpush2.bf16.msra.mxu0 %v973
        %1811 = vmatprep.subr.bf16.mxu0 0
        %1812 = vmatpush2.bf16.msra.mxu0 %v972
        %1813 = vmatprep.subr.bf16.mxu0 0
        %1814 = vmatpush2.bf16.msra.mxu0 %v971
        %1815 = vmatprep.subr.bf16.mxu0 0
        %1816 = vmatpush2.bf16.msra.mxu0 %v970
        %1817 = vmatprep.subr.bf16.mxu0 0
        %1818 = vmatpush2.bf16.msra.mxu0 %v969
        %1819 = vmatprep.subr.bf16.mxu0 0
        %1820 = vmatpush2.bf16.msra.mxu0 %v968
        %1821 = vmatprep.subr.bf16.mxu0 0
        %1822 = vmatpush2.bf16.msra.mxu0 %v967
        %1823 = vmatprep.mubr.bf16.mxu0 %v1664
        %1824 = vmatmul.mubr.bf16.gmra.mxu0 %v1663
        %v1825 = vpop.f32.mrf.mxu0
        %v1826 = vadd.f32 %v1154, %v1825
        %v1827 = vpop.f32.mrf.mxu0
        %v1828 = vpop.f32.mrf.mxu0
        %v1829 = vadd.f32 %v1159, %v1828
        %v1830 = vpop.f32.mrf.mxu0
        %1831 = vmatprep.mubr.bf16.mxu0 %v1666
        %1832 = vmatmul.mubr.bf16.gmra.mxu0 %v1665
        %v1833 = vpop.f32.mrf.mxu0
        %v1834 = vadd.f32 %v1164, %v1833
        %v1835 = vpop.f32.mrf.mxu0
        %v1836 = vpop.f32.mrf.mxu0
        %v1837 = vadd.f32 %v1169, %v1836
        %v1838 = vpop.f32.mrf.mxu0
        %1839 = vmatprep.mubr.bf16.mxu0 %v1668
        %1840 = vmatmul.mubr.bf16.gmra.mxu0 %v1667
        %v1841 = vpop.f32.mrf.mxu0
        %v1842 = vadd.f32 %v1174, %v1841
        %v1843 = vpop.f32.mrf.mxu0
        %v1844 = vpop.f32.mrf.mxu0
        %v1845 = vadd.f32 %v1179, %v1844
        %v1846 = vpop.f32.mrf.mxu0
        %1847 = vmatprep.mubr.bf16.mxu0 %v1670
        %1848 = vmatmul.mubr.bf16.gmra.mxu0 %v1669
        %v1849 = vpop.f32.mrf.mxu0
        %v1850 = vadd.f32 %v1184, %v1849
        %v1851 = vpop.f32.mrf.mxu0
        %v1852 = vpop.f32.mrf.mxu0
        %v1853 = vadd.f32 %v1189, %v1852
        %v1854 = vpop.f32.mrf.mxu0
        %1855 = vmatprep.mubr.bf16.mxu0 %v1672
        %1856 = vmatmul.mubr.bf16.gmra.mxu0 %v1671
        %v1857 = vpop.f32.mrf.mxu0
        %v1858 = vadd.f32 %v1194, %v1857
        %v1859 = vpop.f32.mrf.mxu0
        %v1860 = vpop.f32.mrf.mxu0
        %v1861 = vadd.f32 %v1199, %v1860
        %v1862 = vpop.f32.mrf.mxu0
        %1863 = vmatprep.mubr.bf16.mxu0 %v1674
        %1864 = vmatmul.mubr.bf16.gmra.mxu0 %v1673
        %v1865 = vpop.f32.mrf.mxu0
        %v1866 = vadd.f32 %v1204, %v1865
        %v1867 = vpop.f32.mrf.mxu0
        %v1868 = vpop.f32.mrf.mxu0
        %v1869 = vadd.f32 %v1209, %v1868
        %v1870 = vpop.f32.mrf.mxu0
        %1871 = vmatprep.mubr.bf16.mxu0 %v1676
        %1872 = vmatmul.mubr.bf16.gmra.mxu0 %v1675
        %v1873 = vpop.f32.mrf.mxu0
        %v1874 = vadd.f32 %v1214, %v1873
        %v1875 = vpop.f32.mrf.mxu0
        %v1876 = vpop.f32.mrf.mxu0
        %v1877 = vadd.f32 %v1219, %v1876
        %v1878 = vpop.f32.mrf.mxu0
        %1879 = vmatprep.mubr.bf16.mxu0 %v1678
        %1880 = vmatmul.mubr.bf16.gmra.mxu0 %v1677
        %v1881 = vpop.f32.mrf.mxu0
        %v1882 = vadd.f32 %v1224, %v1881
        %v1883 = vpop.f32.mrf.mxu0
        %v1884 = vpop.f32.mrf.mxu0
        %v1885 = vadd.f32 %v1229, %v1884
        %v1886 = vpop.f32.mrf.mxu0
        %1887 = vmatprep.mubr.bf16.mxu0 %v1680
        %1888 = vmatmul.mubr.bf16.gmra.mxu0 %v1679
        %v1889 = vpop.f32.mrf.mxu0
        %v1890 = vadd.f32 %v1234, %v1889
        %v1891 = vpop.f32.mrf.mxu0
        %v1892 = vpop.f32.mrf.mxu0
        %v1893 = vadd.f32 %v1239, %v1892
        %v1894 = vpop.f32.mrf.mxu0
        %1895 = vmatprep.mubr.bf16.mxu0 %v1682
        %1896 = vmatmul.mubr.bf16.gmra.mxu0 %v1681
        %v1897 = vpop.f32.mrf.mxu0
        %v1898 = vadd.f32 %v1244, %v1897
        %v1899 = vpop.f32.mrf.mxu0
        %v1900 = vpop.f32.mrf.mxu0
        %v1901 = vadd.f32 %v1249, %v1900
        %v1902 = vpop.f32.mrf.mxu0
        %1903 = vmatprep.mubr.bf16.mxu0 %v1684
        %1904 = vmatmul.mubr.bf16.gmra.mxu0 %v1683
        %v1905 = vpop.f32.mrf.mxu0
        %v1906 = vadd.f32 %v1254, %v1905
        %v1907 = vpop.f32.mrf.mxu0
        %v1908 = vpop.f32.mrf.mxu0
        %v1909 = vadd.f32 %v1259, %v1908
        %v1910 = vpop.f32.mrf.mxu0
        %1911 = vmatprep.mubr.bf16.mxu0 %v1686
        %1912 = vmatmul.mubr.bf16.gmra.mxu0 %v1685
        %v1913 = vpop.f32.mrf.mxu0
        %v1914 = vadd.f32 %v1264, %v1913
        %v1915 = vpop.f32.mrf.mxu0
        %v1916 = vpop.f32.mrf.mxu0
        %v1917 = vadd.f32 %v1269, %v1916
        %v1918 = vpop.f32.mrf.mxu0
        %1919 = vmatprep.mubr.bf16.mxu0 %v1688
        %1920 = vmatmul.mubr.bf16.gmra.mxu0 %v1687
        %v1921 = vpop.f32.mrf.mxu0
        %v1922 = vadd.f32 %v1274, %v1921
        %v1923 = vpop.f32.mrf.mxu0
        %v1924 = vpop.f32.mrf.mxu0
        %v1925 = vadd.f32 %v1279, %v1924
        %v1926 = vpop.f32.mrf.mxu0
        %1927 = vmatprep.mubr.bf16.mxu0 %v1690
        %1928 = vmatmul.mubr.bf16.gmra.mxu0 %v1689
        %v1929 = vpop.f32.mrf.mxu0
        %v1930 = vadd.f32 %v1284, %v1929
        %v1931 = vpop.f32.mrf.mxu0
        %v1932 = vpop.f32.mrf.mxu0
        %v1933 = vadd.f32 %v1289, %v1932
        %v1934 = vpop.f32.mrf.mxu0
        %1935 = vmatprep.mubr.bf16.mxu0 %v1692
        %1936 = vmatmul.mubr.bf16.gmra.mxu0 %v1691
        %v1937 = vpop.f32.mrf.mxu0
        %v1938 = vadd.f32 %v1294, %v1937
        %v1939 = vpop.f32.mrf.mxu0
        %v1940 = vpop.f32.mrf.mxu0
        %v1941 = vadd.f32 %v1299, %v1940
        %v1942 = vpop.f32.mrf.mxu0
        %1943 = vmatprep.mubr.bf16.mxu0 %v1694
        %1944 = vmatmul.mubr.bf16.gmra.mxu0 %v1693
        %v1945 = vpop.f32.mrf.mxu0
        %v1946 = vadd.f32 %v1304, %v1945
        %v1947 = vpop.f32.mrf.mxu0
        %v1948 = vpop.f32.mrf.mxu0
        %v1949 = vadd.f32 %v1309, %v1948
        %v1950 = vpop.f32.mrf.mxu0
        %1951 = vmatprep.mubr.bf16.mxu0 %v1696
        %1952 = vmatmul.mubr.bf16.gmra.mxu0 %v1695
        %v1953 = vpop.f32.mrf.mxu0
        %v1954 = vadd.f32 %v1314, %v1953
        %v1955 = vpop.f32.mrf.mxu0
        %v1956 = vpop.f32.mrf.mxu0
        %v1957 = vadd.f32 %v1319, %v1956
        %v1958 = vpop.f32.mrf.mxu0
        %1959 = vmatprep.mubr.bf16.mxu0 %v1698
        %1960 = vmatmul.mubr.bf16.gmra.mxu0 %v1697
        %v1961 = vpop.f32.mrf.mxu0
        %v1962 = vadd.f32 %v1324, %v1961
        %v1963 = vpop.f32.mrf.mxu0
        %v1964 = vpop.f32.mrf.mxu0
        %v1965 = vadd.f32 %v1329, %v1964
        %v1966 = vpop.f32.mrf.mxu0
        %1967 = vmatprep.mubr.bf16.mxu0 %v1700
        %1968 = vmatmul.mubr.bf16.gmra.mxu0 %v1699
        %v1969 = vpop.f32.mrf.mxu0
        %v1970 = vadd.f32 %v1334, %v1969
        %v1971 = vpop.f32.mrf.mxu0
        %v1972 = vpop.f32.mrf.mxu0
        %v1973 = vadd.f32 %v1339, %v1972
        %v1974 = vpop.f32.mrf.mxu0
        %1975 = vmatprep.mubr.bf16.mxu0 %v1702
        %1976 = vmatmul.mubr.bf16.gmra.mxu0 %v1701
        %v1977 = vpop.f32.mrf.mxu0
        %v1978 = vadd.f32 %v1344, %v1977
        %v1979 = vpop.f32.mrf.mxu0
        %v1980 = vpop.f32.mrf.mxu0
        %v1981 = vadd.f32 %v1349, %v1980
        %v1982 = vpop.f32.mrf.mxu0
        %1983 = vmatprep.mubr.bf16.mxu0 %v1704
        %1984 = vmatmul.mubr.bf16.gmra.mxu0 %v1703
        %v1985 = vpop.f32.mrf.mxu0
        %v1986 = vadd.f32 %v1354, %v1985
        %v1987 = vpop.f32.mrf.mxu0
        %v1988 = vpop.f32.mrf.mxu0
        %v1989 = vadd.f32 %v1359, %v1988
        %v1990 = vpop.f32.mrf.mxu0
        %1991 = vmatprep.mubr.bf16.mxu0 %v1706
        %1992 = vmatmul.mubr.bf16.gmra.mxu0 %v1705
        %v1993 = vpop.f32.mrf.mxu0
        %v1994 = vadd.f32 %v1364, %v1993
        %v1995 = vpop.f32.mrf.mxu0
        %v1996 = vpop.f32.mrf.mxu0
        %v1997 = vadd.f32 %v1369, %v1996
        %v1998 = vpop.f32.mrf.mxu0
        %1999 = vmatprep.mubr.bf16.mxu0 %v1708
        %2000 = vmatmul.mubr.bf16.gmra.mxu0 %v1707
        %v2001 = vpop.f32.mrf.mxu0
        %v2002 = vadd.f32 %v1374, %v2001
        %v2003 = vpop.f32.mrf.mxu0
        %v2004 = vpop.f32.mrf.mxu0
        %v2005 = vadd.f32 %v1379, %v2004
        %v2006 = vpop.f32.mrf.mxu0
        %2007 = vmatprep.mubr.bf16.mxu0 %v1710
        %2008 = vmatmul.mubr.bf16.gmra.mxu0 %v1709
        %v2009 = vpop.f32.mrf.mxu0
        %v2010 = vadd.f32 %v1384, %v2009
        %v2011 = vpop.f32.mrf.mxu0
        %v2012 = vpop.f32.mrf.mxu0
        %v2013 = vadd.f32 %v1389, %v2012
        %v2014 = vpop.f32.mrf.mxu0
        %2015 = vmatprep.mubr.bf16.mxu0 %v1712
        %2016 = vmatmul.mubr.bf16.gmra.mxu0 %v1711
        %v2017 = vpop.f32.mrf.mxu0
        %v2018 = vadd.f32 %v1394, %v2017
        %v2019 = vpop.f32.mrf.mxu0
        %v2020 = vpop.f32.mrf.mxu0
        %v2021 = vadd.f32 %v1399, %v2020
        %v2022 = vpop.f32.mrf.mxu0
        %2023 = vmatprep.mubr.bf16.mxu0 %v1714
        %2024 = vmatmul.mubr.bf16.gmra.mxu0 %v1713
        %v2025 = vpop.f32.mrf.mxu0
        %v2026 = vadd.f32 %v1404, %v2025
        %v2027 = vpop.f32.mrf.mxu0
        %v2028 = vpop.f32.mrf.mxu0
        %v2029 = vadd.f32 %v1409, %v2028
        %v2030 = vpop.f32.mrf.mxu0
        %2031 = vmatprep.mubr.bf16.mxu0 %v1716
        %2032 = vmatmul.mubr.bf16.gmra.mxu0 %v1715
        %v2033 = vpop.f32.mrf.mxu0
        %v2034 = vadd.f32 %v1414, %v2033
        %v2035 = vpop.f32.mrf.mxu0
        %v2036 = vpop.f32.mrf.mxu0
        %v2037 = vadd.f32 %v1419, %v2036
        %v2038 = vpop.f32.mrf.mxu0
        %2039 = vmatprep.mubr.bf16.mxu0 %v1718
        %2040 = vmatmul.mubr.bf16.gmra.mxu0 %v1717
        %v2041 = vpop.f32.mrf.mxu0
        %v2042 = vadd.f32 %v1424, %v2041
        %v2043 = vpop.f32.mrf.mxu0
        %v2044 = vpop.f32.mrf.mxu0
        %v2045 = vadd.f32 %v1429, %v2044
        %v2046 = vpop.f32.mrf.mxu0
        %2047 = vmatprep.mubr.bf16.mxu0 %v1720
        %2048 = vmatmul.mubr.bf16.gmra.mxu0 %v1719
        %v2049 = vpop.f32.mrf.mxu0
        %v2050 = vadd.f32 %v1434, %v2049
        %v2051 = vpop.f32.mrf.mxu0
        %v2052 = vpop.f32.mrf.mxu0
        %v2053 = vadd.f32 %v1439, %v2052
        %v2054 = vpop.f32.mrf.mxu0
        %2055 = vmatprep.mubr.bf16.mxu0 %v1722
        %2056 = vmatmul.mubr.bf16.gmra.mxu0 %v1721
        %v2057 = vpop.f32.mrf.mxu0
        %v2058 = vadd.f32 %v1444, %v2057
        %v2059 = vpop.f32.mrf.mxu0
        %v2060 = vpop.f32.mrf.mxu0
        %v2061 = vadd.f32 %v1449, %v2060
        %v2062 = vpop.f32.mrf.mxu0
        %2063 = vmatprep.mubr.bf16.mxu0 %v1724
        %2064 = vmatmul.mubr.bf16.gmra.mxu0 %v1723
        %v2065 = vpop.f32.mrf.mxu0
        %v2066 = vadd.f32 %v1454, %v2065
        %v2067 = vpop.f32.mrf.mxu0
        %v2068 = vpop.f32.mrf.mxu0
        %v2069 = vadd.f32 %v1459, %v2068
        %v2070 = vpop.f32.mrf.mxu0
        %2071 = vmatprep.mubr.bf16.mxu0 %v1726
        %2072 = vmatmul.mubr.bf16.gmra.mxu0 %v1725
        %v2073 = vpop.f32.mrf.mxu0
        %v2074 = vadd.f32 %v1464, %v2073
        %v2075 = vpop.f32.mrf.mxu0
        %v2076 = vpop.f32.mrf.mxu0
        %v2077 = vadd.f32 %v1469, %v2076
        %v2078 = vpop.f32.mrf.mxu0
        %2079 = vdwg.mxu0
        %v2080 = vmax.f32 %v1826, 0.0
        %v2081 = vmax.f32 %v1829, 0.0
        %v2082 = vmax.f32 %v1834, 0.0
        %v2083 = vmax.f32 %v1837, 0.0
        %v2084 = vmax.f32 %v1842, 0.0
        %v2085 = vmax.f32 %v1845, 0.0
        %v2086 = vmax.f32 %v1850, 0.0
        %v2087 = vmax.f32 %v1853, 0.0
        %v2088 = vmax.f32 %v1858, 0.0
        %v2089 = vmax.f32 %v1861, 0.0
        %v2090 = vmax.f32 %v1866, 0.0
        %v2091 = vmax.f32 %v1869, 0.0
        %v2092 = vmax.f32 %v1874, 0.0
        %v2093 = vmax.f32 %v1877, 0.0
        %v2094 = vmax.f32 %v1882, 0.0
        %v2095 = vmax.f32 %v1885, 0.0
        %v2096 = vmax.f32 %v1890, 0.0
        %v2097 = vmax.f32 %v1893, 0.0
        %v2098 = vmax.f32 %v1898, 0.0
        %v2099 = vmax.f32 %v1901, 0.0
        %v2100 = vmax.f32 %v1906, 0.0
        %v2101 = vmax.f32 %v1909, 0.0
        %v2102 = vmax.f32 %v1914, 0.0
        %v2103 = vmax.f32 %v1917, 0.0
        %v2104 = vmax.f32 %v1922, 0.0
        %v2105 = vmax.f32 %v1925, 0.0
        %v2106 = vmax.f32 %v1930, 0.0
        %v2107 = vmax.f32 %v1933, 0.0
        %v2108 = vmax.f32 %v1938, 0.0
        %v2109 = vmax.f32 %v1941, 0.0
        %v2110 = vmax.f32 %v1946, 0.0
        %v2111 = vmax.f32 %v1949, 0.0
        %v2112 = vmax.f32 %v1954, 0.0
        %v2113 = vmax.f32 %v1957, 0.0
        %v2114 = vmax.f32 %v1962, 0.0
        %v2115 = vmax.f32 %v1965, 0.0
        %v2116 = vmax.f32 %v1970, 0.0
        %v2117 = vmax.f32 %v1973, 0.0
        %v2118 = vmax.f32 %v1978, 0.0
        %v2119 = vmax.f32 %v1981, 0.0
        %v2120 = vmax.f32 %v1986, 0.0
        %v2121 = vmax.f32 %v1989, 0.0
        %v2122 = vmax.f32 %v1994, 0.0
        %v2123 = vmax.f32 %v1997, 0.0
        %v2124 = vmax.f32 %v2002, 0.0
        %v2125 = vmax.f32 %v2005, 0.0
        %v2126 = vmax.f32 %v2010, 0.0
        %v2127 = vmax.f32 %v2013, 0.0
        %v2128 = vmax.f32 %v2018, 0.0
        %v2129 = vmax.f32 %v2021, 0.0
        %v2130 = vmax.f32 %v2026, 0.0
        %v2131 = vmax.f32 %v2029, 0.0
        %v2132 = vmax.f32 %v2034, 0.0
        %v2133 = vmax.f32 %v2037, 0.0
        %v2134 = vmax.f32 %v2042, 0.0
        %v2135 = vmax.f32 %v2045, 0.0
        %v2136 = vmax.f32 %v2050, 0.0
        %v2137 = vmax.f32 %v2053, 0.0
        %v2138 = vmax.f32 %v2058, 0.0
        %v2139 = vmax.f32 %v2061, 0.0
        %v2140 = vmax.f32 %v2066, 0.0
        %v2141 = vmax.f32 %v2069, 0.0
        %v2142 = vmax.f32 %v2074, 0.0
        %v2143 = vmax.f32 %v2077, 0.0
        %v2144 = vpack.c.bf16 %v2081, %v2080
        %v2145 = vpack.c.bf16 %v2083, %v2082
        %v2146 = vpack.c.bf16 %v2085, %v2084
        %v2147 = vpack.c.bf16 %v2087, %v2086
        %v2148 = vpack.c.bf16 %v2089, %v2088
        %v2149 = vpack.c.bf16 %v2091, %v2090
        %v2150 = vpack.c.bf16 %v2093, %v2092
        %v2151 = vpack.c.bf16 %v2095, %v2094
        %v2152 = vpack.c.bf16 %v2097, %v2096
        %v2153 = vpack.c.bf16 %v2099, %v2098
        %v2154 = vpack.c.bf16 %v2101, %v2100
        %v2155 = vpack.c.bf16 %v2103, %v2102
        %v2156 = vpack.c.bf16 %v2105, %v2104
        %v2157 = vpack.c.bf16 %v2107, %v2106
        %v2158 = vpack.c.bf16 %v2109, %v2108
        %v2159 = vpack.c.bf16 %v2111, %v2110
        %v2160 = vpack.c.bf16 %v2113, %v2112
        %v2161 = vpack.c.bf16 %v2115, %v2114
        %v2162 = vpack.c.bf16 %v2117, %v2116
        %v2163 = vpack.c.bf16 %v2119, %v2118
        %v2164 = vpack.c.bf16 %v2121, %v2120
        %v2165 = vpack.c.bf16 %v2123, %v2122
        %v2166 = vpack.c.bf16 %v2125, %v2124
        %v2167 = vpack.c.bf16 %v2127, %v2126
        %v2168 = vpack.c.bf16 %v2129, %v2128
        %v2169 = vpack.c.bf16 %v2131, %v2130
        %v2170 = vpack.c.bf16 %v2133, %v2132
        %v2171 = vpack.c.bf16 %v2135, %v2134
        %v2172 = vpack.c.bf16 %v2137, %v2136
        %v2173 = vpack.c.bf16 %v2139, %v2138
        %v2174 = vpack.c.bf16 %v2141, %v2140
        %v2175 = vpack.c.bf16 %v2143, %v2142
        %v2176 = vld [vmem:[#allocation2] sm:$0xff]
        %v2177 = vld [vmem:[#allocation2 + $0x8] sm:$0xff]
        %v2178 = vld [vmem:[#allocation2 + $0x10] sm:$0xff]
        %v2179 = vld [vmem:[#allocation2 + $0x18] sm:$0xff]
        %v2180 = vld [vmem:[#allocation2 + $0x20] sm:$0xff]
        %v2181 = vld [vmem:[#allocation2 + $0x28] sm:$0xff]
        %v2182 = vld [vmem:[#allocation2 + $0x30] sm:$0xff]
        %v2183 = vld [vmem:[#allocation2 + $0x38] sm:$0xff]
        %v2184 = vld [vmem:[#allocation2 + $0x40] sm:$0xff]
        %v2185 = vld [vmem:[#allocation2 + $0x48] sm:$0xff]
        %v2186 = vld [vmem:[#allocation2 + $0x50] sm:$0xff]
        %v2187 = vld [vmem:[#allocation2 + $0x58] sm:$0xff]
        %v2188 = vld [vmem:[#allocation2 + $0x60] sm:$0xff]
        %v2189 = vld [vmem:[#allocation2 + $0x68] sm:$0xff]
        %v2190 = vld [vmem:[#allocation2 + $0x70] sm:$0xff]
        %v2191 = vld [vmem:[#allocation2 + $0x78] sm:$0xff]
        %v2192 = vld [vmem:[#allocation2 + $0x80] sm:$0xff]
        %v2193 = vld [vmem:[#allocation2 + $0x88] sm:$0xff]
        %v2194 = vld [vmem:[#allocation2 + $0x90] sm:$0xff]
        %v2195 = vld [vmem:[#allocation2 + $0x98] sm:$0xff]
        %v2196 = vld [vmem:[#allocation2 + $0xa0] sm:$0xff]
        %v2197 = vld [vmem:[#allocation2 + $0xa8] sm:$0xff]
        %v2198 = vld [vmem:[#allocation2 + $0xb0] sm:$0xff]
        %v2199 = vld [vmem:[#allocation2 + $0xb8] sm:$0xff]
        %v2200 = vld [vmem:[#allocation2 + $0xc0] sm:$0xff]
        %v2201 = vld [vmem:[#allocation2 + $0xc8] sm:$0xff]
        %v2202 = vld [vmem:[#allocation2 + $0xd0] sm:$0xff]
        %v2203 = vld [vmem:[#allocation2 + $0xd8] sm:$0xff]
        %v2204 = vld [vmem:[#allocation2 + $0xe0] sm:$0xff]
        %v2205 = vld [vmem:[#allocation2 + $0xe8] sm:$0xff]
        %v2206 = vld [vmem:[#allocation2 + $0xf0] sm:$0xff]
        %v2207 = vld [vmem:[#allocation2 + $0xf8] sm:$0xff]
        %v2208 = vld [vmem:[#allocation2 + $0x100] sm:$0xff]
        %v2209 = vld [vmem:[#allocation2 + $0x108] sm:$0xff]
        %v2210 = vld [vmem:[#allocation2 + $0x110] sm:$0xff]
        %v2211 = vld [vmem:[#allocation2 + $0x118] sm:$0xff]
        %v2212 = vld [vmem:[#allocation2 + $0x120] sm:$0xff]
        %v2213 = vld [vmem:[#allocation2 + $0x128] sm:$0xff]
        %v2214 = vld [vmem:[#allocation2 + $0x130] sm:$0xff]
        %v2215 = vld [vmem:[#allocation2 + $0x138] sm:$0xff]
        %v2216 = vld [vmem:[#allocation2 + $0x140] sm:$0xff]
        %v2217 = vld [vmem:[#allocation2 + $0x148] sm:$0xff]
        %v2218 = vld [vmem:[#allocation2 + $0x150] sm:$0xff]
        %v2219 = vld [vmem:[#allocation2 + $0x158] sm:$0xff]
        %v2220 = vld [vmem:[#allocation2 + $0x160] sm:$0xff]
        %v2221 = vld [vmem:[#allocation2 + $0x168] sm:$0xff]
        %v2222 = vld [vmem:[#allocation2 + $0x170] sm:$0xff]
        %v2223 = vld [vmem:[#allocation2 + $0x178] sm:$0xff]
        %v2224 = vld [vmem:[#allocation2 + $0x180] sm:$0xff]
        %v2225 = vld [vmem:[#allocation2 + $0x188] sm:$0xff]
        %v2226 = vld [vmem:[#allocation2 + $0x190] sm:$0xff]
        %v2227 = vld [vmem:[#allocation2 + $0x198] sm:$0xff]
        %v2228 = vld [vmem:[#allocation2 + $0x1a0] sm:$0xff]
        %v2229 = vld [vmem:[#allocation2 + $0x1a8] sm:$0xff]
        %v2230 = vld [vmem:[#allocation2 + $0x1b0] sm:$0xff]
        %v2231 = vld [vmem:[#allocation2 + $0x1b8] sm:$0xff]
        %v2232 = vld [vmem:[#allocation2 + $0x1c0] sm:$0xff]
        %v2233 = vld [vmem:[#allocation2 + $0x1c8] sm:$0xff]
        %v2234 = vld [vmem:[#allocation2 + $0x1d0] sm:$0xff]
        %v2235 = vld [vmem:[#allocation2 + $0x1d8] sm:$0xff]
        %v2236 = vld [vmem:[#allocation2 + $0x1e0] sm:$0xff]
        %v2237 = vld [vmem:[#allocation2 + $0x1e8] sm:$0xff]
        %v2238 = vld [vmem:[#allocation2 + $0x1f0] sm:$0xff]
        %v2239 = vld [vmem:[#allocation2 + $0x1f8] sm:$0xff]
        %v2240 = vld [vmem:[#allocation2 + $0x200] sm:$0xff]
        %v2241 = vld [vmem:[#allocation2 + $0x208] sm:$0xff]
        %v2242 = vld [vmem:[#allocation2 + $0x210] sm:$0xff]
        %v2243 = vld [vmem:[#allocation2 + $0x218] sm:$0xff]
        %v2244 = vld [vmem:[#allocation2 + $0x220] sm:$0xff]
        %v2245 = vld [vmem:[#allocation2 + $0x228] sm:$0xff]
        %v2246 = vld [vmem:[#allocation2 + $0x230] sm:$0xff]
        %v2247 = vld [vmem:[#allocation2 + $0x238] sm:$0xff]
        %v2248 = vld [vmem:[#allocation2 + $0x240] sm:$0xff]
        %v2249 = vld [vmem:[#allocation2 + $0x248] sm:$0xff]
        %v2250 = vld [vmem:[#allocation2 + $0x250] sm:$0xff]
        %v2251 = vld [vmem:[#allocation2 + $0x258] sm:$0xff]
        %v2252 = vld [vmem:[#allocation2 + $0x260] sm:$0xff]
        %v2253 = vld [vmem:[#allocation2 + $0x268] sm:$0xff]
        %v2254 = vld [vmem:[#allocation2 + $0x270] sm:$0xff]
        %v2255 = vld [vmem:[#allocation2 + $0x278] sm:$0xff]
        %v2256 = vld [vmem:[#allocation2 + $0x280] sm:$0xff]
        %v2257 = vld [vmem:[#allocation2 + $0x288] sm:$0xff]
        %v2258 = vld [vmem:[#allocation2 + $0x290] sm:$0xff]
        %v2259 = vld [vmem:[#allocation2 + $0x298] sm:$0xff]
        %v2260 = vld [vmem:[#allocation2 + $0x2a0] sm:$0xff]
        %v2261 = vld [vmem:[#allocation2 + $0x2a8] sm:$0xff]
        %v2262 = vld [vmem:[#allocation2 + $0x2b0] sm:$0xff]
        %v2263 = vld [vmem:[#allocation2 + $0x2b8] sm:$0xff]
        %v2264 = vld [vmem:[#allocation2 + $0x2c0] sm:$0xff]
        %v2265 = vld [vmem:[#allocation2 + $0x2c8] sm:$0xff]
        %v2266 = vld [vmem:[#allocation2 + $0x2d0] sm:$0xff]
        %v2267 = vld [vmem:[#allocation2 + $0x2d8] sm:$0xff]
        %v2268 = vld [vmem:[#allocation2 + $0x2e0] sm:$0xff]
        %v2269 = vld [vmem:[#allocation2 + $0x2e8] sm:$0xff]
        %v2270 = vld [vmem:[#allocation2 + $0x2f0] sm:$0xff]
        %v2271 = vld [vmem:[#allocation2 + $0x2f8] sm:$0xff]
        %v2272 = vld [vmem:[#allocation2 + $0x300] sm:$0xff]
        %v2273 = vld [vmem:[#allocation2 + $0x308] sm:$0xff]
        %v2274 = vld [vmem:[#allocation2 + $0x310] sm:$0xff]
        %v2275 = vld [vmem:[#allocation2 + $0x318] sm:$0xff]
        %v2276 = vld [vmem:[#allocation2 + $0x320] sm:$0xff]
        %v2277 = vld [vmem:[#allocation2 + $0x328] sm:$0xff]
        %v2278 = vld [vmem:[#allocation2 + $0x330] sm:$0xff]
        %v2279 = vld [vmem:[#allocation2 + $0x338] sm:$0xff]
        %v2280 = vld [vmem:[#allocation2 + $0x340] sm:$0xff]
        %v2281 = vld [vmem:[#allocation2 + $0x348] sm:$0xff]
        %v2282 = vld [vmem:[#allocation2 + $0x350] sm:$0xff]
        %v2283 = vld [vmem:[#allocation2 + $0x358] sm:$0xff]
        %v2284 = vld [vmem:[#allocation2 + $0x360] sm:$0xff]
        %v2285 = vld [vmem:[#allocation2 + $0x368] sm:$0xff]
        %v2286 = vld [vmem:[#allocation2 + $0x370] sm:$0xff]
        %v2287 = vld [vmem:[#allocation2 + $0x378] sm:$0xff]
        %v2288 = vld [vmem:[#allocation2 + $0x380] sm:$0xff]
        %v2289 = vld [vmem:[#allocation2 + $0x388] sm:$0xff]
        %v2290 = vld [vmem:[#allocation2 + $0x390] sm:$0xff]
        %v2291 = vld [vmem:[#allocation2 + $0x398] sm:$0xff]
        %v2292 = vld [vmem:[#allocation2 + $0x3a0] sm:$0xff]
        %v2293 = vld [vmem:[#allocation2 + $0x3a8] sm:$0xff]
        %v2294 = vld [vmem:[#allocation2 + $0x3b0] sm:$0xff]
        %v2295 = vld [vmem:[#allocation2 + $0x3b8] sm:$0xff]
        %v2296 = vld [vmem:[#allocation2 + $0x3c0] sm:$0xff]
        %v2297 = vld [vmem:[#allocation2 + $0x3c8] sm:$0xff]
        %v2298 = vld [vmem:[#allocation2 + $0x3d0] sm:$0xff]
        %v2299 = vld [vmem:[#allocation2 + $0x3d8] sm:$0xff]
        %v2300 = vld [vmem:[#allocation2 + $0x3e0] sm:$0xff]
        %v2301 = vld [vmem:[#allocation2 + $0x3e8] sm:$0xff]
        %v2302 = vld [vmem:[#allocation2 + $0x3f0] sm:$0xff]
        %v2303 = vld [vmem:[#allocation2 + $0x3f8] sm:$0xff]
        %v2304 = vld [vmem:[#allocation2 + $0x400] sm:$0xff]
        %v2305 = vld [vmem:[#allocation2 + $0x408] sm:$0xff]
        %v2306 = vld [vmem:[#allocation2 + $0x410] sm:$0xff]
        %v2307 = vld [vmem:[#allocation2 + $0x418] sm:$0xff]
        %v2308 = vld [vmem:[#allocation2 + $0x420] sm:$0xff]
        %v2309 = vld [vmem:[#allocation2 + $0x428] sm:$0xff]
        %v2310 = vld [vmem:[#allocation2 + $0x430] sm:$0xff]
        %v2311 = vld [vmem:[#allocation2 + $0x438] sm:$0xff]
        %v2312 = vld [vmem:[#allocation2 + $0x440] sm:$0xff]
        %v2313 = vld [vmem:[#allocation2 + $0x448] sm:$0xff]
        %v2314 = vld [vmem:[#allocation2 + $0x450] sm:$0xff]
        %v2315 = vld [vmem:[#allocation2 + $0x458] sm:$0xff]
        %v2316 = vld [vmem:[#allocation2 + $0x460] sm:$0xff]
        %v2317 = vld [vmem:[#allocation2 + $0x468] sm:$0xff]
        %v2318 = vld [vmem:[#allocation2 + $0x470] sm:$0xff]
        %v2319 = vld [vmem:[#allocation2 + $0x478] sm:$0xff]
        %v2320 = vld [vmem:[#allocation2 + $0x480] sm:$0xff]
        %v2321 = vld [vmem:[#allocation2 + $0x488] sm:$0xff]
        %v2322 = vld [vmem:[#allocation2 + $0x490] sm:$0xff]
        %v2323 = vld [vmem:[#allocation2 + $0x498] sm:$0xff]
        %v2324 = vld [vmem:[#allocation2 + $0x4a0] sm:$0xff]
        %v2325 = vld [vmem:[#allocation2 + $0x4a8] sm:$0xff]
        %v2326 = vld [vmem:[#allocation2 + $0x4b0] sm:$0xff]
        %v2327 = vld [vmem:[#allocation2 + $0x4b8] sm:$0xff]
        %v2328 = vld [vmem:[#allocation2 + $0x4c0] sm:$0xff]
        %v2329 = vld [vmem:[#allocation2 + $0x4c8] sm:$0xff]
        %v2330 = vld [vmem:[#allocation2 + $0x4d0] sm:$0xff]
        %v2331 = vld [vmem:[#allocation2 + $0x4d8] sm:$0xff]
        %v2332 = vld [vmem:[#allocation2 + $0x4e0] sm:$0xff]
        %v2333 = vld [vmem:[#allocation2 + $0x4e8] sm:$0xff]
        %v2334 = vld [vmem:[#allocation2 + $0x4f0] sm:$0xff]
        %v2335 = vld [vmem:[#allocation2 + $0x4f8] sm:$0xff]
        %v2336 = vld [vmem:[#allocation2 + $0x500] sm:$0xff]
        %v2337 = vld [vmem:[#allocation2 + $0x508] sm:$0xff]
        %v2338 = vld [vmem:[#allocation2 + $0x510] sm:$0xff]
        %v2339 = vld [vmem:[#allocation2 + $0x518] sm:$0xff]
        %v2340 = vld [vmem:[#allocation2 + $0x520] sm:$0xff]
        %v2341 = vld [vmem:[#allocation2 + $0x528] sm:$0xff]
        %v2342 = vld [vmem:[#allocation2 + $0x530] sm:$0xff]
        %v2343 = vld [vmem:[#allocation2 + $0x538] sm:$0xff]
        %v2344 = vld [vmem:[#allocation2 + $0x540] sm:$0xff]
        %v2345 = vld [vmem:[#allocation2 + $0x548] sm:$0xff]
        %v2346 = vld [vmem:[#allocation2 + $0x550] sm:$0xff]
        %v2347 = vld [vmem:[#allocation2 + $0x558] sm:$0xff]
        %v2348 = vld [vmem:[#allocation2 + $0x560] sm:$0xff]
        %v2349 = vld [vmem:[#allocation2 + $0x568] sm:$0xff]
        %v2350 = vld [vmem:[#allocation2 + $0x570] sm:$0xff]
        %v2351 = vld [vmem:[#allocation2 + $0x578] sm:$0xff]
        %v2352 = vld [vmem:[#allocation2 + $0x580] sm:$0xff]
        %v2353 = vld [vmem:[#allocation2 + $0x588] sm:$0xff]
        %v2354 = vld [vmem:[#allocation2 + $0x590] sm:$0xff]
        %v2355 = vld [vmem:[#allocation2 + $0x598] sm:$0xff]
        %v2356 = vld [vmem:[#allocation2 + $0x5a0] sm:$0xff]
        %v2357 = vld [vmem:[#allocation2 + $0x5a8] sm:$0xff]
        %v2358 = vld [vmem:[#allocation2 + $0x5b0] sm:$0xff]
        %v2359 = vld [vmem:[#allocation2 + $0x5b8] sm:$0xff]
        %v2360 = vld [vmem:[#allocation2 + $0x5c0] sm:$0xff]
        %v2361 = vld [vmem:[#allocation2 + $0x5c8] sm:$0xff]
        %v2362 = vld [vmem:[#allocation2 + $0x5d0] sm:$0xff]
        %v2363 = vld [vmem:[#allocation2 + $0x5d8] sm:$0xff]
        %v2364 = vld [vmem:[#allocation2 + $0x5e0] sm:$0xff]
        %v2365 = vld [vmem:[#allocation2 + $0x5e8] sm:$0xff]
        %v2366 = vld [vmem:[#allocation2 + $0x5f0] sm:$0xff]
        %v2367 = vld [vmem:[#allocation2 + $0x5f8] sm:$0xff]
        %v2368 = vld [vmem:[#allocation2 + $0x600] sm:$0xff]
        %v2369 = vld [vmem:[#allocation2 + $0x608] sm:$0xff]
        %v2370 = vld [vmem:[#allocation2 + $0x610] sm:$0xff]
        %v2371 = vld [vmem:[#allocation2 + $0x618] sm:$0xff]
        %v2372 = vld [vmem:[#allocation2 + $0x620] sm:$0xff]
        %v2373 = vld [vmem:[#allocation2 + $0x628] sm:$0xff]
        %v2374 = vld [vmem:[#allocation2 + $0x630] sm:$0xff]
        %v2375 = vld [vmem:[#allocation2 + $0x638] sm:$0xff]
        %v2376 = vld [vmem:[#allocation2 + $0x640] sm:$0xff]
        %v2377 = vld [vmem:[#allocation2 + $0x648] sm:$0xff]
        %v2378 = vld [vmem:[#allocation2 + $0x650] sm:$0xff]
        %v2379 = vld [vmem:[#allocation2 + $0x658] sm:$0xff]
        %v2380 = vld [vmem:[#allocation2 + $0x660] sm:$0xff]
        %v2381 = vld [vmem:[#allocation2 + $0x668] sm:$0xff]
        %v2382 = vld [vmem:[#allocation2 + $0x670] sm:$0xff]
        %v2383 = vld [vmem:[#allocation2 + $0x678] sm:$0xff]
        %v2384 = vld [vmem:[#allocation2 + $0x680] sm:$0xff]
        %v2385 = vld [vmem:[#allocation2 + $0x688] sm:$0xff]
        %v2386 = vld [vmem:[#allocation2 + $0x690] sm:$0xff]
        %v2387 = vld [vmem:[#allocation2 + $0x698] sm:$0xff]
        %v2388 = vld [vmem:[#allocation2 + $0x6a0] sm:$0xff]
        %v2389 = vld [vmem:[#allocation2 + $0x6a8] sm:$0xff]
        %v2390 = vld [vmem:[#allocation2 + $0x6b0] sm:$0xff]
        %v2391 = vld [vmem:[#allocation2 + $0x6b8] sm:$0xff]
        %v2392 = vld [vmem:[#allocation2 + $0x6c0] sm:$0xff]
        %v2393 = vld [vmem:[#allocation2 + $0x6c8] sm:$0xff]
        %v2394 = vld [vmem:[#allocation2 + $0x6d0] sm:$0xff]
        %v2395 = vld [vmem:[#allocation2 + $0x6d8] sm:$0xff]
        %v2396 = vld [vmem:[#allocation2 + $0x6e0] sm:$0xff]
        %v2397 = vld [vmem:[#allocation2 + $0x6e8] sm:$0xff]
        %v2398 = vld [vmem:[#allocation2 + $0x6f0] sm:$0xff]
        %v2399 = vld [vmem:[#allocation2 + $0x6f8] sm:$0xff]
        %v2400 = vld [vmem:[#allocation2 + $0x700] sm:$0xff]
        %v2401 = vld [vmem:[#allocation2 + $0x708] sm:$0xff]
        %v2402 = vld [vmem:[#allocation2 + $0x710] sm:$0xff]
        %v2403 = vld [vmem:[#allocation2 + $0x718] sm:$0xff]
        %v2404 = vld [vmem:[#allocation2 + $0x720] sm:$0xff]
        %v2405 = vld [vmem:[#allocation2 + $0x728] sm:$0xff]
        %v2406 = vld [vmem:[#allocation2 + $0x730] sm:$0xff]
        %v2407 = vld [vmem:[#allocation2 + $0x738] sm:$0xff]
        %v2408 = vld [vmem:[#allocation2 + $0x740] sm:$0xff]
        %v2409 = vld [vmem:[#allocation2 + $0x748] sm:$0xff]
        %v2410 = vld [vmem:[#allocation2 + $0x750] sm:$0xff]
        %v2411 = vld [vmem:[#allocation2 + $0x758] sm:$0xff]
        %v2412 = vld [vmem:[#allocation2 + $0x760] sm:$0xff]
        %v2413 = vld [vmem:[#allocation2 + $0x768] sm:$0xff]
        %v2414 = vld [vmem:[#allocation2 + $0x770] sm:$0xff]
        %v2415 = vld [vmem:[#allocation2 + $0x778] sm:$0xff]
        %v2416 = vld [vmem:[#allocation2 + $0x780] sm:$0xff]
        %v2417 = vld [vmem:[#allocation2 + $0x788] sm:$0xff]
        %v2418 = vld [vmem:[#allocation2 + $0x790] sm:$0xff]
        %v2419 = vld [vmem:[#allocation2 + $0x798] sm:$0xff]
        %v2420 = vld [vmem:[#allocation2 + $0x7a0] sm:$0xff]
        %v2421 = vld [vmem:[#allocation2 + $0x7a8] sm:$0xff]
        %v2422 = vld [vmem:[#allocation2 + $0x7b0] sm:$0xff]
        %v2423 = vld [vmem:[#allocation2 + $0x7b8] sm:$0xff]
        %v2424 = vld [vmem:[#allocation2 + $0x7c0] sm:$0xff]
        %v2425 = vld [vmem:[#allocation2 + $0x7c8] sm:$0xff]
        %v2426 = vld [vmem:[#allocation2 + $0x7d0] sm:$0xff]
        %v2427 = vld [vmem:[#allocation2 + $0x7d8] sm:$0xff]
        %v2428 = vld [vmem:[#allocation2 + $0x7e0] sm:$0xff]
        %v2429 = vld [vmem:[#allocation2 + $0x7e8] sm:$0xff]
        %v2430 = vld [vmem:[#allocation2 + $0x7f0] sm:$0xff]
        %v2431 = vld [vmem:[#allocation2 + $0x7f8] sm:$0xff]
        %v2432 = vld [vmem:[%s7] sm:$0xff]
        %v2433 = vld [vmem:[%s7 + $0x8] sm:$0xff]
        %v2434 = vld [vmem:[%s7 + $0x10] sm:$0xff]
        %v2435 = vld [vmem:[%s7 + $0x18] sm:$0xff]
        %v2436 = vld [vmem:[%s7 + $0x20] sm:$0xff]
        %v2437 = vld [vmem:[%s7 + $0x28] sm:$0xff]
        %v2438 = vld [vmem:[%s7 + $0x30] sm:$0xff]
        %v2439 = vld [vmem:[%s7 + $0x38] sm:$0xff]
        %v2440 = vld [vmem:[%s7 + $0x40] sm:$0xff]
        %v2441 = vld [vmem:[%s7 + $0x48] sm:$0xff]
        %v2442 = vld [vmem:[%s7 + $0x50] sm:$0xff]
        %v2443 = vld [vmem:[%s7 + $0x58] sm:$0xff]
        %v2444 = vld [vmem:[%s7 + $0x60] sm:$0xff]
        %v2445 = vld [vmem:[%s7 + $0x68] sm:$0xff]
        %v2446 = vld [vmem:[%s7 + $0x70] sm:$0xff]
        %v2447 = vld [vmem:[%s7 + $0x78] sm:$0xff]
        %v2448 = vld [vmem:[%s7 + $0x80] sm:$0xff]
        %v2449 = vld [vmem:[%s7 + $0x88] sm:$0xff]
        %v2450 = vld [vmem:[%s7 + $0x90] sm:$0xff]
        %v2451 = vld [vmem:[%s7 + $0x98] sm:$0xff]
        %v2452 = vld [vmem:[%s7 + $0xa0] sm:$0xff]
        %v2453 = vld [vmem:[%s7 + $0xa8] sm:$0xff]
        %v2454 = vld [vmem:[%s7 + $0xb0] sm:$0xff]
        %v2455 = vld [vmem:[%s7 + $0xb8] sm:$0xff]
        %v2456 = vld [vmem:[%s7 + $0xc0] sm:$0xff]
        %v2457 = vld [vmem:[%s7 + $0xc8] sm:$0xff]
        %v2458 = vld [vmem:[%s7 + $0xd0] sm:$0xff]
        %v2459 = vld [vmem:[%s7 + $0xd8] sm:$0xff]
        %v2460 = vld [vmem:[%s7 + $0xe0] sm:$0xff]
        %v2461 = vld [vmem:[%s7 + $0xe8] sm:$0xff]
        %v2462 = vld [vmem:[%s7 + $0xf0] sm:$0xff]
        %v2463 = vld [vmem:[%s7 + $0xf8] sm:$0xff]
        %v2464 = vld [vmem:[%s7 + $0x100] sm:$0xff]
        %v2465 = vld [vmem:[%s7 + $0x108] sm:$0xff]
        %v2466 = vld [vmem:[%s7 + $0x110] sm:$0xff]
        %v2467 = vld [vmem:[%s7 + $0x118] sm:$0xff]
        %v2468 = vld [vmem:[%s7 + $0x120] sm:$0xff]
        %v2469 = vld [vmem:[%s7 + $0x128] sm:$0xff]
        %v2470 = vld [vmem:[%s7 + $0x130] sm:$0xff]
        %v2471 = vld [vmem:[%s7 + $0x138] sm:$0xff]
        %v2472 = vld [vmem:[%s7 + $0x140] sm:$0xff]
        %v2473 = vld [vmem:[%s7 + $0x148] sm:$0xff]
        %v2474 = vld [vmem:[%s7 + $0x150] sm:$0xff]
        %v2475 = vld [vmem:[%s7 + $0x158] sm:$0xff]
        %v2476 = vld [vmem:[%s7 + $0x160] sm:$0xff]
        %v2477 = vld [vmem:[%s7 + $0x168] sm:$0xff]
        %v2478 = vld [vmem:[%s7 + $0x170] sm:$0xff]
        %v2479 = vld [vmem:[%s7 + $0x178] sm:$0xff]
        %v2480 = vld [vmem:[%s7 + $0x180] sm:$0xff]
        %v2481 = vld [vmem:[%s7 + $0x188] sm:$0xff]
        %v2482 = vld [vmem:[%s7 + $0x190] sm:$0xff]
        %v2483 = vld [vmem:[%s7 + $0x198] sm:$0xff]
        %v2484 = vld [vmem:[%s7 + $0x1a0] sm:$0xff]
        %v2485 = vld [vmem:[%s7 + $0x1a8] sm:$0xff]
        %v2486 = vld [vmem:[%s7 + $0x1b0] sm:$0xff]
        %v2487 = vld [vmem:[%s7 + $0x1b8] sm:$0xff]
        %v2488 = vld [vmem:[%s7 + $0x1c0] sm:$0xff]
        %v2489 = vld [vmem:[%s7 + $0x1c8] sm:$0xff]
        %v2490 = vld [vmem:[%s7 + $0x1d0] sm:$0xff]
        %v2491 = vld [vmem:[%s7 + $0x1d8] sm:$0xff]
        %v2492 = vld [vmem:[%s7 + $0x1e0] sm:$0xff]
        %v2493 = vld [vmem:[%s7 + $0x1e8] sm:$0xff]
        %v2494 = vld [vmem:[%s7 + $0x1f0] sm:$0xff]
        %v2495 = vld [vmem:[%s7 + $0x1f8] sm:$0xff]
        %v2496 = vld [vmem:[%s7 + $0x200] sm:$0xff]
        %v2497 = vld [vmem:[%s7 + $0x208] sm:$0xff]
        %v2498 = vld [vmem:[%s7 + $0x210] sm:$0xff]
        %v2499 = vld [vmem:[%s7 + $0x218] sm:$0xff]
        %v2500 = vld [vmem:[%s7 + $0x220] sm:$0xff]
        %v2501 = vld [vmem:[%s7 + $0x228] sm:$0xff]
        %v2502 = vld [vmem:[%s7 + $0x230] sm:$0xff]
        %v2503 = vld [vmem:[%s7 + $0x238] sm:$0xff]
        %v2504 = vld [vmem:[%s7 + $0x240] sm:$0xff]
        %v2505 = vld [vmem:[%s7 + $0x248] sm:$0xff]
        %v2506 = vld [vmem:[%s7 + $0x250] sm:$0xff]
        %v2507 = vld [vmem:[%s7 + $0x258] sm:$0xff]
        %v2508 = vld [vmem:[%s7 + $0x260] sm:$0xff]
        %v2509 = vld [vmem:[%s7 + $0x268] sm:$0xff]
        %v2510 = vld [vmem:[%s7 + $0x270] sm:$0xff]
        %v2511 = vld [vmem:[%s7 + $0x278] sm:$0xff]
        %v2512 = vld [vmem:[%s7 + $0x280] sm:$0xff]
        %v2513 = vld [vmem:[%s7 + $0x288] sm:$0xff]
        %v2514 = vld [vmem:[%s7 + $0x290] sm:$0xff]
        %v2515 = vld [vmem:[%s7 + $0x298] sm:$0xff]
        %v2516 = vld [vmem:[%s7 + $0x2a0] sm:$0xff]
        %v2517 = vld [vmem:[%s7 + $0x2a8] sm:$0xff]
        %v2518 = vld [vmem:[%s7 + $0x2b0] sm:$0xff]
        %v2519 = vld [vmem:[%s7 + $0x2b8] sm:$0xff]
        %v2520 = vld [vmem:[%s7 + $0x2c0] sm:$0xff]
        %v2521 = vld [vmem:[%s7 + $0x2c8] sm:$0xff]
        %v2522 = vld [vmem:[%s7 + $0x2d0] sm:$0xff]
        %v2523 = vld [vmem:[%s7 + $0x2d8] sm:$0xff]
        %v2524 = vld [vmem:[%s7 + $0x2e0] sm:$0xff]
        %v2525 = vld [vmem:[%s7 + $0x2e8] sm:$0xff]
        %v2526 = vld [vmem:[%s7 + $0x2f0] sm:$0xff]
        %v2527 = vld [vmem:[%s7 + $0x2f8] sm:$0xff]
        %v2528 = vld [vmem:[%s7 + $0x300] sm:$0xff]
        %v2529 = vld [vmem:[%s7 + $0x308] sm:$0xff]
        %v2530 = vld [vmem:[%s7 + $0x310] sm:$0xff]
        %v2531 = vld [vmem:[%s7 + $0x318] sm:$0xff]
        %v2532 = vld [vmem:[%s7 + $0x320] sm:$0xff]
        %v2533 = vld [vmem:[%s7 + $0x328] sm:$0xff]
        %v2534 = vld [vmem:[%s7 + $0x330] sm:$0xff]
        %v2535 = vld [vmem:[%s7 + $0x338] sm:$0xff]
        %v2536 = vld [vmem:[%s7 + $0x340] sm:$0xff]
        %v2537 = vld [vmem:[%s7 + $0x348] sm:$0xff]
        %v2538 = vld [vmem:[%s7 + $0x350] sm:$0xff]
        %v2539 = vld [vmem:[%s7 + $0x358] sm:$0xff]
        %v2540 = vld [vmem:[%s7 + $0x360] sm:$0xff]
        %v2541 = vld [vmem:[%s7 + $0x368] sm:$0xff]
        %v2542 = vld [vmem:[%s7 + $0x370] sm:$0xff]
        %v2543 = vld [vmem:[%s7 + $0x378] sm:$0xff]
        %v2544 = vld [vmem:[%s7 + $0x380] sm:$0xff]
        %v2545 = vld [vmem:[%s7 + $0x388] sm:$0xff]
        %v2546 = vld [vmem:[%s7 + $0x390] sm:$0xff]
        %v2547 = vld [vmem:[%s7 + $0x398] sm:$0xff]
        %v2548 = vld [vmem:[%s7 + $0x3a0] sm:$0xff]
        %v2549 = vld [vmem:[%s7 + $0x3a8] sm:$0xff]
        %v2550 = vld [vmem:[%s7 + $0x3b0] sm:$0xff]
        %v2551 = vld [vmem:[%s7 + $0x3b8] sm:$0xff]
        %v2552 = vld [vmem:[%s7 + $0x3c0] sm:$0xff]
        %v2553 = vld [vmem:[%s7 + $0x3c8] sm:$0xff]
        %v2554 = vld [vmem:[%s7 + $0x3d0] sm:$0xff]
        %v2555 = vld [vmem:[%s7 + $0x3d8] sm:$0xff]
        %v2556 = vld [vmem:[%s7 + $0x3e0] sm:$0xff]
        %v2557 = vld [vmem:[%s7 + $0x3e8] sm:$0xff]
        %v2558 = vld [vmem:[%s7 + $0x3f0] sm:$0xff]
        %v2559 = vld [vmem:[%s7 + $0x3f8] sm:$0xff]
        %2561 = vset.pattern.permute.xlu0 0
        %2562 = vperm.xlu0 %2561, %v2432
        %v2563 = vpop.permute.xlu0 %2562
        %2566 = vset.pattern.permute.xlu0 0
        %2567 = vperm.xlu0 %2566, %v2433
        %v2568 = vpop.permute.xlu0 %2567
        %2571 = vset.pattern.permute.xlu0 0
        %2572 = vperm.xlu0 %2571, %v2434
        %v2573 = vpop.permute.xlu0 %2572
        %2576 = vset.pattern.permute.xlu0 0
        %2577 = vperm.xlu0 %2576, %v2435
        %v2578 = vpop.permute.xlu0 %2577
        %2581 = vset.pattern.permute.xlu0 0
        %2582 = vperm.xlu0 %2581, %v2436
        %v2583 = vpop.permute.xlu0 %2582
        %2586 = vset.pattern.permute.xlu0 0
        %2587 = vperm.xlu0 %2586, %v2437
        %v2588 = vpop.permute.xlu0 %2587
        %2591 = vset.pattern.permute.xlu0 0
        %2592 = vperm.xlu0 %2591, %v2438
        %v2593 = vpop.permute.xlu0 %2592
        %2596 = vset.pattern.permute.xlu0 0
        %2597 = vperm.xlu0 %2596, %v2439
        %v2598 = vpop.permute.xlu0 %2597
        %2601 = vset.pattern.permute.xlu0 0
        %2602 = vperm.xlu0 %2601, %v2440
        %v2603 = vpop.permute.xlu0 %2602
        %2606 = vset.pattern.permute.xlu0 0
        %2607 = vperm.xlu0 %2606, %v2441
        %v2608 = vpop.permute.xlu0 %2607
        %2611 = vset.pattern.permute.xlu0 0
        %2612 = vperm.xlu0 %2611, %v2442
        %v2613 = vpop.permute.xlu0 %2612
        %2616 = vset.pattern.permute.xlu0 0
        %2617 = vperm.xlu0 %2616, %v2443
        %v2618 = vpop.permute.xlu0 %2617
        %2621 = vset.pattern.permute.xlu0 0
        %2622 = vperm.xlu0 %2621, %v2444
        %v2623 = vpop.permute.xlu0 %2622
        %2626 = vset.pattern.permute.xlu0 0
        %2627 = vperm.xlu0 %2626, %v2445
        %v2628 = vpop.permute.xlu0 %2627
        %2631 = vset.pattern.permute.xlu0 0
        %2632 = vperm.xlu0 %2631, %v2446
        %v2633 = vpop.permute.xlu0 %2632
        %2636 = vset.pattern.permute.xlu0 0
        %2637 = vperm.xlu0 %2636, %v2447
        %v2638 = vpop.permute.xlu0 %2637
        %2641 = vset.pattern.permute.xlu0 0
        %2642 = vperm.xlu0 %2641, %v2448
        %v2643 = vpop.permute.xlu0 %2642
        %2646 = vset.pattern.permute.xlu0 0
        %2647 = vperm.xlu0 %2646, %v2449
        %v2648 = vpop.permute.xlu0 %2647
        %2651 = vset.pattern.permute.xlu0 0
        %2652 = vperm.xlu0 %2651, %v2450
        %v2653 = vpop.permute.xlu0 %2652
        %2656 = vset.pattern.permute.xlu0 0
        %2657 = vperm.xlu0 %2656, %v2451
        %v2658 = vpop.permute.xlu0 %2657
        %2661 = vset.pattern.permute.xlu0 0
        %2662 = vperm.xlu0 %2661, %v2452
        %v2663 = vpop.permute.xlu0 %2662
        %2666 = vset.pattern.permute.xlu0 0
        %2667 = vperm.xlu0 %2666, %v2453
        %v2668 = vpop.permute.xlu0 %2667
        %2671 = vset.pattern.permute.xlu0 0
        %2672 = vperm.xlu0 %2671, %v2454
        %v2673 = vpop.permute.xlu0 %2672
        %2676 = vset.pattern.permute.xlu0 0
        %2677 = vperm.xlu0 %2676, %v2455
        %v2678 = vpop.permute.xlu0 %2677
        %2681 = vset.pattern.permute.xlu0 0
        %2682 = vperm.xlu0 %2681, %v2456
        %v2683 = vpop.permute.xlu0 %2682
        %2686 = vset.pattern.permute.xlu0 0
        %2687 = vperm.xlu0 %2686, %v2457
        %v2688 = vpop.permute.xlu0 %2687
        %2691 = vset.pattern.permute.xlu0 0
        %2692 = vperm.xlu0 %2691, %v2458
        %v2693 = vpop.permute.xlu0 %2692
        %2696 = vset.pattern.permute.xlu0 0
        %2697 = vperm.xlu0 %2696, %v2459
        %v2698 = vpop.permute.xlu0 %2697
        %2701 = vset.pattern.permute.xlu0 0
        %2702 = vperm.xlu0 %2701, %v2460
        %v2703 = vpop.permute.xlu0 %2702
        %2706 = vset.pattern.permute.xlu0 0
        %2707 = vperm.xlu0 %2706, %v2461
        %v2708 = vpop.permute.xlu0 %2707
        %2711 = vset.pattern.permute.xlu0 0
        %2712 = vperm.xlu0 %2711, %v2462
        %v2713 = vpop.permute.xlu0 %2712
        %2716 = vset.pattern.permute.xlu0 0
        %2717 = vperm.xlu0 %2716, %v2463
        %v2718 = vpop.permute.xlu0 %2717
        %2721 = vset.pattern.permute.xlu0 0
        %2722 = vperm.xlu0 %2721, %v2464
        %v2723 = vpop.permute.xlu0 %2722
        %2726 = vset.pattern.permute.xlu0 0
        %2727 = vperm.xlu0 %2726, %v2465
        %v2728 = vpop.permute.xlu0 %2727
        %2731 = vset.pattern.permute.xlu0 0
        %2732 = vperm.xlu0 %2731, %v2466
        %v2733 = vpop.permute.xlu0 %2732
        %2736 = vset.pattern.permute.xlu0 0
        %2737 = vperm.xlu0 %2736, %v2467
        %v2738 = vpop.permute.xlu0 %2737
        %2741 = vset.pattern.permute.xlu0 0
        %2742 = vperm.xlu0 %2741, %v2468
        %v2743 = vpop.permute.xlu0 %2742
        %2746 = vset.pattern.permute.xlu0 0
        %2747 = vperm.xlu0 %2746, %v2469
        %v2748 = vpop.permute.xlu0 %2747
        %2751 = vset.pattern.permute.xlu0 0
        %2752 = vperm.xlu0 %2751, %v2470
        %v2753 = vpop.permute.xlu0 %2752
        %2756 = vset.pattern.permute.xlu0 0
        %2757 = vperm.xlu0 %2756, %v2471
        %v2758 = vpop.permute.xlu0 %2757
        %2761 = vset.pattern.permute.xlu0 0
        %2762 = vperm.xlu0 %2761, %v2472
        %v2763 = vpop.permute.xlu0 %2762
        %2766 = vset.pattern.permute.xlu0 0
        %2767 = vperm.xlu0 %2766, %v2473
        %v2768 = vpop.permute.xlu0 %2767
        %2771 = vset.pattern.permute.xlu0 0
        %2772 = vperm.xlu0 %2771, %v2474
        %v2773 = vpop.permute.xlu0 %2772
        %2776 = vset.pattern.permute.xlu0 0
        %2777 = vperm.xlu0 %2776, %v2475
        %v2778 = vpop.permute.xlu0 %2777
        %2781 = vset.pattern.permute.xlu0 0
        %2782 = vperm.xlu0 %2781, %v2476
        %v2783 = vpop.permute.xlu0 %2782
        %2786 = vset.pattern.permute.xlu0 0
        %2787 = vperm.xlu0 %2786, %v2477
        %v2788 = vpop.permute.xlu0 %2787
        %2791 = vset.pattern.permute.xlu0 0
        %2792 = vperm.xlu0 %2791, %v2478
        %v2793 = vpop.permute.xlu0 %2792
        %2796 = vset.pattern.permute.xlu0 0
        %2797 = vperm.xlu0 %2796, %v2479
        %v2798 = vpop.permute.xlu0 %2797
        %2801 = vset.pattern.permute.xlu0 0
        %2802 = vperm.xlu0 %2801, %v2480
        %v2803 = vpop.permute.xlu0 %2802
        %2806 = vset.pattern.permute.xlu0 0
        %2807 = vperm.xlu0 %2806, %v2481
        %v2808 = vpop.permute.xlu0 %2807
        %2811 = vset.pattern.permute.xlu0 0
        %2812 = vperm.xlu0 %2811, %v2482
        %v2813 = vpop.permute.xlu0 %2812
        %2816 = vset.pattern.permute.xlu0 0
        %2817 = vperm.xlu0 %2816, %v2483
        %v2818 = vpop.permute.xlu0 %2817
        %2821 = vset.pattern.permute.xlu0 0
        %2822 = vperm.xlu0 %2821, %v2484
        %v2823 = vpop.permute.xlu0 %2822
        %2826 = vset.pattern.permute.xlu0 0
        %2827 = vperm.xlu0 %2826, %v2485
        %v2828 = vpop.permute.xlu0 %2827
        %2831 = vset.pattern.permute.xlu0 0
        %2832 = vperm.xlu0 %2831, %v2486
        %v2833 = vpop.permute.xlu0 %2832
        %2836 = vset.pattern.permute.xlu0 0
        %2837 = vperm.xlu0 %2836, %v2487
        %v2838 = vpop.permute.xlu0 %2837
        %2841 = vset.pattern.permute.xlu0 0
        %2842 = vperm.xlu0 %2841, %v2488
        %v2843 = vpop.permute.xlu0 %2842
        %2846 = vset.pattern.permute.xlu0 0
        %2847 = vperm.xlu0 %2846, %v2489
        %v2848 = vpop.permute.xlu0 %2847
        %2851 = vset.pattern.permute.xlu0 0
        %2852 = vperm.xlu0 %2851, %v2490
        %v2853 = vpop.permute.xlu0 %2852
        %2856 = vset.pattern.permute.xlu0 0
        %2857 = vperm.xlu0 %2856, %v2491
        %v2858 = vpop.permute.xlu0 %2857
        %2861 = vset.pattern.permute.xlu0 0
        %2862 = vperm.xlu0 %2861, %v2492
        %v2863 = vpop.permute.xlu0 %2862
        %2866 = vset.pattern.permute.xlu0 0
        %2867 = vperm.xlu0 %2866, %v2493
        %v2868 = vpop.permute.xlu0 %2867
        %2871 = vset.pattern.permute.xlu0 0
        %2872 = vperm.xlu0 %2871, %v2494
        %v2873 = vpop.permute.xlu0 %2872
        %2876 = vset.pattern.permute.xlu0 0
        %2877 = vperm.xlu0 %2876, %v2495
        %v2878 = vpop.permute.xlu0 %2877
        %2881 = vset.pattern.permute.xlu0 0
        %2882 = vperm.xlu0 %2881, %v2496
        %v2883 = vpop.permute.xlu0 %2882
        %2886 = vset.pattern.permute.xlu0 0
        %2887 = vperm.xlu0 %2886, %v2497
        %v2888 = vpop.permute.xlu0 %2887
        %2891 = vset.pattern.permute.xlu0 0
        %2892 = vperm.xlu0 %2891, %v2498
        %v2893 = vpop.permute.xlu0 %2892
        %2896 = vset.pattern.permute.xlu0 0
        %2897 = vperm.xlu0 %2896, %v2499
        %v2898 = vpop.permute.xlu0 %2897
        %2901 = vset.pattern.permute.xlu0 0
        %2902 = vperm.xlu0 %2901, %v2500
        %v2903 = vpop.permute.xlu0 %2902
        %2906 = vset.pattern.permute.xlu0 0
        %2907 = vperm.xlu0 %2906, %v2501
        %v2908 = vpop.permute.xlu0 %2907
        %2911 = vset.pattern.permute.xlu0 0
        %2912 = vperm.xlu0 %2911, %v2502
        %v2913 = vpop.permute.xlu0 %2912
        %2916 = vset.pattern.permute.xlu0 0
        %2917 = vperm.xlu0 %2916, %v2503
        %v2918 = vpop.permute.xlu0 %2917
        %2921 = vset.pattern.permute.xlu0 0
        %2922 = vperm.xlu0 %2921, %v2504
        %v2923 = vpop.permute.xlu0 %2922
        %2926 = vset.pattern.permute.xlu0 0
        %2927 = vperm.xlu0 %2926, %v2505
        %v2928 = vpop.permute.xlu0 %2927
        %2931 = vset.pattern.permute.xlu0 0
        %2932 = vperm.xlu0 %2931, %v2506
        %v2933 = vpop.permute.xlu0 %2932
        %2936 = vset.pattern.permute.xlu0 0
        %2937 = vperm.xlu0 %2936, %v2507
        %v2938 = vpop.permute.xlu0 %2937
        %2941 = vset.pattern.permute.xlu0 0
        %2942 = vperm.xlu0 %2941, %v2508
        %v2943 = vpop.permute.xlu0 %2942
        %2946 = vset.pattern.permute.xlu0 0
        %2947 = vperm.xlu0 %2946, %v2509
        %v2948 = vpop.permute.xlu0 %2947
        %2951 = vset.pattern.permute.xlu0 0
        %2952 = vperm.xlu0 %2951, %v2510
        %v2953 = vpop.permute.xlu0 %2952
        %2956 = vset.pattern.permute.xlu0 0
        %2957 = vperm.xlu0 %2956, %v2511
        %v2958 = vpop.permute.xlu0 %2957
        %2961 = vset.pattern.permute.xlu0 0
        %2962 = vperm.xlu0 %2961, %v2512
        %v2963 = vpop.permute.xlu0 %2962
        %2966 = vset.pattern.permute.xlu0 0
        %2967 = vperm.xlu0 %2966, %v2513
        %v2968 = vpop.permute.xlu0 %2967
        %2971 = vset.pattern.permute.xlu0 0
        %2972 = vperm.xlu0 %2971, %v2514
        %v2973 = vpop.permute.xlu0 %2972
        %2976 = vset.pattern.permute.xlu0 0
        %2977 = vperm.xlu0 %2976, %v2515
        %v2978 = vpop.permute.xlu0 %2977
        %2981 = vset.pattern.permute.xlu0 0
        %2982 = vperm.xlu0 %2981, %v2516
        %v2983 = vpop.permute.xlu0 %2982
        %2986 = vset.pattern.permute.xlu0 0
        %2987 = vperm.xlu0 %2986, %v2517
        %v2988 = vpop.permute.xlu0 %2987
        %2991 = vset.pattern.permute.xlu0 0
        %2992 = vperm.xlu0 %2991, %v2518
        %v2993 = vpop.permute.xlu0 %2992
        %2996 = vset.pattern.permute.xlu0 0
        %2997 = vperm.xlu0 %2996, %v2519
        %v2998 = vpop.permute.xlu0 %2997
        %3001 = vset.pattern.permute.xlu0 0
        %3002 = vperm.xlu0 %3001, %v2520
        %v3003 = vpop.permute.xlu0 %3002
        %3006 = vset.pattern.permute.xlu0 0
        %3007 = vperm.xlu0 %3006, %v2521
        %v3008 = vpop.permute.xlu0 %3007
        %3011 = vset.pattern.permute.xlu0 0
        %3012 = vperm.xlu0 %3011, %v2522
        %v3013 = vpop.permute.xlu0 %3012
        %3016 = vset.pattern.permute.xlu0 0
        %3017 = vperm.xlu0 %3016, %v2523
        %v3018 = vpop.permute.xlu0 %3017
        %3021 = vset.pattern.permute.xlu0 0
        %3022 = vperm.xlu0 %3021, %v2524
        %v3023 = vpop.permute.xlu0 %3022
        %3026 = vset.pattern.permute.xlu0 0
        %3027 = vperm.xlu0 %3026, %v2525
        %v3028 = vpop.permute.xlu0 %3027
        %3031 = vset.pattern.permute.xlu0 0
        %3032 = vperm.xlu0 %3031, %v2526
        %v3033 = vpop.permute.xlu0 %3032
        %3036 = vset.pattern.permute.xlu0 0
        %3037 = vperm.xlu0 %3036, %v2527
        %v3038 = vpop.permute.xlu0 %3037
        %3041 = vset.pattern.permute.xlu0 0
        %3042 = vperm.xlu0 %3041, %v2528
        %v3043 = vpop.permute.xlu0 %3042
        %3046 = vset.pattern.permute.xlu0 0
        %3047 = vperm.xlu0 %3046, %v2529
        %v3048 = vpop.permute.xlu0 %3047
        %3051 = vset.pattern.permute.xlu0 0
        %3052 = vperm.xlu0 %3051, %v2530
        %v3053 = vpop.permute.xlu0 %3052
        %3056 = vset.pattern.permute.xlu0 0
        %3057 = vperm.xlu0 %3056, %v2531
        %v3058 = vpop.permute.xlu0 %3057
        %3061 = vset.pattern.permute.xlu0 0
        %3062 = vperm.xlu0 %3061, %v2532
        %v3063 = vpop.permute.xlu0 %3062
        %3066 = vset.pattern.permute.xlu0 0
        %3067 = vperm.xlu0 %3066, %v2533
        %v3068 = vpop.permute.xlu0 %3067
        %3071 = vset.pattern.permute.xlu0 0
        %3072 = vperm.xlu0 %3071, %v2534
        %v3073 = vpop.permute.xlu0 %3072
        %3076 = vset.pattern.permute.xlu0 0
        %3077 = vperm.xlu0 %3076, %v2535
        %v3078 = vpop.permute.xlu0 %3077
        %3081 = vset.pattern.permute.xlu0 0
        %3082 = vperm.xlu0 %3081, %v2536
        %v3083 = vpop.permute.xlu0 %3082
        %3086 = vset.pattern.permute.xlu0 0
        %3087 = vperm.xlu0 %3086, %v2537
        %v3088 = vpop.permute.xlu0 %3087
        %3091 = vset.pattern.permute.xlu0 0
        %3092 = vperm.xlu0 %3091, %v2538
        %v3093 = vpop.permute.xlu0 %3092
        %3096 = vset.pattern.permute.xlu0 0
        %3097 = vperm.xlu0 %3096, %v2539
        %v3098 = vpop.permute.xlu0 %3097
        %3101 = vset.pattern.permute.xlu0 0
        %3102 = vperm.xlu0 %3101, %v2540
        %v3103 = vpop.permute.xlu0 %3102
        %3106 = vset.pattern.permute.xlu0 0
        %3107 = vperm.xlu0 %3106, %v2541
        %v3108 = vpop.permute.xlu0 %3107
        %3111 = vset.pattern.permute.xlu0 0
        %3112 = vperm.xlu0 %3111, %v2542
        %v3113 = vpop.permute.xlu0 %3112
        %3116 = vset.pattern.permute.xlu0 0
        %3117 = vperm.xlu0 %3116, %v2543
        %v3118 = vpop.permute.xlu0 %3117
        %3121 = vset.pattern.permute.xlu0 0
        %3122 = vperm.xlu0 %3121, %v2544
        %v3123 = vpop.permute.xlu0 %3122
        %3126 = vset.pattern.permute.xlu0 0
        %3127 = vperm.xlu0 %3126, %v2545
        %v3128 = vpop.permute.xlu0 %3127
        %3131 = vset.pattern.permute.xlu0 0
        %3132 = vperm.xlu0 %3131, %v2546
        %v3133 = vpop.permute.xlu0 %3132
        %3136 = vset.pattern.permute.xlu0 0
        %3137 = vperm.xlu0 %3136, %v2547
        %v3138 = vpop.permute.xlu0 %3137
        %3141 = vset.pattern.permute.xlu0 0
        %3142 = vperm.xlu0 %3141, %v2548
        %v3143 = vpop.permute.xlu0 %3142
        %3146 = vset.pattern.permute.xlu0 0
        %3147 = vperm.xlu0 %3146, %v2549
        %v3148 = vpop.permute.xlu0 %3147
        %3151 = vset.pattern.permute.xlu0 0
        %3152 = vperm.xlu0 %3151, %v2550
        %v3153 = vpop.permute.xlu0 %3152
        %3156 = vset.pattern.permute.xlu0 0
        %3157 = vperm.xlu0 %3156, %v2551
        %v3158 = vpop.permute.xlu0 %3157
        %3161 = vset.pattern.permute.xlu0 0
        %3162 = vperm.xlu0 %3161, %v2552
        %v3163 = vpop.permute.xlu0 %3162
        %3166 = vset.pattern.permute.xlu0 0
        %3167 = vperm.xlu0 %3166, %v2553
        %v3168 = vpop.permute.xlu0 %3167
        %3171 = vset.pattern.permute.xlu0 0
        %3172 = vperm.xlu0 %3171, %v2554
        %v3173 = vpop.permute.xlu0 %3172
        %3176 = vset.pattern.permute.xlu0 0
        %3177 = vperm.xlu0 %3176, %v2555
        %v3178 = vpop.permute.xlu0 %3177
        %3181 = vset.pattern.permute.xlu0 0
        %3182 = vperm.xlu0 %3181, %v2556
        %v3183 = vpop.permute.xlu0 %3182
        %3186 = vset.pattern.permute.xlu0 0
        %3187 = vperm.xlu0 %3186, %v2557
        %v3188 = vpop.permute.xlu0 %3187
        %3191 = vset.pattern.permute.xlu0 0
        %3192 = vperm.xlu0 %3191, %v2558
        %v3193 = vpop.permute.xlu0 %3192
        %3196 = vset.pattern.permute.xlu0 0
        %3197 = vperm.xlu0 %3196, %v2559
        %v3198 = vpop.permute.xlu0 %3197
        %v3456 = vunpack.c.l.b16 %v2176
        %v3457 = vunpack.c.h.b16 %v2176
        %v3458 = vunpack.c.l.b16 %v2177
        %v3459 = vunpack.c.h.b16 %v2177
        %v3460 = vunpack.c.l.b16 %v2178
        %v3461 = vunpack.c.h.b16 %v2178
        %v3462 = vunpack.c.l.b16 %v2179
        %v3463 = vunpack.c.h.b16 %v2179
        %v3464 = vunpack.c.l.b16 %v2180
        %v3465 = vunpack.c.h.b16 %v2180
        %v3466 = vunpack.c.l.b16 %v2181
        %v3467 = vunpack.c.h.b16 %v2181
        %v3468 = vunpack.c.l.b16 %v2182
        %v3469 = vunpack.c.h.b16 %v2182
        %v3470 = vunpack.c.l.b16 %v2183
        %v3471 = vunpack.c.h.b16 %v2183
        %v3472 = vunpack.c.l.b16 %v2184
        %v3473 = vunpack.c.h.b16 %v2184
        %v3474 = vunpack.c.l.b16 %v2185
        %v3475 = vunpack.c.h.b16 %v2185
        %v3476 = vunpack.c.l.b16 %v2186
        %v3477 = vunpack.c.h.b16 %v2186
        %v3478 = vunpack.c.l.b16 %v2187
        %v3479 = vunpack.c.h.b16 %v2187
        %v3480 = vunpack.c.l.b16 %v2188
        %v3481 = vunpack.c.h.b16 %v2188
        %v3482 = vunpack.c.l.b16 %v2189
        %v3483 = vunpack.c.h.b16 %v2189
        %v3484 = vunpack.c.l.b16 %v2190
        %v3485 = vunpack.c.h.b16 %v2190
        %v3486 = vunpack.c.l.b16 %v2191
        %v3487 = vunpack.c.h.b16 %v2191
        %v3488 = vunpack.c.l.b16 %v2192
        %v3489 = vunpack.c.h.b16 %v2192
        %v3490 = vunpack.c.l.b16 %v2193
        %v3491 = vunpack.c.h.b16 %v2193
        %v3492 = vunpack.c.l.b16 %v2194
        %v3493 = vunpack.c.h.b16 %v2194
        %v3494 = vunpack.c.l.b16 %v2195
        %v3495 = vunpack.c.h.b16 %v2195
        %v3496 = vunpack.c.l.b16 %v2196
        %v3497 = vunpack.c.h.b16 %v2196
        %v3498 = vunpack.c.l.b16 %v2197
        %v3499 = vunpack.c.h.b16 %v2197
        %v3500 = vunpack.c.l.b16 %v2198
        %v3501 = vunpack.c.h.b16 %v2198
        %v3502 = vunpack.c.l.b16 %v2199
        %v3503 = vunpack.c.h.b16 %v2199
        %v3504 = vunpack.c.l.b16 %v2200
        %v3505 = vunpack.c.h.b16 %v2200
        %v3506 = vunpack.c.l.b16 %v2201
        %v3507 = vunpack.c.h.b16 %v2201
        %v3508 = vunpack.c.l.b16 %v2202
        %v3509 = vunpack.c.h.b16 %v2202
        %v3510 = vunpack.c.l.b16 %v2203
        %v3511 = vunpack.c.h.b16 %v2203
        %v3512 = vunpack.c.l.b16 %v2204
        %v3513 = vunpack.c.h.b16 %v2204
        %v3514 = vunpack.c.l.b16 %v2205
        %v3515 = vunpack.c.h.b16 %v2205
        %v3516 = vunpack.c.l.b16 %v2206
        %v3517 = vunpack.c.h.b16 %v2206
        %v3518 = vunpack.c.l.b16 %v2207
        %v3519 = vunpack.c.h.b16 %v2207
        %v3520 = vunpack.c.l.b16 %v2208
        %v3521 = vunpack.c.h.b16 %v2208
        %v3522 = vunpack.c.l.b16 %v2209
        %v3523 = vunpack.c.h.b16 %v2209
        %v3524 = vunpack.c.l.b16 %v2210
        %v3525 = vunpack.c.h.b16 %v2210
        %v3526 = vunpack.c.l.b16 %v2211
        %v3527 = vunpack.c.h.b16 %v2211
        %v3528 = vunpack.c.l.b16 %v2212
        %v3529 = vunpack.c.h.b16 %v2212
        %v3530 = vunpack.c.l.b16 %v2213
        %v3531 = vunpack.c.h.b16 %v2213
        %v3532 = vunpack.c.l.b16 %v2214
        %v3533 = vunpack.c.h.b16 %v2214
        %v3534 = vunpack.c.l.b16 %v2215
        %v3535 = vunpack.c.h.b16 %v2215
        %v3536 = vunpack.c.l.b16 %v2216
        %v3537 = vunpack.c.h.b16 %v2216
        %v3538 = vunpack.c.l.b16 %v2217
        %v3539 = vunpack.c.h.b16 %v2217
        %v3540 = vunpack.c.l.b16 %v2218
        %v3541 = vunpack.c.h.b16 %v2218
        %v3542 = vunpack.c.l.b16 %v2219
        %v3543 = vunpack.c.h.b16 %v2219
        %v3544 = vunpack.c.l.b16 %v2220
        %v3545 = vunpack.c.h.b16 %v2220
        %v3546 = vunpack.c.l.b16 %v2221
        %v3547 = vunpack.c.h.b16 %v2221
        %v3548 = vunpack.c.l.b16 %v2222
        %v3549 = vunpack.c.h.b16 %v2222
        %v3550 = vunpack.c.l.b16 %v2223
        %v3551 = vunpack.c.h.b16 %v2223
        %v3552 = vunpack.c.l.b16 %v2224
        %v3553 = vunpack.c.h.b16 %v2224
        %v3554 = vunpack.c.l.b16 %v2225
        %v3555 = vunpack.c.h.b16 %v2225
        %v3556 = vunpack.c.l.b16 %v2226
        %v3557 = vunpack.c.h.b16 %v2226
        %v3558 = vunpack.c.l.b16 %v2227
        %v3559 = vunpack.c.h.b16 %v2227
        %v3560 = vunpack.c.l.b16 %v2228
        %v3561 = vunpack.c.h.b16 %v2228
        %v3562 = vunpack.c.l.b16 %v2229
        %v3563 = vunpack.c.h.b16 %v2229
        %v3564 = vunpack.c.l.b16 %v2230
        %v3565 = vunpack.c.h.b16 %v2230
        %v3566 = vunpack.c.l.b16 %v2231
        %v3567 = vunpack.c.h.b16 %v2231
        %v3568 = vunpack.c.l.b16 %v2232
        %v3569 = vunpack.c.h.b16 %v2232
        %v3570 = vunpack.c.l.b16 %v2233
        %v3571 = vunpack.c.h.b16 %v2233
        %v3572 = vunpack.c.l.b16 %v2234
        %v3573 = vunpack.c.h.b16 %v2234
        %v3574 = vunpack.c.l.b16 %v2235
        %v3575 = vunpack.c.h.b16 %v2235
        %v3576 = vunpack.c.l.b16 %v2236
        %v3577 = vunpack.c.h.b16 %v2236
        %v3578 = vunpack.c.l.b16 %v2237
        %v3579 = vunpack.c.h.b16 %v2237
        %v3580 = vunpack.c.l.b16 %v2238
        %v3581 = vunpack.c.h.b16 %v2238
        %v3582 = vunpack.c.l.b16 %v2239
        %v3583 = vunpack.c.h.b16 %v2239
        %v3584 = vunpack.c.l.b16 %v2240
        %v3585 = vunpack.c.h.b16 %v2240
        %v3586 = vunpack.c.l.b16 %v2241
        %v3587 = vunpack.c.h.b16 %v2241
        %v3588 = vunpack.c.l.b16 %v2242
        %v3589 = vunpack.c.h.b16 %v2242
        %v3590 = vunpack.c.l.b16 %v2243
        %v3591 = vunpack.c.h.b16 %v2243
        %v3592 = vunpack.c.l.b16 %v2244
        %v3593 = vunpack.c.h.b16 %v2244
        %v3594 = vunpack.c.l.b16 %v2245
        %v3595 = vunpack.c.h.b16 %v2245
        %v3596 = vunpack.c.l.b16 %v2246
        %v3597 = vunpack.c.h.b16 %v2246
        %v3598 = vunpack.c.l.b16 %v2247
        %v3599 = vunpack.c.h.b16 %v2247
        %v3600 = vunpack.c.l.b16 %v2248
        %v3601 = vunpack.c.h.b16 %v2248
        %v3602 = vunpack.c.l.b16 %v2249
        %v3603 = vunpack.c.h.b16 %v2249
        %v3604 = vunpack.c.l.b16 %v2250
        %v3605 = vunpack.c.h.b16 %v2250
        %v3606 = vunpack.c.l.b16 %v2251
        %v3607 = vunpack.c.h.b16 %v2251
        %v3608 = vunpack.c.l.b16 %v2252
        %v3609 = vunpack.c.h.b16 %v2252
        %v3610 = vunpack.c.l.b16 %v2253
        %v3611 = vunpack.c.h.b16 %v2253
        %v3612 = vunpack.c.l.b16 %v2254
        %v3613 = vunpack.c.h.b16 %v2254
        %v3614 = vunpack.c.l.b16 %v2255
        %v3615 = vunpack.c.h.b16 %v2255
        %v3616 = vunpack.c.l.b16 %v2256
        %v3617 = vunpack.c.h.b16 %v2256
        %v3618 = vunpack.c.l.b16 %v2257
        %v3619 = vunpack.c.h.b16 %v2257
        %v3620 = vunpack.c.l.b16 %v2258
        %v3621 = vunpack.c.h.b16 %v2258
        %v3622 = vunpack.c.l.b16 %v2259
        %v3623 = vunpack.c.h.b16 %v2259
        %v3624 = vunpack.c.l.b16 %v2260
        %v3625 = vunpack.c.h.b16 %v2260
        %v3626 = vunpack.c.l.b16 %v2261
        %v3627 = vunpack.c.h.b16 %v2261
        %v3628 = vunpack.c.l.b16 %v2262
        %v3629 = vunpack.c.h.b16 %v2262
        %v3630 = vunpack.c.l.b16 %v2263
        %v3631 = vunpack.c.h.b16 %v2263
        %v3632 = vunpack.c.l.b16 %v2264
        %v3633 = vunpack.c.h.b16 %v2264
        %v3634 = vunpack.c.l.b16 %v2265
        %v3635 = vunpack.c.h.b16 %v2265
        %v3636 = vunpack.c.l.b16 %v2266
        %v3637 = vunpack.c.h.b16 %v2266
        %v3638 = vunpack.c.l.b16 %v2267
        %v3639 = vunpack.c.h.b16 %v2267
        %v3640 = vunpack.c.l.b16 %v2268
        %v3641 = vunpack.c.h.b16 %v2268
        %v3642 = vunpack.c.l.b16 %v2269
        %v3643 = vunpack.c.h.b16 %v2269
        %v3644 = vunpack.c.l.b16 %v2270
        %v3645 = vunpack.c.h.b16 %v2270
        %v3646 = vunpack.c.l.b16 %v2271
        %v3647 = vunpack.c.h.b16 %v2271
        %v3648 = vunpack.c.l.b16 %v2272
        %v3649 = vunpack.c.h.b16 %v2272
        %v3650 = vunpack.c.l.b16 %v2273
        %v3651 = vunpack.c.h.b16 %v2273
        %v3652 = vunpack.c.l.b16 %v2274
        %v3653 = vunpack.c.h.b16 %v2274
        %v3654 = vunpack.c.l.b16 %v2275
        %v3655 = vunpack.c.h.b16 %v2275
        %v3656 = vunpack.c.l.b16 %v2276
        %v3657 = vunpack.c.h.b16 %v2276
        %v3658 = vunpack.c.l.b16 %v2277
        %v3659 = vunpack.c.h.b16 %v2277
        %v3660 = vunpack.c.l.b16 %v2278
        %v3661 = vunpack.c.h.b16 %v2278
        %v3662 = vunpack.c.l.b16 %v2279
        %v3663 = vunpack.c.h.b16 %v2279
        %v3664 = vunpack.c.l.b16 %v2280
        %v3665 = vunpack.c.h.b16 %v2280
        %v3666 = vunpack.c.l.b16 %v2281
        %v3667 = vunpack.c.h.b16 %v2281
        %v3668 = vunpack.c.l.b16 %v2282
        %v3669 = vunpack.c.h.b16 %v2282
        %v3670 = vunpack.c.l.b16 %v2283
        %v3671 = vunpack.c.h.b16 %v2283
        %v3672 = vunpack.c.l.b16 %v2284
        %v3673 = vunpack.c.h.b16 %v2284
        %v3674 = vunpack.c.l.b16 %v2285
        %v3675 = vunpack.c.h.b16 %v2285
        %v3676 = vunpack.c.l.b16 %v2286
        %v3677 = vunpack.c.h.b16 %v2286
        %v3678 = vunpack.c.l.b16 %v2287
        %v3679 = vunpack.c.h.b16 %v2287
        %v3680 = vunpack.c.l.b16 %v2288
        %v3681 = vunpack.c.h.b16 %v2288
        %v3682 = vunpack.c.l.b16 %v2289
        %v3683 = vunpack.c.h.b16 %v2289
        %v3684 = vunpack.c.l.b16 %v2290
        %v3685 = vunpack.c.h.b16 %v2290
        %v3686 = vunpack.c.l.b16 %v2291
        %v3687 = vunpack.c.h.b16 %v2291
        %v3688 = vunpack.c.l.b16 %v2292
        %v3689 = vunpack.c.h.b16 %v2292
        %v3690 = vunpack.c.l.b16 %v2293
        %v3691 = vunpack.c.h.b16 %v2293
        %v3692 = vunpack.c.l.b16 %v2294
        %v3693 = vunpack.c.h.b16 %v2294
        %v3694 = vunpack.c.l.b16 %v2295
        %v3695 = vunpack.c.h.b16 %v2295
        %v3696 = vunpack.c.l.b16 %v2296
        %v3697 = vunpack.c.h.b16 %v2296
        %v3698 = vunpack.c.l.b16 %v2297
        %v3699 = vunpack.c.h.b16 %v2297
        %v3700 = vunpack.c.l.b16 %v2298
        %v3701 = vunpack.c.h.b16 %v2298
        %v3702 = vunpack.c.l.b16 %v2299
        %v3703 = vunpack.c.h.b16 %v2299
        %v3704 = vunpack.c.l.b16 %v2300
        %v3705 = vunpack.c.h.b16 %v2300
        %v3706 = vunpack.c.l.b16 %v2301
        %v3707 = vunpack.c.h.b16 %v2301
        %v3708 = vunpack.c.l.b16 %v2302
        %v3709 = vunpack.c.h.b16 %v2302
        %v3710 = vunpack.c.l.b16 %v2303
        %v3711 = vunpack.c.h.b16 %v2303
        %v3712 = vunpack.c.l.b16 %v2304
        %v3713 = vunpack.c.h.b16 %v2304
        %v3714 = vunpack.c.l.b16 %v2305
        %v3715 = vunpack.c.h.b16 %v2305
        %v3716 = vunpack.c.l.b16 %v2306
        %v3717 = vunpack.c.h.b16 %v2306
        %v3718 = vunpack.c.l.b16 %v2307
        %v3719 = vunpack.c.h.b16 %v2307
        %v3720 = vunpack.c.l.b16 %v2308
        %v3721 = vunpack.c.h.b16 %v2308
        %v3722 = vunpack.c.l.b16 %v2309
        %v3723 = vunpack.c.h.b16 %v2309
        %v3724 = vunpack.c.l.b16 %v2310
        %v3725 = vunpack.c.h.b16 %v2310
        %v3726 = vunpack.c.l.b16 %v2311
        %v3727 = vunpack.c.h.b16 %v2311
        %v3728 = vunpack.c.l.b16 %v2312
        %v3729 = vunpack.c.h.b16 %v2312
        %v3730 = vunpack.c.l.b16 %v2313
        %v3731 = vunpack.c.h.b16 %v2313
        %v3732 = vunpack.c.l.b16 %v2314
        %v3733 = vunpack.c.h.b16 %v2314
        %v3734 = vunpack.c.l.b16 %v2315
        %v3735 = vunpack.c.h.b16 %v2315
        %v3736 = vunpack.c.l.b16 %v2316
        %v3737 = vunpack.c.h.b16 %v2316
        %v3738 = vunpack.c.l.b16 %v2317
        %v3739 = vunpack.c.h.b16 %v2317
        %v3740 = vunpack.c.l.b16 %v2318
        %v3741 = vunpack.c.h.b16 %v2318
        %v3742 = vunpack.c.l.b16 %v2319
        %v3743 = vunpack.c.h.b16 %v2319
        %v3744 = vunpack.c.l.b16 %v2320
        %v3745 = vunpack.c.h.b16 %v2320
        %v3746 = vunpack.c.l.b16 %v2321
        %v3747 = vunpack.c.h.b16 %v2321
        %v3748 = vunpack.c.l.b16 %v2322
        %v3749 = vunpack.c.h.b16 %v2322
        %v3750 = vunpack.c.l.b16 %v2323
        %v3751 = vunpack.c.h.b16 %v2323
        %v3752 = vunpack.c.l.b16 %v2324
        %v3753 = vunpack.c.h.b16 %v2324
        %v3754 = vunpack.c.l.b16 %v2325
        %v3755 = vunpack.c.h.b16 %v2325
        %v3756 = vunpack.c.l.b16 %v2326
        %v3757 = vunpack.c.h.b16 %v2326
        %v3758 = vunpack.c.l.b16 %v2327
        %v3759 = vunpack.c.h.b16 %v2327
        %v3760 = vunpack.c.l.b16 %v2328
        %v3761 = vunpack.c.h.b16 %v2328
        %v3762 = vunpack.c.l.b16 %v2329
        %v3763 = vunpack.c.h.b16 %v2329
        %v3764 = vunpack.c.l.b16 %v2330
        %v3765 = vunpack.c.h.b16 %v2330
        %v3766 = vunpack.c.l.b16 %v2331
        %v3767 = vunpack.c.h.b16 %v2331
        %v3768 = vunpack.c.l.b16 %v2332
        %v3769 = vunpack.c.h.b16 %v2332
        %v3770 = vunpack.c.l.b16 %v2333
        %v3771 = vunpack.c.h.b16 %v2333
        %v3772 = vunpack.c.l.b16 %v2334
        %v3773 = vunpack.c.h.b16 %v2334
        %v3774 = vunpack.c.l.b16 %v2335
        %v3775 = vunpack.c.h.b16 %v2335
        %v3776 = vunpack.c.l.b16 %v2336
        %v3777 = vunpack.c.h.b16 %v2336
        %v3778 = vunpack.c.l.b16 %v2337
        %v3779 = vunpack.c.h.b16 %v2337
        %v3780 = vunpack.c.l.b16 %v2338
        %v3781 = vunpack.c.h.b16 %v2338
        %v3782 = vunpack.c.l.b16 %v2339
        %v3783 = vunpack.c.h.b16 %v2339
        %v3784 = vunpack.c.l.b16 %v2340
        %v3785 = vunpack.c.h.b16 %v2340
        %v3786 = vunpack.c.l.b16 %v2341
        %v3787 = vunpack.c.h.b16 %v2341
        %v3788 = vunpack.c.l.b16 %v2342
        %v3789 = vunpack.c.h.b16 %v2342
        %v3790 = vunpack.c.l.b16 %v2343
        %v3791 = vunpack.c.h.b16 %v2343
        %v3792 = vunpack.c.l.b16 %v2344
        %v3793 = vunpack.c.h.b16 %v2344
        %v3794 = vunpack.c.l.b16 %v2345
        %v3795 = vunpack.c.h.b16 %v2345
        %v3796 = vunpack.c.l.b16 %v2346
        %v3797 = vunpack.c.h.b16 %v2346
        %v3798 = vunpack.c.l.b16 %v2347
        %v3799 = vunpack.c.h.b16 %v2347
        %v3800 = vunpack.c.l.b16 %v2348
        %v3801 = vunpack.c.h.b16 %v2348
        %v3802 = vunpack.c.l.b16 %v2349
        %v3803 = vunpack.c.h.b16 %v2349
        %v3804 = vunpack.c.l.b16 %v2350
        %v3805 = vunpack.c.h.b16 %v2350
        %v3806 = vunpack.c.l.b16 %v2351
        %v3807 = vunpack.c.h.b16 %v2351
        %v3808 = vunpack.c.l.b16 %v2352
        %v3809 = vunpack.c.h.b16 %v2352
        %v3810 = vunpack.c.l.b16 %v2353
        %v3811 = vunpack.c.h.b16 %v2353
        %v3812 = vunpack.c.l.b16 %v2354
        %v3813 = vunpack.c.h.b16 %v2354
        %v3814 = vunpack.c.l.b16 %v2355
        %v3815 = vunpack.c.h.b16 %v2355
        %v3816 = vunpack.c.l.b16 %v2356
        %v3817 = vunpack.c.h.b16 %v2356
        %v3818 = vunpack.c.l.b16 %v2357
        %v3819 = vunpack.c.h.b16 %v2357
        %v3820 = vunpack.c.l.b16 %v2358
        %v3821 = vunpack.c.h.b16 %v2358
        %v3822 = vunpack.c.l.b16 %v2359
        %v3823 = vunpack.c.h.b16 %v2359
        %v3824 = vunpack.c.l.b16 %v2360
        %v3825 = vunpack.c.h.b16 %v2360
        %v3826 = vunpack.c.l.b16 %v2361
        %v3827 = vunpack.c.h.b16 %v2361
        %v3828 = vunpack.c.l.b16 %v2362
        %v3829 = vunpack.c.h.b16 %v2362
        %v3830 = vunpack.c.l.b16 %v2363
        %v3831 = vunpack.c.h.b16 %v2363
        %v3832 = vunpack.c.l.b16 %v2364
        %v3833 = vunpack.c.h.b16 %v2364
        %v3834 = vunpack.c.l.b16 %v2365
        %v3835 = vunpack.c.h.b16 %v2365
        %v3836 = vunpack.c.l.b16 %v2366
        %v3837 = vunpack.c.h.b16 %v2366
        %v3838 = vunpack.c.l.b16 %v2367
        %v3839 = vunpack.c.h.b16 %v2367
        %v3840 = vunpack.c.l.b16 %v2368
        %v3841 = vunpack.c.h.b16 %v2368
        %v3842 = vunpack.c.l.b16 %v2369
        %v3843 = vunpack.c.h.b16 %v2369
        %v3844 = vunpack.c.l.b16 %v2370
        %v3845 = vunpack.c.h.b16 %v2370
        %v3846 = vunpack.c.l.b16 %v2371
        %v3847 = vunpack.c.h.b16 %v2371
        %v3848 = vunpack.c.l.b16 %v2372
        %v3849 = vunpack.c.h.b16 %v2372
        %v3850 = vunpack.c.l.b16 %v2373
        %v3851 = vunpack.c.h.b16 %v2373
        %v3852 = vunpack.c.l.b16 %v2374
        %v3853 = vunpack.c.h.b16 %v2374
        %v3854 = vunpack.c.l.b16 %v2375
        %v3855 = vunpack.c.h.b16 %v2375
        %v3856 = vunpack.c.l.b16 %v2376
        %v3857 = vunpack.c.h.b16 %v2376
        %v3858 = vunpack.c.l.b16 %v2377
        %v3859 = vunpack.c.h.b16 %v2377
        %v3860 = vunpack.c.l.b16 %v2378
        %v3861 = vunpack.c.h.b16 %v2378
        %v3862 = vunpack.c.l.b16 %v2379
        %v3863 = vunpack.c.h.b16 %v2379
        %v3864 = vunpack.c.l.b16 %v2380
        %v3865 = vunpack.c.h.b16 %v2380
        %v3866 = vunpack.c.l.b16 %v2381
        %v3867 = vunpack.c.h.b16 %v2381
        %v3868 = vunpack.c.l.b16 %v2382
        %v3869 = vunpack.c.h.b16 %v2382
        %v3870 = vunpack.c.l.b16 %v2383
        %v3871 = vunpack.c.h.b16 %v2383
        %v3872 = vunpack.c.l.b16 %v2384
        %v3873 = vunpack.c.h.b16 %v2384
        %v3874 = vunpack.c.l.b16 %v2385
        %v3875 = vunpack.c.h.b16 %v2385
        %v3876 = vunpack.c.l.b16 %v2386
        %v3877 = vunpack.c.h.b16 %v2386
        %v3878 = vunpack.c.l.b16 %v2387
        %v3879 = vunpack.c.h.b16 %v2387
        %v3880 = vunpack.c.l.b16 %v2388
        %v3881 = vunpack.c.h.b16 %v2388
        %v3882 = vunpack.c.l.b16 %v2389
        %v3883 = vunpack.c.h.b16 %v2389
        %v3884 = vunpack.c.l.b16 %v2390
        %v3885 = vunpack.c.h.b16 %v2390
        %v3886 = vunpack.c.l.b16 %v2391
        %v3887 = vunpack.c.h.b16 %v2391
        %v3888 = vunpack.c.l.b16 %v2392
        %v3889 = vunpack.c.h.b16 %v2392
        %v3890 = vunpack.c.l.b16 %v2393
        %v3891 = vunpack.c.h.b16 %v2393
        %v3892 = vunpack.c.l.b16 %v2394
        %v3893 = vunpack.c.h.b16 %v2394
        %v3894 = vunpack.c.l.b16 %v2395
        %v3895 = vunpack.c.h.b16 %v2395
        %v3896 = vunpack.c.l.b16 %v2396
        %v3897 = vunpack.c.h.b16 %v2396
        %v3898 = vunpack.c.l.b16 %v2397
        %v3899 = vunpack.c.h.b16 %v2397
        %v3900 = vunpack.c.l.b16 %v2398
        %v3901 = vunpack.c.h.b16 %v2398
        %v3902 = vunpack.c.l.b16 %v2399
        %v3903 = vunpack.c.h.b16 %v2399
        %v3904 = vunpack.c.l.b16 %v2400
        %v3905 = vunpack.c.h.b16 %v2400
        %v3906 = vunpack.c.l.b16 %v2401
        %v3907 = vunpack.c.h.b16 %v2401
        %v3908 = vunpack.c.l.b16 %v2402
        %v3909 = vunpack.c.h.b16 %v2402
        %v3910 = vunpack.c.l.b16 %v2403
        %v3911 = vunpack.c.h.b16 %v2403
        %v3912 = vunpack.c.l.b16 %v2404
        %v3913 = vunpack.c.h.b16 %v2404
        %v3914 = vunpack.c.l.b16 %v2405
        %v3915 = vunpack.c.h.b16 %v2405
        %v3916 = vunpack.c.l.b16 %v2406
        %v3917 = vunpack.c.h.b16 %v2406
        %v3918 = vunpack.c.l.b16 %v2407
        %v3919 = vunpack.c.h.b16 %v2407
        %v3920 = vunpack.c.l.b16 %v2408
        %v3921 = vunpack.c.h.b16 %v2408
        %v3922 = vunpack.c.l.b16 %v2409
        %v3923 = vunpack.c.h.b16 %v2409
        %v3924 = vunpack.c.l.b16 %v2410
        %v3925 = vunpack.c.h.b16 %v2410
        %v3926 = vunpack.c.l.b16 %v2411
        %v3927 = vunpack.c.h.b16 %v2411
        %v3928 = vunpack.c.l.b16 %v2412
        %v3929 = vunpack.c.h.b16 %v2412
        %v3930 = vunpack.c.l.b16 %v2413
        %v3931 = vunpack.c.h.b16 %v2413
        %v3932 = vunpack.c.l.b16 %v2414
        %v3933 = vunpack.c.h.b16 %v2414
        %v3934 = vunpack.c.l.b16 %v2415
        %v3935 = vunpack.c.h.b16 %v2415
        %v3936 = vunpack.c.l.b16 %v2416
        %v3937 = vunpack.c.h.b16 %v2416
        %v3938 = vunpack.c.l.b16 %v2417
        %v3939 = vunpack.c.h.b16 %v2417
        %v3940 = vunpack.c.l.b16 %v2418
        %v3941 = vunpack.c.h.b16 %v2418
        %v3942 = vunpack.c.l.b16 %v2419
        %v3943 = vunpack.c.h.b16 %v2419
        %v3944 = vunpack.c.l.b16 %v2420
        %v3945 = vunpack.c.h.b16 %v2420
        %v3946 = vunpack.c.l.b16 %v2421
        %v3947 = vunpack.c.h.b16 %v2421
        %v3948 = vunpack.c.l.b16 %v2422
        %v3949 = vunpack.c.h.b16 %v2422
        %v3950 = vunpack.c.l.b16 %v2423
        %v3951 = vunpack.c.h.b16 %v2423
        %v3952 = vunpack.c.l.b16 %v2424
        %v3953 = vunpack.c.h.b16 %v2424
        %v3954 = vunpack.c.l.b16 %v2425
        %v3955 = vunpack.c.h.b16 %v2425
        %v3956 = vunpack.c.l.b16 %v2426
        %v3957 = vunpack.c.h.b16 %v2426
        %v3958 = vunpack.c.l.b16 %v2427
        %v3959 = vunpack.c.h.b16 %v2427
        %v3960 = vunpack.c.l.b16 %v2428
        %v3961 = vunpack.c.h.b16 %v2428
        %v3962 = vunpack.c.l.b16 %v2429
        %v3963 = vunpack.c.h.b16 %v2429
        %v3964 = vunpack.c.l.b16 %v2430
        %v3965 = vunpack.c.h.b16 %v2430
        %v3966 = vunpack.c.l.b16 %v2431
        %v3967 = vunpack.c.h.b16 %v2431
        %v3968 = vpack.c.b16 %v3460, %v3456
        %v3969 = vpack.c.b16 %v3461, %v3457
        %v3970 = vpack.c.b16 %v3462, %v3458
        %v3971 = vpack.c.b16 %v3463, %v3459
        %v3972 = vpack.c.b16 %v3468, %v3464
        %v3973 = vpack.c.b16 %v3469, %v3465
        %v3974 = vpack.c.b16 %v3470, %v3466
        %v3975 = vpack.c.b16 %v3471, %v3467
        %v3976 = vpack.c.b16 %v3476, %v3472
        %v3977 = vpack.c.b16 %v3477, %v3473
        %v3978 = vpack.c.b16 %v3478, %v3474
        %v3979 = vpack.c.b16 %v3479, %v3475
        %v3980 = vpack.c.b16 %v3484, %v3480
        %v3981 = vpack.c.b16 %v3485, %v3481
        %v3982 = vpack.c.b16 %v3486, %v3482
        %v3983 = vpack.c.b16 %v3487, %v3483
        %v3984 = vpack.c.b16 %v3492, %v3488
        %v3985 = vpack.c.b16 %v3493, %v3489
        %v3986 = vpack.c.b16 %v3494, %v3490
        %v3987 = vpack.c.b16 %v3495, %v3491
        %v3988 = vpack.c.b16 %v3500, %v3496
        %v3989 = vpack.c.b16 %v3501, %v3497
        %v3990 = vpack.c.b16 %v3502, %v3498
        %v3991 = vpack.c.b16 %v3503, %v3499
        %v3992 = vpack.c.b16 %v3508, %v3504
        %v3993 = vpack.c.b16 %v3509, %v3505
        %v3994 = vpack.c.b16 %v3510, %v3506
        %v3995 = vpack.c.b16 %v3511, %v3507
        %v3996 = vpack.c.b16 %v3516, %v3512
        %v3997 = vpack.c.b16 %v3517, %v3513
        %v3998 = vpack.c.b16 %v3518, %v3514
        %v3999 = vpack.c.b16 %v3519, %v3515
        %v4000 = vpack.c.b16 %v3524, %v3520
        %v4001 = vpack.c.b16 %v3525, %v3521
        %v4002 = vpack.c.b16 %v3526, %v3522
        %v4003 = vpack.c.b16 %v3527, %v3523
        %v4004 = vpack.c.b16 %v3532, %v3528
        %v4005 = vpack.c.b16 %v3533, %v3529
        %v4006 = vpack.c.b16 %v3534, %v3530
        %v4007 = vpack.c.b16 %v3535, %v3531
        %v4008 = vpack.c.b16 %v3540, %v3536
        %v4009 = vpack.c.b16 %v3541, %v3537
        %v4010 = vpack.c.b16 %v3542, %v3538
        %v4011 = vpack.c.b16 %v3543, %v3539
        %v4012 = vpack.c.b16 %v3548, %v3544
        %v4013 = vpack.c.b16 %v3549, %v3545
        %v4014 = vpack.c.b16 %v3550, %v3546
        %v4015 = vpack.c.b16 %v3551, %v3547
        %v4016 = vpack.c.b16 %v3556, %v3552
        %v4017 = vpack.c.b16 %v3557, %v3553
        %v4018 = vpack.c.b16 %v3558, %v3554
        %v4019 = vpack.c.b16 %v3559, %v3555
        %v4020 = vpack.c.b16 %v3564, %v3560
        %v4021 = vpack.c.b16 %v3565, %v3561
        %v4022 = vpack.c.b16 %v3566, %v3562
        %v4023 = vpack.c.b16 %v3567, %v3563
        %v4024 = vpack.c.b16 %v3572, %v3568
        %v4025 = vpack.c.b16 %v3573, %v3569
        %v4026 = vpack.c.b16 %v3574, %v3570
        %v4027 = vpack.c.b16 %v3575, %v3571
        %v4028 = vpack.c.b16 %v3580, %v3576
        %v4029 = vpack.c.b16 %v3581, %v3577
        %v4030 = vpack.c.b16 %v3582, %v3578
        %v4031 = vpack.c.b16 %v3583, %v3579
        %v4032 = vpack.c.b16 %v3588, %v3584
        %v4033 = vpack.c.b16 %v3589, %v3585
        %v4034 = vpack.c.b16 %v3590, %v3586
        %v4035 = vpack.c.b16 %v3591, %v3587
        %v4036 = vpack.c.b16 %v3596, %v3592
        %v4037 = vpack.c.b16 %v3597, %v3593
        %v4038 = vpack.c.b16 %v3598, %v3594
        %v4039 = vpack.c.b16 %v3599, %v3595
        %v4040 = vpack.c.b16 %v3604, %v3600
        %v4041 = vpack.c.b16 %v3605, %v3601
        %v4042 = vpack.c.b16 %v3606, %v3602
        %v4043 = vpack.c.b16 %v3607, %v3603
        %v4044 = vpack.c.b16 %v3612, %v3608
        %v4045 = vpack.c.b16 %v3613, %v3609
        %v4046 = vpack.c.b16 %v3614, %v3610
        %v4047 = vpack.c.b16 %v3615, %v3611
        %v4048 = vpack.c.b16 %v3620, %v3616
        %v4049 = vpack.c.b16 %v3621, %v3617
        %v4050 = vpack.c.b16 %v3622, %v3618
        %v4051 = vpack.c.b16 %v3623, %v3619
        %v4052 = vpack.c.b16 %v3628, %v3624
        %v4053 = vpack.c.b16 %v3629, %v3625
        %v4054 = vpack.c.b16 %v3630, %v3626
        %v4055 = vpack.c.b16 %v3631, %v3627
        %v4056 = vpack.c.b16 %v3636, %v3632
        %v4057 = vpack.c.b16 %v3637, %v3633
        %v4058 = vpack.c.b16 %v3638, %v3634
        %v4059 = vpack.c.b16 %v3639, %v3635
        %v4060 = vpack.c.b16 %v3644, %v3640
        %v4061 = vpack.c.b16 %v3645, %v3641
        %v4062 = vpack.c.b16 %v3646, %v3642
        %v4063 = vpack.c.b16 %v3647, %v3643
        %v4064 = vpack.c.b16 %v3652, %v3648
        %v4065 = vpack.c.b16 %v3653, %v3649
        %v4066 = vpack.c.b16 %v3654, %v3650
        %v4067 = vpack.c.b16 %v3655, %v3651
        %v4068 = vpack.c.b16 %v3660, %v3656
        %v4069 = vpack.c.b16 %v3661, %v3657
        %v4070 = vpack.c.b16 %v3662, %v3658
        %v4071 = vpack.c.b16 %v3663, %v3659
        %v4072 = vpack.c.b16 %v3668, %v3664
        %v4073 = vpack.c.b16 %v3669, %v3665
        %v4074 = vpack.c.b16 %v3670, %v3666
        %v4075 = vpack.c.b16 %v3671, %v3667
        %v4076 = vpack.c.b16 %v3676, %v3672
        %v4077 = vpack.c.b16 %v3677, %v3673
        %v4078 = vpack.c.b16 %v3678, %v3674
        %v4079 = vpack.c.b16 %v3679, %v3675
        %v4080 = vpack.c.b16 %v3684, %v3680
        %v4081 = vpack.c.b16 %v3685, %v3681
        %v4082 = vpack.c.b16 %v3686, %v3682
        %v4083 = vpack.c.b16 %v3687, %v3683
        %v4084 = vpack.c.b16 %v3692, %v3688
        %v4085 = vpack.c.b16 %v3693, %v3689
        %v4086 = vpack.c.b16 %v3694, %v3690
        %v4087 = vpack.c.b16 %v3695, %v3691
        %v4088 = vpack.c.b16 %v3700, %v3696
        %v4089 = vpack.c.b16 %v3701, %v3697
        %v4090 = vpack.c.b16 %v3702, %v3698
        %v4091 = vpack.c.b16 %v3703, %v3699
        %v4092 = vpack.c.b16 %v3708, %v3704
        %v4093 = vpack.c.b16 %v3709, %v3705
        %v4094 = vpack.c.b16 %v3710, %v3706
        %v4095 = vpack.c.b16 %v3711, %v3707
        %v4096 = vpack.c.b16 %v3716, %v3712
        %v4097 = vpack.c.b16 %v3717, %v3713
        %v4098 = vpack.c.b16 %v3718, %v3714
        %v4099 = vpack.c.b16 %v3719, %v3715
        %v4100 = vpack.c.b16 %v3724, %v3720
        %v4101 = vpack.c.b16 %v3725, %v3721
        %v4102 = vpack.c.b16 %v3726, %v3722
        %v4103 = vpack.c.b16 %v3727, %v3723
        %v4104 = vpack.c.b16 %v3732, %v3728
        %v4105 = vpack.c.b16 %v3733, %v3729
        %v4106 = vpack.c.b16 %v3734, %v3730
        %v4107 = vpack.c.b16 %v3735, %v3731
        %v4108 = vpack.c.b16 %v3740, %v3736
        %v4109 = vpack.c.b16 %v3741, %v3737
        %v4110 = vpack.c.b16 %v3742, %v3738
        %v4111 = vpack.c.b16 %v3743, %v3739
        %v4112 = vpack.c.b16 %v3748, %v3744
        %v4113 = vpack.c.b16 %v3749, %v3745
        %v4114 = vpack.c.b16 %v3750, %v3746
        %v4115 = vpack.c.b16 %v3751, %v3747
        %v4116 = vpack.c.b16 %v3756, %v3752
        %v4117 = vpack.c.b16 %v3757, %v3753
        %v4118 = vpack.c.b16 %v3758, %v3754
        %v4119 = vpack.c.b16 %v3759, %v3755
        %v4120 = vpack.c.b16 %v3764, %v3760
        %v4121 = vpack.c.b16 %v3765, %v3761
        %v4122 = vpack.c.b16 %v3766, %v3762
        %v4123 = vpack.c.b16 %v3767, %v3763
        %v4124 = vpack.c.b16 %v3772, %v3768
        %v4125 = vpack.c.b16 %v3773, %v3769
        %v4126 = vpack.c.b16 %v3774, %v3770
        %v4127 = vpack.c.b16 %v3775, %v3771
        %v4128 = vpack.c.b16 %v3780, %v3776
        %v4129 = vpack.c.b16 %v3781, %v3777
        %v4130 = vpack.c.b16 %v3782, %v3778
        %v4131 = vpack.c.b16 %v3783, %v3779
        %v4132 = vpack.c.b16 %v3788, %v3784
        %v4133 = vpack.c.b16 %v3789, %v3785
        %v4134 = vpack.c.b16 %v3790, %v3786
        %v4135 = vpack.c.b16 %v3791, %v3787
        %v4136 = vpack.c.b16 %v3796, %v3792
        %v4137 = vpack.c.b16 %v3797, %v3793
        %v4138 = vpack.c.b16 %v3798, %v3794
        %v4139 = vpack.c.b16 %v3799, %v3795
        %v4140 = vpack.c.b16 %v3804, %v3800
        %v4141 = vpack.c.b16 %v3805, %v3801
        %v4142 = vpack.c.b16 %v3806, %v3802
        %v4143 = vpack.c.b16 %v3807, %v3803
        %v4144 = vpack.c.b16 %v3812, %v3808
        %v4145 = vpack.c.b16 %v3813, %v3809
        %v4146 = vpack.c.b16 %v3814, %v3810
        %v4147 = vpack.c.b16 %v3815, %v3811
        %v4148 = vpack.c.b16 %v3820, %v3816
        %v4149 = vpack.c.b16 %v3821, %v3817
        %v4150 = vpack.c.b16 %v3822, %v3818
        %v4151 = vpack.c.b16 %v3823, %v3819
        %v4152 = vpack.c.b16 %v3828, %v3824
        %v4153 = vpack.c.b16 %v3829, %v3825
        %v4154 = vpack.c.b16 %v3830, %v3826
        %v4155 = vpack.c.b16 %v3831, %v3827
        %v4156 = vpack.c.b16 %v3836, %v3832
        %v4157 = vpack.c.b16 %v3837, %v3833
        %v4158 = vpack.c.b16 %v3838, %v3834
        %v4159 = vpack.c.b16 %v3839, %v3835
        %v4160 = vpack.c.b16 %v3844, %v3840
        %v4161 = vpack.c.b16 %v3845, %v3841
        %v4162 = vpack.c.b16 %v3846, %v3842
        %v4163 = vpack.c.b16 %v3847, %v3843
        %v4164 = vpack.c.b16 %v3852, %v3848
        %v4165 = vpack.c.b16 %v3853, %v3849
        %v4166 = vpack.c.b16 %v3854, %v3850
        %v4167 = vpack.c.b16 %v3855, %v3851
        %v4168 = vpack.c.b16 %v3860, %v3856
        %v4169 = vpack.c.b16 %v3861, %v3857
        %v4170 = vpack.c.b16 %v3862, %v3858
        %v4171 = vpack.c.b16 %v3863, %v3859
        %v4172 = vpack.c.b16 %v3868, %v3864
        %v4173 = vpack.c.b16 %v3869, %v3865
        %v4174 = vpack.c.b16 %v3870, %v3866
        %v4175 = vpack.c.b16 %v3871, %v3867
        %v4176 = vpack.c.b16 %v3876, %v3872
        %v4177 = vpack.c.b16 %v3877, %v3873
        %v4178 = vpack.c.b16 %v3878, %v3874
        %v4179 = vpack.c.b16 %v3879, %v3875
        %v4180 = vpack.c.b16 %v3884, %v3880
        %v4181 = vpack.c.b16 %v3885, %v3881
        %v4182 = vpack.c.b16 %v3886, %v3882
        %v4183 = vpack.c.b16 %v3887, %v3883
        %v4184 = vpack.c.b16 %v3892, %v3888
        %v4185 = vpack.c.b16 %v3893, %v3889
        %v4186 = vpack.c.b16 %v3894, %v3890
        %v4187 = vpack.c.b16 %v3895, %v3891
        %v4188 = vpack.c.b16 %v3900, %v3896
        %v4189 = vpack.c.b16 %v3901, %v3897
        %v4190 = vpack.c.b16 %v3902, %v3898
        %v4191 = vpack.c.b16 %v3903, %v3899
        %v4192 = vpack.c.b16 %v3908, %v3904
        %v4193 = vpack.c.b16 %v3909, %v3905
        %v4194 = vpack.c.b16 %v3910, %v3906
        %v4195 = vpack.c.b16 %v3911, %v3907
        %v4196 = vpack.c.b16 %v3916, %v3912
        %v4197 = vpack.c.b16 %v3917, %v3913
        %v4198 = vpack.c.b16 %v3918, %v3914
        %v4199 = vpack.c.b16 %v3919, %v3915
        %v4200 = vpack.c.b16 %v3924, %v3920
        %v4201 = vpack.c.b16 %v3925, %v3921
        %v4202 = vpack.c.b16 %v3926, %v3922
        %v4203 = vpack.c.b16 %v3927, %v3923
        %v4204 = vpack.c.b16 %v3932, %v3928
        %v4205 = vpack.c.b16 %v3933, %v3929
        %v4206 = vpack.c.b16 %v3934, %v3930
        %v4207 = vpack.c.b16 %v3935, %v3931
        %v4208 = vpack.c.b16 %v3940, %v3936
        %v4209 = vpack.c.b16 %v3941, %v3937
        %v4210 = vpack.c.b16 %v3942, %v3938
        %v4211 = vpack.c.b16 %v3943, %v3939
        %v4212 = vpack.c.b16 %v3948, %v3944
        %v4213 = vpack.c.b16 %v3949, %v3945
        %v4214 = vpack.c.b16 %v3950, %v3946
        %v4215 = vpack.c.b16 %v3951, %v3947
        %v4216 = vpack.c.b16 %v3956, %v3952
        %v4217 = vpack.c.b16 %v3957, %v3953
        %v4218 = vpack.c.b16 %v3958, %v3954
        %v4219 = vpack.c.b16 %v3959, %v3955
        %v4220 = vpack.c.b16 %v3964, %v3960
        %v4221 = vpack.c.b16 %v3965, %v3961
        %v4222 = vpack.c.b16 %v3966, %v3962
        %v4223 = vpack.c.b16 %v3967, %v3963
        %4480 = vmatprep.subr.bf16.mxu0 0
        %4481 = vmatpush1.bf16.msra.mxu0 %v2151
        %4482 = vmatprep.subr.bf16.mxu0 0
        %4483 = vmatpush1.bf16.msra.mxu0 %v2150
        %4484 = vmatprep.subr.bf16.mxu0 0
        %4485 = vmatpush1.bf16.msra.mxu0 %v2149
        %4486 = vmatprep.subr.bf16.mxu0 0
        %4487 = vmatpush1.bf16.msra.mxu0 %v2148
        %4488 = vmatprep.subr.bf16.mxu0 0
        %4489 = vmatpush1.bf16.msra.mxu0 %v2147
        %4490 = vmatprep.subr.bf16.mxu0 0
        %4491 = vmatpush1.bf16.msra.mxu0 %v2146
        %4492 = vmatprep.subr.bf16.mxu0 0
        %4493 = vmatpush1.bf16.msra.mxu0 %v2145
        %4494 = vmatprep.subr.bf16.mxu0 0
        %4495 = vmatpush1.bf16.msra.mxu0 %v2144
        %4496 = vmatprep.subr.bf16.mxu0 0
        %4497 = vmatpush2.bf16.msra.mxu0 %v2159
        %4498 = vmatprep.subr.bf16.mxu0 0
        %4499 = vmatpush2.bf16.msra.mxu0 %v2158
        %4500 = vmatprep.subr.bf16.mxu0 0
        %4501 = vmatpush2.bf16.msra.mxu0 %v2157
        %4502 = vmatprep.subr.bf16.mxu0 0
        %4503 = vmatpush2.bf16.msra.mxu0 %v2156
        %4504 = vmatprep.subr.bf16.mxu0 0
        %4505 = vmatpush2.bf16.msra.mxu0 %v2155
        %4506 = vmatprep.subr.bf16.mxu0 0
        %4507 = vmatpush2.bf16.msra.mxu0 %v2154
        %4508 = vmatprep.subr.bf16.mxu0 0
        %4509 = vmatpush2.bf16.msra.mxu0 %v2153
        %4510 = vmatprep.subr.bf16.mxu0 0
        %4511 = vmatpush2.bf16.msra.mxu0 %v2152
        %4512 = vmatprep.mubr.bf16.mxu0 %v3969
        %4513 = vmatmul.mubr.bf16.gmra.mxu0 %v3968
        %v4514 = vpop.f32.mrf.mxu0
        %v4515 = vadd.f32 %v2563, %v4514
        %v4516 = vpop.f32.mrf.mxu0
        %v4517 = vpop.f32.mrf.mxu0
        %v4518 = vadd.f32 %v2568, %v4517
        %v4519 = vpop.f32.mrf.mxu0
        %4520 = vmatprep.mubr.bf16.mxu0 %v3973
        %4521 = vmatmul.mubr.bf16.gmra.mxu0 %v3972
        %v4522 = vpop.f32.mrf.mxu0
        %v4523 = vadd.f32 %v2573, %v4522
        %v4524 = vpop.f32.mrf.mxu0
        %v4525 = vpop.f32.mrf.mxu0
        %v4526 = vadd.f32 %v2578, %v4525
        %v4527 = vpop.f32.mrf.mxu0
        %4528 = vmatprep.mubr.bf16.mxu0 %v3977
        %4529 = vmatmul.mubr.bf16.gmra.mxu0 %v3976
        %v4530 = vpop.f32.mrf.mxu0
        %v4531 = vadd.f32 %v2583, %v4530
        %v4532 = vpop.f32.mrf.mxu0
        %v4533 = vpop.f32.mrf.mxu0
        %v4534 = vadd.f32 %v2588, %v4533
        %v4535 = vpop.f32.mrf.mxu0
        %4536 = vmatprep.mubr.bf16.mxu0 %v3981
        %4537 = vmatmul.mubr.bf16.gmra.mxu0 %v3980
        %v4538 = vpop.f32.mrf.mxu0
        %v4539 = vadd.f32 %v2593, %v4538
        %v4540 = vpop.f32.mrf.mxu0
        %v4541 = vpop.f32.mrf.mxu0
        %v4542 = vadd.f32 %v2598, %v4541
        %v4543 = vpop.f32.mrf.mxu0
        %4544 = vmatprep.mubr.bf16.mxu0 %v3985
        %4545 = vmatmul.mubr.bf16.gmra.mxu0 %v3984
        %v4546 = vpop.f32.mrf.mxu0
        %v4547 = vadd.f32 %v2603, %v4546
        %v4548 = vpop.f32.mrf.mxu0
        %v4549 = vpop.f32.mrf.mxu0
        %v4550 = vadd.f32 %v2608, %v4549
        %v4551 = vpop.f32.mrf.mxu0
        %4552 = vmatprep.mubr.bf16.mxu0 %v3989
        %4553 = vmatmul.mubr.bf16.gmra.mxu0 %v3988
        %v4554 = vpop.f32.mrf.mxu0
        %v4555 = vadd.f32 %v2613, %v4554
        %v4556 = vpop.f32.mrf.mxu0
        %v4557 = vpop.f32.mrf.mxu0
        %v4558 = vadd.f32 %v2618, %v4557
        %v4559 = vpop.f32.mrf.mxu0
        %4560 = vmatprep.mubr.bf16.mxu0 %v3993
        %4561 = vmatmul.mubr.bf16.gmra.mxu0 %v3992
        %v4562 = vpop.f32.mrf.mxu0
        %v4563 = vadd.f32 %v2623, %v4562
        %v4564 = vpop.f32.mrf.mxu0
        %v4565 = vpop.f32.mrf.mxu0
        %v4566 = vadd.f32 %v2628, %v4565
        %v4567 = vpop.f32.mrf.mxu0
        %4568 = vmatprep.mubr.bf16.mxu0 %v3997
        %4569 = vmatmul.mubr.bf16.gmra.mxu0 %v3996
        %v4570 = vpop.f32.mrf.mxu0
        %v4571 = vadd.f32 %v2633, %v4570
        %v4572 = vpop.f32.mrf.mxu0
        %v4573 = vpop.f32.mrf.mxu0
        %v4574 = vadd.f32 %v2638, %v4573
        %v4575 = vpop.f32.mrf.mxu0
        %4576 = vmatprep.mubr.bf16.mxu0 %v4001
        %4577 = vmatmul.mubr.bf16.gmra.mxu0 %v4000
        %v4578 = vpop.f32.mrf.mxu0
        %v4579 = vadd.f32 %v2643, %v4578
        %v4580 = vpop.f32.mrf.mxu0
        %v4581 = vpop.f32.mrf.mxu0
        %v4582 = vadd.f32 %v2648, %v4581
        %v4583 = vpop.f32.mrf.mxu0
        %4584 = vmatprep.mubr.bf16.mxu0 %v4005
        %4585 = vmatmul.mubr.bf16.gmra.mxu0 %v4004
        %v4586 = vpop.f32.mrf.mxu0
        %v4587 = vadd.f32 %v2653, %v4586
        %v4588 = vpop.f32.mrf.mxu0
        %v4589 = vpop.f32.mrf.mxu0
        %v4590 = vadd.f32 %v2658, %v4589
        %v4591 = vpop.f32.mrf.mxu0
        %4592 = vmatprep.mubr.bf16.mxu0 %v4009
        %4593 = vmatmul.mubr.bf16.gmra.mxu0 %v4008
        %v4594 = vpop.f32.mrf.mxu0
        %v4595 = vadd.f32 %v2663, %v4594
        %v4596 = vpop.f32.mrf.mxu0
        %v4597 = vpop.f32.mrf.mxu0
        %v4598 = vadd.f32 %v2668, %v4597
        %v4599 = vpop.f32.mrf.mxu0
        %4600 = vmatprep.mubr.bf16.mxu0 %v4013
        %4601 = vmatmul.mubr.bf16.gmra.mxu0 %v4012
        %v4602 = vpop.f32.mrf.mxu0
        %v4603 = vadd.f32 %v2673, %v4602
        %v4604 = vpop.f32.mrf.mxu0
        %v4605 = vpop.f32.mrf.mxu0
        %v4606 = vadd.f32 %v2678, %v4605
        %v4607 = vpop.f32.mrf.mxu0
        %4608 = vmatprep.mubr.bf16.mxu0 %v4017
        %4609 = vmatmul.mubr.bf16.gmra.mxu0 %v4016
        %v4610 = vpop.f32.mrf.mxu0
        %v4611 = vadd.f32 %v2683, %v4610
        %v4612 = vpop.f32.mrf.mxu0
        %v4613 = vpop.f32.mrf.mxu0
        %v4614 = vadd.f32 %v2688, %v4613
        %v4615 = vpop.f32.mrf.mxu0
        %4616 = vmatprep.mubr.bf16.mxu0 %v4021
        %4617 = vmatmul.mubr.bf16.gmra.mxu0 %v4020
        %v4618 = vpop.f32.mrf.mxu0
        %v4619 = vadd.f32 %v2693, %v4618
        %v4620 = vpop.f32.mrf.mxu0
        %v4621 = vpop.f32.mrf.mxu0
        %v4622 = vadd.f32 %v2698, %v4621
        %v4623 = vpop.f32.mrf.mxu0
        %4624 = vmatprep.mubr.bf16.mxu0 %v4025
        %4625 = vmatmul.mubr.bf16.gmra.mxu0 %v4024
        %v4626 = vpop.f32.mrf.mxu0
        %v4627 = vadd.f32 %v2703, %v4626
        %v4628 = vpop.f32.mrf.mxu0
        %v4629 = vpop.f32.mrf.mxu0
        %v4630 = vadd.f32 %v2708, %v4629
        %v4631 = vpop.f32.mrf.mxu0
        %4632 = vmatprep.mubr.bf16.mxu0 %v4029
        %4633 = vmatmul.mubr.bf16.gmra.mxu0 %v4028
        %v4634 = vpop.f32.mrf.mxu0
        %v4635 = vadd.f32 %v2713, %v4634
        %v4636 = vpop.f32.mrf.mxu0
        %v4637 = vpop.f32.mrf.mxu0
        %v4638 = vadd.f32 %v2718, %v4637
        %v4639 = vpop.f32.mrf.mxu0
        %4640 = vmatprep.mubr.bf16.mxu0 %v4033
        %4641 = vmatmul.mubr.bf16.gmra.mxu0 %v4032
        %v4642 = vpop.f32.mrf.mxu0
        %v4643 = vadd.f32 %v2723, %v4642
        %v4644 = vpop.f32.mrf.mxu0
        %v4645 = vpop.f32.mrf.mxu0
        %v4646 = vadd.f32 %v2728, %v4645
        %v4647 = vpop.f32.mrf.mxu0
        %4648 = vmatprep.mubr.bf16.mxu0 %v4037
        %4649 = vmatmul.mubr.bf16.gmra.mxu0 %v4036
        %v4650 = vpop.f32.mrf.mxu0
        %v4651 = vadd.f32 %v2733, %v4650
        %v4652 = vpop.f32.mrf.mxu0
        %v4653 = vpop.f32.mrf.mxu0
        %v4654 = vadd.f32 %v2738, %v4653
        %v4655 = vpop.f32.mrf.mxu0
        %4656 = vmatprep.mubr.bf16.mxu0 %v4041
        %4657 = vmatmul.mubr.bf16.gmra.mxu0 %v4040
        %v4658 = vpop.f32.mrf.mxu0
        %v4659 = vadd.f32 %v2743, %v4658
        %v4660 = vpop.f32.mrf.mxu0
        %v4661 = vpop.f32.mrf.mxu0
        %v4662 = vadd.f32 %v2748, %v4661
        %v4663 = vpop.f32.mrf.mxu0
        %4664 = vmatprep.mubr.bf16.mxu0 %v4045
        %4665 = vmatmul.mubr.bf16.gmra.mxu0 %v4044
        %v4666 = vpop.f32.mrf.mxu0
        %v4667 = vadd.f32 %v2753, %v4666
        %v4668 = vpop.f32.mrf.mxu0
        %v4669 = vpop.f32.mrf.mxu0
        %v4670 = vadd.f32 %v2758, %v4669
        %v4671 = vpop.f32.mrf.mxu0
        %4672 = vmatprep.mubr.bf16.mxu0 %v4049
        %4673 = vmatmul.mubr.bf16.gmra.mxu0 %v4048
        %v4674 = vpop.f32.mrf.mxu0
        %v4675 = vadd.f32 %v2763, %v4674
        %v4676 = vpop.f32.mrf.mxu0
        %v4677 = vpop.f32.mrf.mxu0
        %v4678 = vadd.f32 %v2768, %v4677
        %v4679 = vpop.f32.mrf.mxu0
        %4680 = vmatprep.mubr.bf16.mxu0 %v4053
        %4681 = vmatmul.mubr.bf16.gmra.mxu0 %v4052
        %v4682 = vpop.f32.mrf.mxu0
        %v4683 = vadd.f32 %v2773, %v4682
        %v4684 = vpop.f32.mrf.mxu0
        %v4685 = vpop.f32.mrf.mxu0
        %v4686 = vadd.f32 %v2778, %v4685
        %v4687 = vpop.f32.mrf.mxu0
        %4688 = vmatprep.mubr.bf16.mxu0 %v4057
        %4689 = vmatmul.mubr.bf16.gmra.mxu0 %v4056
        %v4690 = vpop.f32.mrf.mxu0
        %v4691 = vadd.f32 %v2783, %v4690
        %v4692 = vpop.f32.mrf.mxu0
        %v4693 = vpop.f32.mrf.mxu0
        %v4694 = vadd.f32 %v2788, %v4693
        %v4695 = vpop.f32.mrf.mxu0
        %4696 = vmatprep.mubr.bf16.mxu0 %v4061
        %4697 = vmatmul.mubr.bf16.gmra.mxu0 %v4060
        %v4698 = vpop.f32.mrf.mxu0
        %v4699 = vadd.f32 %v2793, %v4698
        %v4700 = vpop.f32.mrf.mxu0
        %v4701 = vpop.f32.mrf.mxu0
        %v4702 = vadd.f32 %v2798, %v4701
        %v4703 = vpop.f32.mrf.mxu0
        %4704 = vmatprep.mubr.bf16.mxu0 %v4065
        %4705 = vmatmul.mubr.bf16.gmra.mxu0 %v4064
        %v4706 = vpop.f32.mrf.mxu0
        %v4707 = vadd.f32 %v2803, %v4706
        %v4708 = vpop.f32.mrf.mxu0
        %v4709 = vpop.f32.mrf.mxu0
        %v4710 = vadd.f32 %v2808, %v4709
        %v4711 = vpop.f32.mrf.mxu0
        %4712 = vmatprep.mubr.bf16.mxu0 %v4069
        %4713 = vmatmul.mubr.bf16.gmra.mxu0 %v4068
        %v4714 = vpop.f32.mrf.mxu0
        %v4715 = vadd.f32 %v2813, %v4714
        %v4716 = vpop.f32.mrf.mxu0
        %v4717 = vpop.f32.mrf.mxu0
        %v4718 = vadd.f32 %v2818, %v4717
        %v4719 = vpop.f32.mrf.mxu0
        %4720 = vmatprep.mubr.bf16.mxu0 %v4073
        %4721 = vmatmul.mubr.bf16.gmra.mxu0 %v4072
        %v4722 = vpop.f32.mrf.mxu0
        %v4723 = vadd.f32 %v2823, %v4722
        %v4724 = vpop.f32.mrf.mxu0
        %v4725 = vpop.f32.mrf.mxu0
        %v4726 = vadd.f32 %v2828, %v4725
        %v4727 = vpop.f32.mrf.mxu0
        %4728 = vmatprep.mubr.bf16.mxu0 %v4077
        %4729 = vmatmul.mubr.bf16.gmra.mxu0 %v4076
        %v4730 = vpop.f32.mrf.mxu0
        %v4731 = vadd.f32 %v2833, %v4730
        %v4732 = vpop.f32.mrf.mxu0
        %v4733 = vpop.f32.mrf.mxu0
        %v4734 = vadd.f32 %v2838, %v4733
        %v4735 = vpop.f32.mrf.mxu0
        %4736 = vmatprep.mubr.bf16.mxu0 %v4081
        %4737 = vmatmul.mubr.bf16.gmra.mxu0 %v4080
        %v4738 = vpop.f32.mrf.mxu0
        %v4739 = vadd.f32 %v2843, %v4738
        %v4740 = vpop.f32.mrf.mxu0
        %v4741 = vpop.f32.mrf.mxu0
        %v4742 = vadd.f32 %v2848, %v4741
        %v4743 = vpop.f32.mrf.mxu0
        %4744 = vmatprep.mubr.bf16.mxu0 %v4085
        %4745 = vmatmul.mubr.bf16.gmra.mxu0 %v4084
        %v4746 = vpop.f32.mrf.mxu0
        %v4747 = vadd.f32 %v2853, %v4746
        %v4748 = vpop.f32.mrf.mxu0
        %v4749 = vpop.f32.mrf.mxu0
        %v4750 = vadd.f32 %v2858, %v4749
        %v4751 = vpop.f32.mrf.mxu0
        %4752 = vmatprep.mubr.bf16.mxu0 %v4089
        %4753 = vmatmul.mubr.bf16.gmra.mxu0 %v4088
        %v4754 = vpop.f32.mrf.mxu0
        %v4755 = vadd.f32 %v2863, %v4754
        %v4756 = vpop.f32.mrf.mxu0
        %v4757 = vpop.f32.mrf.mxu0
        %v4758 = vadd.f32 %v2868, %v4757
        %v4759 = vpop.f32.mrf.mxu0
        %4760 = vmatprep.mubr.bf16.mxu0 %v4093
        %4761 = vmatmul.mubr.bf16.gmra.mxu0 %v4092
        %v4762 = vpop.f32.mrf.mxu0
        %v4763 = vadd.f32 %v2873, %v4762
        %v4764 = vpop.f32.mrf.mxu0
        %v4765 = vpop.f32.mrf.mxu0
        %v4766 = vadd.f32 %v2878, %v4765
        %v4767 = vpop.f32.mrf.mxu0
        %4768 = vmatprep.mubr.bf16.mxu0 %v4097
        %4769 = vmatmul.mubr.bf16.gmra.mxu0 %v4096
        %v4770 = vpop.f32.mrf.mxu0
        %v4771 = vadd.f32 %v2883, %v4770
        %v4772 = vpop.f32.mrf.mxu0
        %v4773 = vpop.f32.mrf.mxu0
        %v4774 = vadd.f32 %v2888, %v4773
        %v4775 = vpop.f32.mrf.mxu0
        %4776 = vmatprep.mubr.bf16.mxu0 %v4101
        %4777 = vmatmul.mubr.bf16.gmra.mxu0 %v4100
        %v4778 = vpop.f32.mrf.mxu0
        %v4779 = vadd.f32 %v2893, %v4778
        %v4780 = vpop.f32.mrf.mxu0
        %v4781 = vpop.f32.mrf.mxu0
        %v4782 = vadd.f32 %v2898, %v4781
        %v4783 = vpop.f32.mrf.mxu0
        %4784 = vmatprep.mubr.bf16.mxu0 %v4105
        %4785 = vmatmul.mubr.bf16.gmra.mxu0 %v4104
        %v4786 = vpop.f32.mrf.mxu0
        %v4787 = vadd.f32 %v2903, %v4786
        %v4788 = vpop.f32.mrf.mxu0
        %v4789 = vpop.f32.mrf.mxu0
        %v4790 = vadd.f32 %v2908, %v4789
        %v4791 = vpop.f32.mrf.mxu0
        %4792 = vmatprep.mubr.bf16.mxu0 %v4109
        %4793 = vmatmul.mubr.bf16.gmra.mxu0 %v4108
        %v4794 = vpop.f32.mrf.mxu0
        %v4795 = vadd.f32 %v2913, %v4794
        %v4796 = vpop.f32.mrf.mxu0
        %v4797 = vpop.f32.mrf.mxu0
        %v4798 = vadd.f32 %v2918, %v4797
        %v4799 = vpop.f32.mrf.mxu0
        %4800 = vmatprep.mubr.bf16.mxu0 %v4113
        %4801 = vmatmul.mubr.bf16.gmra.mxu0 %v4112
        %v4802 = vpop.f32.mrf.mxu0
        %v4803 = vadd.f32 %v2923, %v4802
        %v4804 = vpop.f32.mrf.mxu0
        %v4805 = vpop.f32.mrf.mxu0
        %v4806 = vadd.f32 %v2928, %v4805
        %v4807 = vpop.f32.mrf.mxu0
        %4808 = vmatprep.mubr.bf16.mxu0 %v4117
        %4809 = vmatmul.mubr.bf16.gmra.mxu0 %v4116
        %v4810 = vpop.f32.mrf.mxu0
        %v4811 = vadd.f32 %v2933, %v4810
        %v4812 = vpop.f32.mrf.mxu0
        %v4813 = vpop.f32.mrf.mxu0
        %v4814 = vadd.f32 %v2938, %v4813
        %v4815 = vpop.f32.mrf.mxu0
        %4816 = vmatprep.mubr.bf16.mxu0 %v4121
        %4817 = vmatmul.mubr.bf16.gmra.mxu0 %v4120
        %v4818 = vpop.f32.mrf.mxu0
        %v4819 = vadd.f32 %v2943, %v4818
        %v4820 = vpop.f32.mrf.mxu0
        %v4821 = vpop.f32.mrf.mxu0
        %v4822 = vadd.f32 %v2948, %v4821
        %v4823 = vpop.f32.mrf.mxu0
        %4824 = vmatprep.mubr.bf16.mxu0 %v4125
        %4825 = vmatmul.mubr.bf16.gmra.mxu0 %v4124
        %v4826 = vpop.f32.mrf.mxu0
        %v4827 = vadd.f32 %v2953, %v4826
        %v4828 = vpop.f32.mrf.mxu0
        %v4829 = vpop.f32.mrf.mxu0
        %v4830 = vadd.f32 %v2958, %v4829
        %v4831 = vpop.f32.mrf.mxu0
        %4832 = vmatprep.mubr.bf16.mxu0 %v4129
        %4833 = vmatmul.mubr.bf16.gmra.mxu0 %v4128
        %v4834 = vpop.f32.mrf.mxu0
        %v4835 = vadd.f32 %v2963, %v4834
        %v4836 = vpop.f32.mrf.mxu0
        %v4837 = vpop.f32.mrf.mxu0
        %v4838 = vadd.f32 %v2968, %v4837
        %v4839 = vpop.f32.mrf.mxu0
        %4840 = vmatprep.mubr.bf16.mxu0 %v4133
        %4841 = vmatmul.mubr.bf16.gmra.mxu0 %v4132
        %v4842 = vpop.f32.mrf.mxu0
        %v4843 = vadd.f32 %v2973, %v4842
        %v4844 = vpop.f32.mrf.mxu0
        %v4845 = vpop.f32.mrf.mxu0
        %v4846 = vadd.f32 %v2978, %v4845
        %v4847 = vpop.f32.mrf.mxu0
        %4848 = vmatprep.mubr.bf16.mxu0 %v4137
        %4849 = vmatmul.mubr.bf16.gmra.mxu0 %v4136
        %v4850 = vpop.f32.mrf.mxu0
        %v4851 = vadd.f32 %v2983, %v4850
        %v4852 = vpop.f32.mrf.mxu0
        %v4853 = vpop.f32.mrf.mxu0
        %v4854 = vadd.f32 %v2988, %v4853
        %v4855 = vpop.f32.mrf.mxu0
        %4856 = vmatprep.mubr.bf16.mxu0 %v4141
        %4857 = vmatmul.mubr.bf16.gmra.mxu0 %v4140
        %v4858 = vpop.f32.mrf.mxu0
        %v4859 = vadd.f32 %v2993, %v4858
        %v4860 = vpop.f32.mrf.mxu0
        %v4861 = vpop.f32.mrf.mxu0
        %v4862 = vadd.f32 %v2998, %v4861
        %v4863 = vpop.f32.mrf.mxu0
        %4864 = vmatprep.mubr.bf16.mxu0 %v4145
        %4865 = vmatmul.mubr.bf16.gmra.mxu0 %v4144
        %v4866 = vpop.f32.mrf.mxu0
        %v4867 = vadd.f32 %v3003, %v4866
        %v4868 = vpop.f32.mrf.mxu0
        %v4869 = vpop.f32.mrf.mxu0
        %v4870 = vadd.f32 %v3008, %v4869
        %v4871 = vpop.f32.mrf.mxu0
        %4872 = vmatprep.mubr.bf16.mxu0 %v4149
        %4873 = vmatmul.mubr.bf16.gmra.mxu0 %v4148
        %v4874 = vpop.f32.mrf.mxu0
        %v4875 = vadd.f32 %v3013, %v4874
        %v4876 = vpop.f32.mrf.mxu0
        %v4877 = vpop.f32.mrf.mxu0
        %v4878 = vadd.f32 %v3018, %v4877
        %v4879 = vpop.f32.mrf.mxu0
        %4880 = vmatprep.mubr.bf16.mxu0 %v4153
        %4881 = vmatmul.mubr.bf16.gmra.mxu0 %v4152
        %v4882 = vpop.f32.mrf.mxu0
        %v4883 = vadd.f32 %v3023, %v4882
        %v4884 = vpop.f32.mrf.mxu0
        %v4885 = vpop.f32.mrf.mxu0
        %v4886 = vadd.f32 %v3028, %v4885
        %v4887 = vpop.f32.mrf.mxu0
        %4888 = vmatprep.mubr.bf16.mxu0 %v4157
        %4889 = vmatmul.mubr.bf16.gmra.mxu0 %v4156
        %v4890 = vpop.f32.mrf.mxu0
        %v4891 = vadd.f32 %v3033, %v4890
        %v4892 = vpop.f32.mrf.mxu0
        %v4893 = vpop.f32.mrf.mxu0
        %v4894 = vadd.f32 %v3038, %v4893
        %v4895 = vpop.f32.mrf.mxu0
        %4896 = vmatprep.mubr.bf16.mxu0 %v4161
        %4897 = vmatmul.mubr.bf16.gmra.mxu0 %v4160
        %v4898 = vpop.f32.mrf.mxu0
        %v4899 = vadd.f32 %v3043, %v4898
        %v4900 = vpop.f32.mrf.mxu0
        %v4901 = vpop.f32.mrf.mxu0
        %v4902 = vadd.f32 %v3048, %v4901
        %v4903 = vpop.f32.mrf.mxu0
        %4904 = vmatprep.mubr.bf16.mxu0 %v4165
        %4905 = vmatmul.mubr.bf16.gmra.mxu0 %v4164
        %v4906 = vpop.f32.mrf.mxu0
        %v4907 = vadd.f32 %v3053, %v4906
        %v4908 = vpop.f32.mrf.mxu0
        %v4909 = vpop.f32.mrf.mxu0
        %v4910 = vadd.f32 %v3058, %v4909
        %v4911 = vpop.f32.mrf.mxu0
        %4912 = vmatprep.mubr.bf16.mxu0 %v4169
        %4913 = vmatmul.mubr.bf16.gmra.mxu0 %v4168
        %v4914 = vpop.f32.mrf.mxu0
        %v4915 = vadd.f32 %v3063, %v4914
        %v4916 = vpop.f32.mrf.mxu0
        %v4917 = vpop.f32.mrf.mxu0
        %v4918 = vadd.f32 %v3068, %v4917
        %v4919 = vpop.f32.mrf.mxu0
        %4920 = vmatprep.mubr.bf16.mxu0 %v4173
        %4921 = vmatmul.mubr.bf16.gmra.mxu0 %v4172
        %v4922 = vpop.f32.mrf.mxu0
        %v4923 = vadd.f32 %v3073, %v4922
        %v4924 = vpop.f32.mrf.mxu0
        %v4925 = vpop.f32.mrf.mxu0
        %v4926 = vadd.f32 %v3078, %v4925
        %v4927 = vpop.f32.mrf.mxu0
        %4928 = vmatprep.mubr.bf16.mxu0 %v4177
        %4929 = vmatmul.mubr.bf16.gmra.mxu0 %v4176
        %v4930 = vpop.f32.mrf.mxu0
        %v4931 = vadd.f32 %v3083, %v4930
        %v4932 = vpop.f32.mrf.mxu0
        %v4933 = vpop.f32.mrf.mxu0
        %v4934 = vadd.f32 %v3088, %v4933
        %v4935 = vpop.f32.mrf.mxu0
        %4936 = vmatprep.mubr.bf16.mxu0 %v4181
        %4937 = vmatmul.mubr.bf16.gmra.mxu0 %v4180
        %v4938 = vpop.f32.mrf.mxu0
        %v4939 = vadd.f32 %v3093, %v4938
        %v4940 = vpop.f32.mrf.mxu0
        %v4941 = vpop.f32.mrf.mxu0
        %v4942 = vadd.f32 %v3098, %v4941
        %v4943 = vpop.f32.mrf.mxu0
        %4944 = vmatprep.mubr.bf16.mxu0 %v4185
        %4945 = vmatmul.mubr.bf16.gmra.mxu0 %v4184
        %v4946 = vpop.f32.mrf.mxu0
        %v4947 = vadd.f32 %v3103, %v4946
        %v4948 = vpop.f32.mrf.mxu0
        %v4949 = vpop.f32.mrf.mxu0
        %v4950 = vadd.f32 %v3108, %v4949
        %v4951 = vpop.f32.mrf.mxu0
        %4952 = vmatprep.mubr.bf16.mxu0 %v4189
        %4953 = vmatmul.mubr.bf16.gmra.mxu0 %v4188
        %v4954 = vpop.f32.mrf.mxu0
        %v4955 = vadd.f32 %v3113, %v4954
        %v4956 = vpop.f32.mrf.mxu0
        %v4957 = vpop.f32.mrf.mxu0
        %v4958 = vadd.f32 %v3118, %v4957
        %v4959 = vpop.f32.mrf.mxu0
        %4960 = vmatprep.mubr.bf16.mxu0 %v4193
        %4961 = vmatmul.mubr.bf16.gmra.mxu0 %v4192
        %v4962 = vpop.f32.mrf.mxu0
        %v4963 = vadd.f32 %v3123, %v4962
        %v4964 = vpop.f32.mrf.mxu0
        %v4965 = vpop.f32.mrf.mxu0
        %v4966 = vadd.f32 %v3128, %v4965
        %v4967 = vpop.f32.mrf.mxu0
        %4968 = vmatprep.mubr.bf16.mxu0 %v4197
        %4969 = vmatmul.mubr.bf16.gmra.mxu0 %v4196
        %v4970 = vpop.f32.mrf.mxu0
        %v4971 = vadd.f32 %v3133, %v4970
        %v4972 = vpop.f32.mrf.mxu0
        %v4973 = vpop.f32.mrf.mxu0
        %v4974 = vadd.f32 %v3138, %v4973
        %v4975 = vpop.f32.mrf.mxu0
        %4976 = vmatprep.mubr.bf16.mxu0 %v4201
        %4977 = vmatmul.mubr.bf16.gmra.mxu0 %v4200
        %v4978 = vpop.f32.mrf.mxu0
        %v4979 = vadd.f32 %v3143, %v4978
        %v4980 = vpop.f32.mrf.mxu0
        %v4981 = vpop.f32.mrf.mxu0
        %v4982 = vadd.f32 %v3148, %v4981
        %v4983 = vpop.f32.mrf.mxu0
        %4984 = vmatprep.mubr.bf16.mxu0 %v4205
        %4985 = vmatmul.mubr.bf16.gmra.mxu0 %v4204
        %v4986 = vpop.f32.mrf.mxu0
        %v4987 = vadd.f32 %v3153, %v4986
        %v4988 = vpop.f32.mrf.mxu0
        %v4989 = vpop.f32.mrf.mxu0
        %v4990 = vadd.f32 %v3158, %v4989
        %v4991 = vpop.f32.mrf.mxu0
        %4992 = vmatprep.mubr.bf16.mxu0 %v4209
        %4993 = vmatmul.mubr.bf16.gmra.mxu0 %v4208
        %v4994 = vpop.f32.mrf.mxu0
        %v4995 = vadd.f32 %v3163, %v4994
        %v4996 = vpop.f32.mrf.mxu0
        %v4997 = vpop.f32.mrf.mxu0
        %v4998 = vadd.f32 %v3168, %v4997
        %v4999 = vpop.f32.mrf.mxu0
        %5000 = vmatprep.mubr.bf16.mxu0 %v4213
        %5001 = vmatmul.mubr.bf16.gmra.mxu0 %v4212
        %v5002 = vpop.f32.mrf.mxu0
        %v5003 = vadd.f32 %v3173, %v5002
        %v5004 = vpop.f32.mrf.mxu0
        %v5005 = vpop.f32.mrf.mxu0
        %v5006 = vadd.f32 %v3178, %v5005
        %v5007 = vpop.f32.mrf.mxu0
        %5008 = vmatprep.mubr.bf16.mxu0 %v4217
        %5009 = vmatmul.mubr.bf16.gmra.mxu0 %v4216
        %v5010 = vpop.f32.mrf.mxu0
        %v5011 = vadd.f32 %v3183, %v5010
        %v5012 = vpop.f32.mrf.mxu0
        %v5013 = vpop.f32.mrf.mxu0
        %v5014 = vadd.f32 %v3188, %v5013
        %v5015 = vpop.f32.mrf.mxu0
        %5016 = vmatprep.mubr.bf16.mxu0 %v4221
        %5017 = vmatmul.mubr.bf16.gmra.mxu0 %v4220
        %v5018 = vpop.f32.mrf.mxu0
        %v5019 = vadd.f32 %v3193, %v5018
        %v5020 = vpop.f32.mrf.mxu0
        %v5021 = vpop.f32.mrf.mxu0
        %v5022 = vadd.f32 %v3198, %v5021
        %v5023 = vpop.f32.mrf.mxu0
        %5024 = vdwg.mxu0
        %5025 = vmatprep.subr.bf16.mxu0 0
        %5026 = vmatpush1.bf16.msra.mxu0 %v2167
        %5027 = vmatprep.subr.bf16.mxu0 0
        %5028 = vmatpush1.bf16.msra.mxu0 %v2166
        %5029 = vmatprep.subr.bf16.mxu0 0
        %5030 = vmatpush1.bf16.msra.mxu0 %v2165
        %5031 = vmatprep.subr.bf16.mxu0 0
        %5032 = vmatpush1.bf16.msra.mxu0 %v2164
        %5033 = vmatprep.subr.bf16.mxu0 0
        %5034 = vmatpush1.bf16.msra.mxu0 %v2163
        %5035 = vmatprep.subr.bf16.mxu0 0
        %5036 = vmatpush1.bf16.msra.mxu0 %v2162
        %5037 = vmatprep.subr.bf16.mxu0 0
        %5038 = vmatpush1.bf16.msra.mxu0 %v2161
        %5039 = vmatprep.subr.bf16.mxu0 0
        %5040 = vmatpush1.bf16.msra.mxu0 %v2160
        %5041 = vmatprep.subr.bf16.mxu0 0
        %5042 = vmatpush2.bf16.msra.mxu0 %v2175
        %5043 = vmatprep.subr.bf16.mxu0 0
        %5044 = vmatpush2.bf16.msra.mxu0 %v2174
        %5045 = vmatprep.subr.bf16.mxu0 0
        %5046 = vmatpush2.bf16.msra.mxu0 %v2173
        %5047 = vmatprep.subr.bf16.mxu0 0
        %5048 = vmatpush2.bf16.msra.mxu0 %v2172
        %5049 = vmatprep.subr.bf16.mxu0 0
        %5050 = vmatpush2.bf16.msra.mxu0 %v2171
        %5051 = vmatprep.subr.bf16.mxu0 0
        %5052 = vmatpush2.bf16.msra.mxu0 %v2170
        %5053 = vmatprep.subr.bf16.mxu0 0
        %5054 = vmatpush2.bf16.msra.mxu0 %v2169
        %5055 = vmatprep.subr.bf16.mxu0 0
        %5056 = vmatpush2.bf16.msra.mxu0 %v2168
        %5057 = vmatprep.mubr.bf16.mxu0 %v3971
        %5058 = vmatmul.mubr.bf16.gmra.mxu0 %v3970
        %v5059 = vpop.f32.mrf.mxu0
        %v5060 = vadd.f32 %v4515, %v5059
        %v5061 = vpop.f32.mrf.mxu0
        %v5062 = vpop.f32.mrf.mxu0
        %v5063 = vadd.f32 %v4518, %v5062
        %v5064 = vpop.f32.mrf.mxu0
        %5065 = vmatprep.mubr.bf16.mxu0 %v3975
        %5066 = vmatmul.mubr.bf16.gmra.mxu0 %v3974
        %v5067 = vpop.f32.mrf.mxu0
        %v5068 = vadd.f32 %v4523, %v5067
        %v5069 = vpop.f32.mrf.mxu0
        %v5070 = vpop.f32.mrf.mxu0
        %v5071 = vadd.f32 %v4526, %v5070
        %v5072 = vpop.f32.mrf.mxu0
        %5073 = vmatprep.mubr.bf16.mxu0 %v3979
        %5074 = vmatmul.mubr.bf16.gmra.mxu0 %v3978
        %v5075 = vpop.f32.mrf.mxu0
        %v5076 = vadd.f32 %v4531, %v5075
        %v5077 = vpop.f32.mrf.mxu0
        %v5078 = vpop.f32.mrf.mxu0
        %v5079 = vadd.f32 %v4534, %v5078
        %v5080 = vpop.f32.mrf.mxu0
        %5081 = vmatprep.mubr.bf16.mxu0 %v3983
        %5082 = vmatmul.mubr.bf16.gmra.mxu0 %v3982
        %v5083 = vpop.f32.mrf.mxu0
        %v5084 = vadd.f32 %v4539, %v5083
        %v5085 = vpop.f32.mrf.mxu0
        %v5086 = vpop.f32.mrf.mxu0
        %v5087 = vadd.f32 %v4542, %v5086
        %v5088 = vpop.f32.mrf.mxu0
        %5089 = vmatprep.mubr.bf16.mxu0 %v3987
        %5090 = vmatmul.mubr.bf16.gmra.mxu0 %v3986
        %v5091 = vpop.f32.mrf.mxu0
        %v5092 = vadd.f32 %v4547, %v5091
        %v5093 = vpop.f32.mrf.mxu0
        %v5094 = vpop.f32.mrf.mxu0
        %v5095 = vadd.f32 %v4550, %v5094
        %v5096 = vpop.f32.mrf.mxu0
        %5097 = vmatprep.mubr.bf16.mxu0 %v3991
        %5098 = vmatmul.mubr.bf16.gmra.mxu0 %v3990
        %v5099 = vpop.f32.mrf.mxu0
        %v5100 = vadd.f32 %v4555, %v5099
        %v5101 = vpop.f32.mrf.mxu0
        %v5102 = vpop.f32.mrf.mxu0
        %v5103 = vadd.f32 %v4558, %v5102
        %v5104 = vpop.f32.mrf.mxu0
        %5105 = vmatprep.mubr.bf16.mxu0 %v3995
        %5106 = vmatmul.mubr.bf16.gmra.mxu0 %v3994
        %v5107 = vpop.f32.mrf.mxu0
        %v5108 = vadd.f32 %v4563, %v5107
        %v5109 = vpop.f32.mrf.mxu0
        %v5110 = vpop.f32.mrf.mxu0
        %v5111 = vadd.f32 %v4566, %v5110
        %v5112 = vpop.f32.mrf.mxu0
        %5113 = vmatprep.mubr.bf16.mxu0 %v3999
        %5114 = vmatmul.mubr.bf16.gmra.mxu0 %v3998
        %v5115 = vpop.f32.mrf.mxu0
        %v5116 = vadd.f32 %v4571, %v5115
        %v5117 = vpop.f32.mrf.mxu0
        %v5118 = vpop.f32.mrf.mxu0
        %v5119 = vadd.f32 %v4574, %v5118
        %v5120 = vpop.f32.mrf.mxu0
        %5121 = vmatprep.mubr.bf16.mxu0 %v4003
        %5122 = vmatmul.mubr.bf16.gmra.mxu0 %v4002
        %v5123 = vpop.f32.mrf.mxu0
        %v5124 = vadd.f32 %v4579, %v5123
        %v5125 = vpop.f32.mrf.mxu0
        %v5126 = vpop.f32.mrf.mxu0
        %v5127 = vadd.f32 %v4582, %v5126
        %v5128 = vpop.f32.mrf.mxu0
        %5129 = vmatprep.mubr.bf16.mxu0 %v4007
        %5130 = vmatmul.mubr.bf16.gmra.mxu0 %v4006
        %v5131 = vpop.f32.mrf.mxu0
        %v5132 = vadd.f32 %v4587, %v5131
        %v5133 = vpop.f32.mrf.mxu0
        %v5134 = vpop.f32.mrf.mxu0
        %v5135 = vadd.f32 %v4590, %v5134
        %v5136 = vpop.f32.mrf.mxu0
        %5137 = vmatprep.mubr.bf16.mxu0 %v4011
        %5138 = vmatmul.mubr.bf16.gmra.mxu0 %v4010
        %v5139 = vpop.f32.mrf.mxu0
        %v5140 = vadd.f32 %v4595, %v5139
        %v5141 = vpop.f32.mrf.mxu0
        %v5142 = vpop.f32.mrf.mxu0
        %v5143 = vadd.f32 %v4598, %v5142
        %v5144 = vpop.f32.mrf.mxu0
        %5145 = vmatprep.mubr.bf16.mxu0 %v4015
        %5146 = vmatmul.mubr.bf16.gmra.mxu0 %v4014
        %v5147 = vpop.f32.mrf.mxu0
        %v5148 = vadd.f32 %v4603, %v5147
        %v5149 = vpop.f32.mrf.mxu0
        %v5150 = vpop.f32.mrf.mxu0
        %v5151 = vadd.f32 %v4606, %v5150
        %v5152 = vpop.f32.mrf.mxu0
        %5153 = vmatprep.mubr.bf16.mxu0 %v4019
        %5154 = vmatmul.mubr.bf16.gmra.mxu0 %v4018
        %v5155 = vpop.f32.mrf.mxu0
        %v5156 = vadd.f32 %v4611, %v5155
        %v5157 = vpop.f32.mrf.mxu0
        %v5158 = vpop.f32.mrf.mxu0
        %v5159 = vadd.f32 %v4614, %v5158
        %v5160 = vpop.f32.mrf.mxu0
        %5161 = vmatprep.mubr.bf16.mxu0 %v4023
        %5162 = vmatmul.mubr.bf16.gmra.mxu0 %v4022
        %v5163 = vpop.f32.mrf.mxu0
        %v5164 = vadd.f32 %v4619, %v5163
        %v5165 = vpop.f32.mrf.mxu0
        %v5166 = vpop.f32.mrf.mxu0
        %v5167 = vadd.f32 %v4622, %v5166
        %v5168 = vpop.f32.mrf.mxu0
        %5169 = vmatprep.mubr.bf16.mxu0 %v4027
        %5170 = vmatmul.mubr.bf16.gmra.mxu0 %v4026
        %v5171 = vpop.f32.mrf.mxu0
        %v5172 = vadd.f32 %v4627, %v5171
        %v5173 = vpop.f32.mrf.mxu0
        %v5174 = vpop.f32.mrf.mxu0
        %v5175 = vadd.f32 %v4630, %v5174
        %v5176 = vpop.f32.mrf.mxu0
        %5177 = vmatprep.mubr.bf16.mxu0 %v4031
        %5178 = vmatmul.mubr.bf16.gmra.mxu0 %v4030
        %v5179 = vpop.f32.mrf.mxu0
        %v5180 = vadd.f32 %v4635, %v5179
        %v5181 = vpop.f32.mrf.mxu0
        %v5182 = vpop.f32.mrf.mxu0
        %v5183 = vadd.f32 %v4638, %v5182
        %v5184 = vpop.f32.mrf.mxu0
        %5185 = vmatprep.mubr.bf16.mxu0 %v4035
        %5186 = vmatmul.mubr.bf16.gmra.mxu0 %v4034
        %v5187 = vpop.f32.mrf.mxu0
        %v5188 = vadd.f32 %v4643, %v5187
        %v5189 = vpop.f32.mrf.mxu0
        %v5190 = vpop.f32.mrf.mxu0
        %v5191 = vadd.f32 %v4646, %v5190
        %v5192 = vpop.f32.mrf.mxu0
        %5193 = vmatprep.mubr.bf16.mxu0 %v4039
        %5194 = vmatmul.mubr.bf16.gmra.mxu0 %v4038
        %v5195 = vpop.f32.mrf.mxu0
        %v5196 = vadd.f32 %v4651, %v5195
        %v5197 = vpop.f32.mrf.mxu0
        %v5198 = vpop.f32.mrf.mxu0
        %v5199 = vadd.f32 %v4654, %v5198
        %v5200 = vpop.f32.mrf.mxu0
        %5201 = vmatprep.mubr.bf16.mxu0 %v4043
        %5202 = vmatmul.mubr.bf16.gmra.mxu0 %v4042
        %v5203 = vpop.f32.mrf.mxu0
        %v5204 = vadd.f32 %v4659, %v5203
        %v5205 = vpop.f32.mrf.mxu0
        %v5206 = vpop.f32.mrf.mxu0
        %v5207 = vadd.f32 %v4662, %v5206
        %v5208 = vpop.f32.mrf.mxu0
        %5209 = vmatprep.mubr.bf16.mxu0 %v4047
        %5210 = vmatmul.mubr.bf16.gmra.mxu0 %v4046
        %v5211 = vpop.f32.mrf.mxu0
        %v5212 = vadd.f32 %v4667, %v5211
        %v5213 = vpop.f32.mrf.mxu0
        %v5214 = vpop.f32.mrf.mxu0
        %v5215 = vadd.f32 %v4670, %v5214
        %v5216 = vpop.f32.mrf.mxu0
        %5217 = vmatprep.mubr.bf16.mxu0 %v4051
        %5218 = vmatmul.mubr.bf16.gmra.mxu0 %v4050
        %v5219 = vpop.f32.mrf.mxu0
        %v5220 = vadd.f32 %v4675, %v5219
        %v5221 = vpop.f32.mrf.mxu0
        %v5222 = vpop.f32.mrf.mxu0
        %v5223 = vadd.f32 %v4678, %v5222
        %v5224 = vpop.f32.mrf.mxu0
        %5225 = vmatprep.mubr.bf16.mxu0 %v4055
        %5226 = vmatmul.mubr.bf16.gmra.mxu0 %v4054
        %v5227 = vpop.f32.mrf.mxu0
        %v5228 = vadd.f32 %v4683, %v5227
        %v5229 = vpop.f32.mrf.mxu0
        %v5230 = vpop.f32.mrf.mxu0
        %v5231 = vadd.f32 %v4686, %v5230
        %v5232 = vpop.f32.mrf.mxu0
        %5233 = vmatprep.mubr.bf16.mxu0 %v4059
        %5234 = vmatmul.mubr.bf16.gmra.mxu0 %v4058
        %v5235 = vpop.f32.mrf.mxu0
        %v5236 = vadd.f32 %v4691, %v5235
        %v5237 = vpop.f32.mrf.mxu0
        %v5238 = vpop.f32.mrf.mxu0
        %v5239 = vadd.f32 %v4694, %v5238
        %v5240 = vpop.f32.mrf.mxu0
        %5241 = vmatprep.mubr.bf16.mxu0 %v4063
        %5242 = vmatmul.mubr.bf16.gmra.mxu0 %v4062
        %v5243 = vpop.f32.mrf.mxu0
        %v5244 = vadd.f32 %v4699, %v5243
        %v5245 = vpop.f32.mrf.mxu0
        %v5246 = vpop.f32.mrf.mxu0
        %v5247 = vadd.f32 %v4702, %v5246
        %v5248 = vpop.f32.mrf.mxu0
        %5249 = vmatprep.mubr.bf16.mxu0 %v4067
        %5250 = vmatmul.mubr.bf16.gmra.mxu0 %v4066
        %v5251 = vpop.f32.mrf.mxu0
        %v5252 = vadd.f32 %v4707, %v5251
        %v5253 = vpop.f32.mrf.mxu0
        %v5254 = vpop.f32.mrf.mxu0
        %v5255 = vadd.f32 %v4710, %v5254
        %v5256 = vpop.f32.mrf.mxu0
        %5257 = vmatprep.mubr.bf16.mxu0 %v4071
        %5258 = vmatmul.mubr.bf16.gmra.mxu0 %v4070
        %v5259 = vpop.f32.mrf.mxu0
        %v5260 = vadd.f32 %v4715, %v5259
        %v5261 = vpop.f32.mrf.mxu0
        %v5262 = vpop.f32.mrf.mxu0
        %v5263 = vadd.f32 %v4718, %v5262
        %v5264 = vpop.f32.mrf.mxu0
        %5265 = vmatprep.mubr.bf16.mxu0 %v4075
        %5266 = vmatmul.mubr.bf16.gmra.mxu0 %v4074
        %v5267 = vpop.f32.mrf.mxu0
        %v5268 = vadd.f32 %v4723, %v5267
        %v5269 = vpop.f32.mrf.mxu0
        %v5270 = vpop.f32.mrf.mxu0
        %v5271 = vadd.f32 %v4726, %v5270
        %v5272 = vpop.f32.mrf.mxu0
        %5273 = vmatprep.mubr.bf16.mxu0 %v4079
        %5274 = vmatmul.mubr.bf16.gmra.mxu0 %v4078
        %v5275 = vpop.f32.mrf.mxu0
        %v5276 = vadd.f32 %v4731, %v5275
        %v5277 = vpop.f32.mrf.mxu0
        %v5278 = vpop.f32.mrf.mxu0
        %v5279 = vadd.f32 %v4734, %v5278
        %v5280 = vpop.f32.mrf.mxu0
        %5281 = vmatprep.mubr.bf16.mxu0 %v4083
        %5282 = vmatmul.mubr.bf16.gmra.mxu0 %v4082
        %v5283 = vpop.f32.mrf.mxu0
        %v5284 = vadd.f32 %v4739, %v5283
        %v5285 = vpop.f32.mrf.mxu0
        %v5286 = vpop.f32.mrf.mxu0
        %v5287 = vadd.f32 %v4742, %v5286
        %v5288 = vpop.f32.mrf.mxu0
        %5289 = vmatprep.mubr.bf16.mxu0 %v4087
        %5290 = vmatmul.mubr.bf16.gmra.mxu0 %v4086
        %v5291 = vpop.f32.mrf.mxu0
        %v5292 = vadd.f32 %v4747, %v5291
        %v5293 = vpop.f32.mrf.mxu0
        %v5294 = vpop.f32.mrf.mxu0
        %v5295 = vadd.f32 %v4750, %v5294
        %v5296 = vpop.f32.mrf.mxu0
        %5297 = vmatprep.mubr.bf16.mxu0 %v4091
        %5298 = vmatmul.mubr.bf16.gmra.mxu0 %v4090
        %v5299 = vpop.f32.mrf.mxu0
        %v5300 = vadd.f32 %v4755, %v5299
        %v5301 = vpop.f32.mrf.mxu0
        %v5302 = vpop.f32.mrf.mxu0
        %v5303 = vadd.f32 %v4758, %v5302
        %v5304 = vpop.f32.mrf.mxu0
        %5305 = vmatprep.mubr.bf16.mxu0 %v4095
        %5306 = vmatmul.mubr.bf16.gmra.mxu0 %v4094
        %v5307 = vpop.f32.mrf.mxu0
        %v5308 = vadd.f32 %v4763, %v5307
        %v5309 = vpop.f32.mrf.mxu0
        %v5310 = vpop.f32.mrf.mxu0
        %v5311 = vadd.f32 %v4766, %v5310
        %v5312 = vpop.f32.mrf.mxu0
        %5313 = vmatprep.mubr.bf16.mxu0 %v4099
        %5314 = vmatmul.mubr.bf16.gmra.mxu0 %v4098
        %v5315 = vpop.f32.mrf.mxu0
        %v5316 = vadd.f32 %v4771, %v5315
        %v5317 = vpop.f32.mrf.mxu0
        %v5318 = vpop.f32.mrf.mxu0
        %v5319 = vadd.f32 %v4774, %v5318
        %v5320 = vpop.f32.mrf.mxu0
        %5321 = vmatprep.mubr.bf16.mxu0 %v4103
        %5322 = vmatmul.mubr.bf16.gmra.mxu0 %v4102
        %v5323 = vpop.f32.mrf.mxu0
        %v5324 = vadd.f32 %v4779, %v5323
        %v5325 = vpop.f32.mrf.mxu0
        %v5326 = vpop.f32.mrf.mxu0
        %v5327 = vadd.f32 %v4782, %v5326
        %v5328 = vpop.f32.mrf.mxu0
        %5329 = vmatprep.mubr.bf16.mxu0 %v4107
        %5330 = vmatmul.mubr.bf16.gmra.mxu0 %v4106
        %v5331 = vpop.f32.mrf.mxu0
        %v5332 = vadd.f32 %v4787, %v5331
        %v5333 = vpop.f32.mrf.mxu0
        %v5334 = vpop.f32.mrf.mxu0
        %v5335 = vadd.f32 %v4790, %v5334
        %v5336 = vpop.f32.mrf.mxu0
        %5337 = vmatprep.mubr.bf16.mxu0 %v4111
        %5338 = vmatmul.mubr.bf16.gmra.mxu0 %v4110
        %v5339 = vpop.f32.mrf.mxu0
        %v5340 = vadd.f32 %v4795, %v5339
        %v5341 = vpop.f32.mrf.mxu0
        %v5342 = vpop.f32.mrf.mxu0
        %v5343 = vadd.f32 %v4798, %v5342
        %v5344 = vpop.f32.mrf.mxu0
        %5345 = vmatprep.mubr.bf16.mxu0 %v4115
        %5346 = vmatmul.mubr.bf16.gmra.mxu0 %v4114
        %v5347 = vpop.f32.mrf.mxu0
        %v5348 = vadd.f32 %v4803, %v5347
        %v5349 = vpop.f32.mrf.mxu0
        %v5350 = vpop.f32.mrf.mxu0
        %v5351 = vadd.f32 %v4806, %v5350
        %v5352 = vpop.f32.mrf.mxu0
        %5353 = vmatprep.mubr.bf16.mxu0 %v4119
        %5354 = vmatmul.mubr.bf16.gmra.mxu0 %v4118
        %v5355 = vpop.f32.mrf.mxu0
        %v5356 = vadd.f32 %v4811, %v5355
        %v5357 = vpop.f32.mrf.mxu0
        %v5358 = vpop.f32.mrf.mxu0
        %v5359 = vadd.f32 %v4814, %v5358
        %v5360 = vpop.f32.mrf.mxu0
        %5361 = vmatprep.mubr.bf16.mxu0 %v4123
        %5362 = vmatmul.mubr.bf16.gmra.mxu0 %v4122
        %v5363 = vpop.f32.mrf.mxu0
        %v5364 = vadd.f32 %v4819, %v5363
        %v5365 = vpop.f32.mrf.mxu0
        %v5366 = vpop.f32.mrf.mxu0
        %v5367 = vadd.f32 %v4822, %v5366
        %v5368 = vpop.f32.mrf.mxu0
        %5369 = vmatprep.mubr.bf16.mxu0 %v4127
        %5370 = vmatmul.mubr.bf16.gmra.mxu0 %v4126
        %v5371 = vpop.f32.mrf.mxu0
        %v5372 = vadd.f32 %v4827, %v5371
        %v5373 = vpop.f32.mrf.mxu0
        %v5374 = vpop.f32.mrf.mxu0
        %v5375 = vadd.f32 %v4830, %v5374
        %v5376 = vpop.f32.mrf.mxu0
        %5377 = vmatprep.mubr.bf16.mxu0 %v4131
        %5378 = vmatmul.mubr.bf16.gmra.mxu0 %v4130
        %v5379 = vpop.f32.mrf.mxu0
        %v5380 = vadd.f32 %v4835, %v5379
        %v5381 = vpop.f32.mrf.mxu0
        %v5382 = vpop.f32.mrf.mxu0
        %v5383 = vadd.f32 %v4838, %v5382
        %v5384 = vpop.f32.mrf.mxu0
        %5385 = vmatprep.mubr.bf16.mxu0 %v4135
        %5386 = vmatmul.mubr.bf16.gmra.mxu0 %v4134
        %v5387 = vpop.f32.mrf.mxu0
        %v5388 = vadd.f32 %v4843, %v5387
        %v5389 = vpop.f32.mrf.mxu0
        %v5390 = vpop.f32.mrf.mxu0
        %v5391 = vadd.f32 %v4846, %v5390
        %v5392 = vpop.f32.mrf.mxu0
        %5393 = vmatprep.mubr.bf16.mxu0 %v4139
        %5394 = vmatmul.mubr.bf16.gmra.mxu0 %v4138
        %v5395 = vpop.f32.mrf.mxu0
        %v5396 = vadd.f32 %v4851, %v5395
        %v5397 = vpop.f32.mrf.mxu0
        %v5398 = vpop.f32.mrf.mxu0
        %v5399 = vadd.f32 %v4854, %v5398
        %v5400 = vpop.f32.mrf.mxu0
        %5401 = vmatprep.mubr.bf16.mxu0 %v4143
        %5402 = vmatmul.mubr.bf16.gmra.mxu0 %v4142
        %v5403 = vpop.f32.mrf.mxu0
        %v5404 = vadd.f32 %v4859, %v5403
        %v5405 = vpop.f32.mrf.mxu0
        %v5406 = vpop.f32.mrf.mxu0
        %v5407 = vadd.f32 %v4862, %v5406
        %v5408 = vpop.f32.mrf.mxu0
        %5409 = vmatprep.mubr.bf16.mxu0 %v4147
        %5410 = vmatmul.mubr.bf16.gmra.mxu0 %v4146
        %v5411 = vpop.f32.mrf.mxu0
        %v5412 = vadd.f32 %v4867, %v5411
        %v5413 = vpop.f32.mrf.mxu0
        %v5414 = vpop.f32.mrf.mxu0
        %v5415 = vadd.f32 %v4870, %v5414
        %v5416 = vpop.f32.mrf.mxu0
        %5417 = vmatprep.mubr.bf16.mxu0 %v4151
        %5418 = vmatmul.mubr.bf16.gmra.mxu0 %v4150
        %v5419 = vpop.f32.mrf.mxu0
        %v5420 = vadd.f32 %v4875, %v5419
        %v5421 = vpop.f32.mrf.mxu0
        %v5422 = vpop.f32.mrf.mxu0
        %v5423 = vadd.f32 %v4878, %v5422
        %v5424 = vpop.f32.mrf.mxu0
        %5425 = vmatprep.mubr.bf16.mxu0 %v4155
        %5426 = vmatmul.mubr.bf16.gmra.mxu0 %v4154
        %v5427 = vpop.f32.mrf.mxu0
        %v5428 = vadd.f32 %v4883, %v5427
        %v5429 = vpop.f32.mrf.mxu0
        %v5430 = vpop.f32.mrf.mxu0
        %v5431 = vadd.f32 %v4886, %v5430
        %v5432 = vpop.f32.mrf.mxu0
        %5433 = vmatprep.mubr.bf16.mxu0 %v4159
        %5434 = vmatmul.mubr.bf16.gmra.mxu0 %v4158
        %v5435 = vpop.f32.mrf.mxu0
        %v5436 = vadd.f32 %v4891, %v5435
        %v5437 = vpop.f32.mrf.mxu0
        %v5438 = vpop.f32.mrf.mxu0
        %v5439 = vadd.f32 %v4894, %v5438
        %v5440 = vpop.f32.mrf.mxu0
        %5441 = vmatprep.mubr.bf16.mxu0 %v4163
        %5442 = vmatmul.mubr.bf16.gmra.mxu0 %v4162
        %v5443 = vpop.f32.mrf.mxu0
        %v5444 = vadd.f32 %v4899, %v5443
        %v5445 = vpop.f32.mrf.mxu0
        %v5446 = vpop.f32.mrf.mxu0
        %v5447 = vadd.f32 %v4902, %v5446
        %v5448 = vpop.f32.mrf.mxu0
        %5449 = vmatprep.mubr.bf16.mxu0 %v4167
        %5450 = vmatmul.mubr.bf16.gmra.mxu0 %v4166
        %v5451 = vpop.f32.mrf.mxu0
        %v5452 = vadd.f32 %v4907, %v5451
        %v5453 = vpop.f32.mrf.mxu0
        %v5454 = vpop.f32.mrf.mxu0
        %v5455 = vadd.f32 %v4910, %v5454
        %v5456 = vpop.f32.mrf.mxu0
        %5457 = vmatprep.mubr.bf16.mxu0 %v4171
        %5458 = vmatmul.mubr.bf16.gmra.mxu0 %v4170
        %v5459 = vpop.f32.mrf.mxu0
        %v5460 = vadd.f32 %v4915, %v5459
        %v5461 = vpop.f32.mrf.mxu0
        %v5462 = vpop.f32.mrf.mxu0
        %v5463 = vadd.f32 %v4918, %v5462
        %v5464 = vpop.f32.mrf.mxu0
        %5465 = vmatprep.mubr.bf16.mxu0 %v4175
        %5466 = vmatmul.mubr.bf16.gmra.mxu0 %v4174
        %v5467 = vpop.f32.mrf.mxu0
        %v5468 = vadd.f32 %v4923, %v5467
        %v5469 = vpop.f32.mrf.mxu0
        %v5470 = vpop.f32.mrf.mxu0
        %v5471 = vadd.f32 %v4926, %v5470
        %v5472 = vpop.f32.mrf.mxu0
        %5473 = vmatprep.mubr.bf16.mxu0 %v4179
        %5474 = vmatmul.mubr.bf16.gmra.mxu0 %v4178
        %v5475 = vpop.f32.mrf.mxu0
        %v5476 = vadd.f32 %v4931, %v5475
        %v5477 = vpop.f32.mrf.mxu0
        %v5478 = vpop.f32.mrf.mxu0
        %v5479 = vadd.f32 %v4934, %v5478
        %v5480 = vpop.f32.mrf.mxu0
        %5481 = vmatprep.mubr.bf16.mxu0 %v4183
        %5482 = vmatmul.mubr.bf16.gmra.mxu0 %v4182
        %v5483 = vpop.f32.mrf.mxu0
        %v5484 = vadd.f32 %v4939, %v5483
        %v5485 = vpop.f32.mrf.mxu0
        %v5486 = vpop.f32.mrf.mxu0
        %v5487 = vadd.f32 %v4942, %v5486
        %v5488 = vpop.f32.mrf.mxu0
        %5489 = vmatprep.mubr.bf16.mxu0 %v4187
        %5490 = vmatmul.mubr.bf16.gmra.mxu0 %v4186
        %v5491 = vpop.f32.mrf.mxu0
        %v5492 = vadd.f32 %v4947, %v5491
        %v5493 = vpop.f32.mrf.mxu0
        %v5494 = vpop.f32.mrf.mxu0
        %v5495 = vadd.f32 %v4950, %v5494
        %v5496 = vpop.f32.mrf.mxu0
        %5497 = vmatprep.mubr.bf16.mxu0 %v4191
        %5498 = vmatmul.mubr.bf16.gmra.mxu0 %v4190
        %v5499 = vpop.f32.mrf.mxu0
        %v5500 = vadd.f32 %v4955, %v5499
        %v5501 = vpop.f32.mrf.mxu0
        %v5502 = vpop.f32.mrf.mxu0
        %v5503 = vadd.f32 %v4958, %v5502
        %v5504 = vpop.f32.mrf.mxu0
        %5505 = vmatprep.mubr.bf16.mxu0 %v4195
        %5506 = vmatmul.mubr.bf16.gmra.mxu0 %v4194
        %v5507 = vpop.f32.mrf.mxu0
        %v5508 = vadd.f32 %v4963, %v5507
        %v5509 = vpop.f32.mrf.mxu0
        %v5510 = vpop.f32.mrf.mxu0
        %v5511 = vadd.f32 %v4966, %v5510
        %v5512 = vpop.f32.mrf.mxu0
        %5513 = vmatprep.mubr.bf16.mxu0 %v4199
        %5514 = vmatmul.mubr.bf16.gmra.mxu0 %v4198
        %v5515 = vpop.f32.mrf.mxu0
        %v5516 = vadd.f32 %v4971, %v5515
        %v5517 = vpop.f32.mrf.mxu0
        %v5518 = vpop.f32.mrf.mxu0
        %v5519 = vadd.f32 %v4974, %v5518
        %v5520 = vpop.f32.mrf.mxu0
        %5521 = vmatprep.mubr.bf16.mxu0 %v4203
        %5522 = vmatmul.mubr.bf16.gmra.mxu0 %v4202
        %v5523 = vpop.f32.mrf.mxu0
        %v5524 = vadd.f32 %v4979, %v5523
        %v5525 = vpop.f32.mrf.mxu0
        %v5526 = vpop.f32.mrf.mxu0
        %v5527 = vadd.f32 %v4982, %v5526
        %v5528 = vpop.f32.mrf.mxu0
        %5529 = vmatprep.mubr.bf16.mxu0 %v4207
        %5530 = vmatmul.mubr.bf16.gmra.mxu0 %v4206
        %v5531 = vpop.f32.mrf.mxu0
        %v5532 = vadd.f32 %v4987, %v5531
        %v5533 = vpop.f32.mrf.mxu0
        %v5534 = vpop.f32.mrf.mxu0
        %v5535 = vadd.f32 %v4990, %v5534
        %v5536 = vpop.f32.mrf.mxu0
        %5537 = vmatprep.mubr.bf16.mxu0 %v4211
        %5538 = vmatmul.mubr.bf16.gmra.mxu0 %v4210
        %v5539 = vpop.f32.mrf.mxu0
        %v5540 = vadd.f32 %v4995, %v5539
        %v5541 = vpop.f32.mrf.mxu0
        %v5542 = vpop.f32.mrf.mxu0
        %v5543 = vadd.f32 %v4998, %v5542
        %v5544 = vpop.f32.mrf.mxu0
        %5545 = vmatprep.mubr.bf16.mxu0 %v4215
        %5546 = vmatmul.mubr.bf16.gmra.mxu0 %v4214
        %v5547 = vpop.f32.mrf.mxu0
        %v5548 = vadd.f32 %v5003, %v5547
        %v5549 = vpop.f32.mrf.mxu0
        %v5550 = vpop.f32.mrf.mxu0
        %v5551 = vadd.f32 %v5006, %v5550
        %v5552 = vpop.f32.mrf.mxu0
        %5553 = vmatprep.mubr.bf16.mxu0 %v4219
        %5554 = vmatmul.mubr.bf16.gmra.mxu0 %v4218
        %v5555 = vpop.f32.mrf.mxu0
        %v5556 = vadd.f32 %v5011, %v5555
        %v5557 = vpop.f32.mrf.mxu0
        %v5558 = vpop.f32.mrf.mxu0
        %v5559 = vadd.f32 %v5014, %v5558
        %v5560 = vpop.f32.mrf.mxu0
        %5561 = vmatprep.mubr.bf16.mxu0 %v4223
        %5562 = vmatmul.mubr.bf16.gmra.mxu0 %v4222
        %v5563 = vpop.f32.mrf.mxu0
        %v5564 = vadd.f32 %v5019, %v5563
        %v5565 = vpop.f32.mrf.mxu0
        %v5566 = vpop.f32.mrf.mxu0
        %v5567 = vadd.f32 %v5022, %v5566
        %v5568 = vpop.f32.mrf.mxu0
        %5569 = vdwg.mxu0
        %v5570 = vmax.f32 %v5060, 0.0
        %v5571 = vmax.f32 %v5063, 0.0
        %v5572 = vmax.f32 %v5068, 0.0
        %v5573 = vmax.f32 %v5071, 0.0
        %v5574 = vmax.f32 %v5076, 0.0
        %v5575 = vmax.f32 %v5079, 0.0
        %v5576 = vmax.f32 %v5084, 0.0
        %v5577 = vmax.f32 %v5087, 0.0
        %v5578 = vmax.f32 %v5092, 0.0
        %v5579 = vmax.f32 %v5095, 0.0
        %v5580 = vmax.f32 %v5100, 0.0
        %v5581 = vmax.f32 %v5103, 0.0
        %v5582 = vmax.f32 %v5108, 0.0
        %v5583 = vmax.f32 %v5111, 0.0
        %v5584 = vmax.f32 %v5116, 0.0
        %v5585 = vmax.f32 %v5119, 0.0
        %v5586 = vmax.f32 %v5124, 0.0
        %v5587 = vmax.f32 %v5127, 0.0
        %v5588 = vmax.f32 %v5132, 0.0
        %v5589 = vmax.f32 %v5135, 0.0
        %v5590 = vmax.f32 %v5140, 0.0
        %v5591 = vmax.f32 %v5143, 0.0
        %v5592 = vmax.f32 %v5148, 0.0
        %v5593 = vmax.f32 %v5151, 0.0
        %v5594 = vmax.f32 %v5156, 0.0
        %v5595 = vmax.f32 %v5159, 0.0
        %v5596 = vmax.f32 %v5164, 0.0
        %v5597 = vmax.f32 %v5167, 0.0
        %v5598 = vmax.f32 %v5172, 0.0
        %v5599 = vmax.f32 %v5175, 0.0
        %v5600 = vmax.f32 %v5180, 0.0
        %v5601 = vmax.f32 %v5183, 0.0
        %v5602 = vmax.f32 %v5188, 0.0
        %v5603 = vmax.f32 %v5191, 0.0
        %v5604 = vmax.f32 %v5196, 0.0
        %v5605 = vmax.f32 %v5199, 0.0
        %v5606 = vmax.f32 %v5204, 0.0
        %v5607 = vmax.f32 %v5207, 0.0
        %v5608 = vmax.f32 %v5212, 0.0
        %v5609 = vmax.f32 %v5215, 0.0
        %v5610 = vmax.f32 %v5220, 0.0
        %v5611 = vmax.f32 %v5223, 0.0
        %v5612 = vmax.f32 %v5228, 0.0
        %v5613 = vmax.f32 %v5231, 0.0
        %v5614 = vmax.f32 %v5236, 0.0
        %v5615 = vmax.f32 %v5239, 0.0
        %v5616 = vmax.f32 %v5244, 0.0
        %v5617 = vmax.f32 %v5247, 0.0
        %v5618 = vmax.f32 %v5252, 0.0
        %v5619 = vmax.f32 %v5255, 0.0
        %v5620 = vmax.f32 %v5260, 0.0
        %v5621 = vmax.f32 %v5263, 0.0
        %v5622 = vmax.f32 %v5268, 0.0
        %v5623 = vmax.f32 %v5271, 0.0
        %v5624 = vmax.f32 %v5276, 0.0
        %v5625 = vmax.f32 %v5279, 0.0
        %v5626 = vmax.f32 %v5284, 0.0
        %v5627 = vmax.f32 %v5287, 0.0
        %v5628 = vmax.f32 %v5292, 0.0
        %v5629 = vmax.f32 %v5295, 0.0
        %v5630 = vmax.f32 %v5300, 0.0
        %v5631 = vmax.f32 %v5303, 0.0
        %v5632 = vmax.f32 %v5308, 0.0
        %v5633 = vmax.f32 %v5311, 0.0
        %v5634 = vmax.f32 %v5316, 0.0
        %v5635 = vmax.f32 %v5319, 0.0
        %v5636 = vmax.f32 %v5324, 0.0
        %v5637 = vmax.f32 %v5327, 0.0
        %v5638 = vmax.f32 %v5332, 0.0
        %v5639 = vmax.f32 %v5335, 0.0
        %v5640 = vmax.f32 %v5340, 0.0
        %v5641 = vmax.f32 %v5343, 0.0
        %v5642 = vmax.f32 %v5348, 0.0
        %v5643 = vmax.f32 %v5351, 0.0
        %v5644 = vmax.f32 %v5356, 0.0
        %v5645 = vmax.f32 %v5359, 0.0
        %v5646 = vmax.f32 %v5364, 0.0
        %v5647 = vmax.f32 %v5367, 0.0
        %v5648 = vmax.f32 %v5372, 0.0
        %v5649 = vmax.f32 %v5375, 0.0
        %v5650 = vmax.f32 %v5380, 0.0
        %v5651 = vmax.f32 %v5383, 0.0
        %v5652 = vmax.f32 %v5388, 0.0
        %v5653 = vmax.f32 %v5391, 0.0
        %v5654 = vmax.f32 %v5396, 0.0
        %v5655 = vmax.f32 %v5399, 0.0
        %v5656 = vmax.f32 %v5404, 0.0
        %v5657 = vmax.f32 %v5407, 0.0
        %v5658 = vmax.f32 %v5412, 0.0
        %v5659 = vmax.f32 %v5415, 0.0
        %v5660 = vmax.f32 %v5420, 0.0
        %v5661 = vmax.f32 %v5423, 0.0
        %v5662 = vmax.f32 %v5428, 0.0
        %v5663 = vmax.f32 %v5431, 0.0
        %v5664 = vmax.f32 %v5436, 0.0
        %v5665 = vmax.f32 %v5439, 0.0
        %v5666 = vmax.f32 %v5444, 0.0
        %v5667 = vmax.f32 %v5447, 0.0
        %v5668 = vmax.f32 %v5452, 0.0
        %v5669 = vmax.f32 %v5455, 0.0
        %v5670 = vmax.f32 %v5460, 0.0
        %v5671 = vmax.f32 %v5463, 0.0
        %v5672 = vmax.f32 %v5468, 0.0
        %v5673 = vmax.f32 %v5471, 0.0
        %v5674 = vmax.f32 %v5476, 0.0
        %v5675 = vmax.f32 %v5479, 0.0
        %v5676 = vmax.f32 %v5484, 0.0
        %v5677 = vmax.f32 %v5487, 0.0
        %v5678 = vmax.f32 %v5492, 0.0
        %v5679 = vmax.f32 %v5495, 0.0
        %v5680 = vmax.f32 %v5500, 0.0
        %v5681 = vmax.f32 %v5503, 0.0
        %v5682 = vmax.f32 %v5508, 0.0
        %v5683 = vmax.f32 %v5511, 0.0
        %v5684 = vmax.f32 %v5516, 0.0
        %v5685 = vmax.f32 %v5519, 0.0
        %v5686 = vmax.f32 %v5524, 0.0
        %v5687 = vmax.f32 %v5527, 0.0
        %v5688 = vmax.f32 %v5532, 0.0
        %v5689 = vmax.f32 %v5535, 0.0
        %v5690 = vmax.f32 %v5540, 0.0
        %v5691 = vmax.f32 %v5543, 0.0
        %v5692 = vmax.f32 %v5548, 0.0
        %v5693 = vmax.f32 %v5551, 0.0
        %v5694 = vmax.f32 %v5556, 0.0
        %v5695 = vmax.f32 %v5559, 0.0
        %v5696 = vmax.f32 %v5564, 0.0
        %v5697 = vmax.f32 %v5567, 0.0
        %v5698 = vld [vmem:[%s371] sm:$0xff]
        %v5699 = vld [vmem:[%s371 + $0x8] sm:$0xff]
        %v5700 = vld [vmem:[%s371 + $0x10] sm:$0xff]
        %v5701 = vld [vmem:[%s371 + $0x18] sm:$0xff]
        %v5702 = vld [vmem:[%s371 + $0x20] sm:$0xff]
        %v5703 = vld [vmem:[%s371 + $0x28] sm:$0xff]
        %v5704 = vld [vmem:[%s371 + $0x30] sm:$0xff]
        %v5705 = vld [vmem:[%s371 + $0x38] sm:$0xff]
        %v5706 = vld [vmem:[%s371 + $0x40] sm:$0xff]
        %v5707 = vld [vmem:[%s371 + $0x48] sm:$0xff]
        %v5708 = vld [vmem:[%s371 + $0x50] sm:$0xff]
        %v5709 = vld [vmem:[%s371 + $0x58] sm:$0xff]
        %v5710 = vld [vmem:[%s371 + $0x60] sm:$0xff]
        %v5711 = vld [vmem:[%s371 + $0x68] sm:$0xff]
        %v5712 = vld [vmem:[%s371 + $0x70] sm:$0xff]
        %v5713 = vld [vmem:[%s371 + $0x78] sm:$0xff]
        %v5714 = vld [vmem:[%s371 + $0x80] sm:$0xff]
        %v5715 = vld [vmem:[%s371 + $0x88] sm:$0xff]
        %v5716 = vld [vmem:[%s371 + $0x90] sm:$0xff]
        %v5717 = vld [vmem:[%s371 + $0x98] sm:$0xff]
        %v5718 = vld [vmem:[%s371 + $0xa0] sm:$0xff]
        %v5719 = vld [vmem:[%s371 + $0xa8] sm:$0xff]
        %v5720 = vld [vmem:[%s371 + $0xb0] sm:$0xff]
        %v5721 = vld [vmem:[%s371 + $0xb8] sm:$0xff]
        %v5722 = vld [vmem:[%s371 + $0xc0] sm:$0xff]
        %v5723 = vld [vmem:[%s371 + $0xc8] sm:$0xff]
        %v5724 = vld [vmem:[%s371 + $0xd0] sm:$0xff]
        %v5725 = vld [vmem:[%s371 + $0xd8] sm:$0xff]
        %v5726 = vld [vmem:[%s371 + $0xe0] sm:$0xff]
        %v5727 = vld [vmem:[%s371 + $0xe8] sm:$0xff]
        %v5728 = vld [vmem:[%s371 + $0xf0] sm:$0xff]
        %v5729 = vld [vmem:[%s371 + $0xf8] sm:$0xff]
        %v5730 = vld [vmem:[%s371 + $0x100] sm:$0xff]
        %v5731 = vld [vmem:[%s371 + $0x108] sm:$0xff]
        %v5732 = vld [vmem:[%s371 + $0x110] sm:$0xff]
        %v5733 = vld [vmem:[%s371 + $0x118] sm:$0xff]
        %v5734 = vld [vmem:[%s371 + $0x120] sm:$0xff]
        %v5735 = vld [vmem:[%s371 + $0x128] sm:$0xff]
        %v5736 = vld [vmem:[%s371 + $0x130] sm:$0xff]
        %v5737 = vld [vmem:[%s371 + $0x138] sm:$0xff]
        %v5738 = vld [vmem:[%s371 + $0x140] sm:$0xff]
        %v5739 = vld [vmem:[%s371 + $0x148] sm:$0xff]
        %v5740 = vld [vmem:[%s371 + $0x150] sm:$0xff]
        %v5741 = vld [vmem:[%s371 + $0x158] sm:$0xff]
        %v5742 = vld [vmem:[%s371 + $0x160] sm:$0xff]
        %v5743 = vld [vmem:[%s371 + $0x168] sm:$0xff]
        %v5744 = vld [vmem:[%s371 + $0x170] sm:$0xff]
        %v5745 = vld [vmem:[%s371 + $0x178] sm:$0xff]
        %v5746 = vld [vmem:[%s371 + $0x180] sm:$0xff]
        %v5747 = vld [vmem:[%s371 + $0x188] sm:$0xff]
        %v5748 = vld [vmem:[%s371 + $0x190] sm:$0xff]
        %v5749 = vld [vmem:[%s371 + $0x198] sm:$0xff]
        %v5750 = vld [vmem:[%s371 + $0x1a0] sm:$0xff]
        %v5751 = vld [vmem:[%s371 + $0x1a8] sm:$0xff]
        %v5752 = vld [vmem:[%s371 + $0x1b0] sm:$0xff]
        %v5753 = vld [vmem:[%s371 + $0x1b8] sm:$0xff]
        %v5754 = vld [vmem:[%s371 + $0x1c0] sm:$0xff]
        %v5755 = vld [vmem:[%s371 + $0x1c8] sm:$0xff]
        %v5756 = vld [vmem:[%s371 + $0x1d0] sm:$0xff]
        %v5757 = vld [vmem:[%s371 + $0x1d8] sm:$0xff]
        %v5758 = vld [vmem:[%s371 + $0x1e0] sm:$0xff]
        %v5759 = vld [vmem:[%s371 + $0x1e8] sm:$0xff]
        %v5760 = vld [vmem:[%s371 + $0x1f0] sm:$0xff]
        %v5761 = vld [vmem:[%s371 + $0x1f8] sm:$0xff]
        %v5762 = vld [vmem:[%s371 + $0x200] sm:$0xff]
        %v5763 = vld [vmem:[%s371 + $0x208] sm:$0xff]
        %v5764 = vld [vmem:[%s371 + $0x210] sm:$0xff]
        %v5765 = vld [vmem:[%s371 + $0x218] sm:$0xff]
        %v5766 = vld [vmem:[%s371 + $0x220] sm:$0xff]
        %v5767 = vld [vmem:[%s371 + $0x228] sm:$0xff]
        %v5768 = vld [vmem:[%s371 + $0x230] sm:$0xff]
        %v5769 = vld [vmem:[%s371 + $0x238] sm:$0xff]
        %v5770 = vld [vmem:[%s371 + $0x240] sm:$0xff]
        %v5771 = vld [vmem:[%s371 + $0x248] sm:$0xff]
        %v5772 = vld [vmem:[%s371 + $0x250] sm:$0xff]
        %v5773 = vld [vmem:[%s371 + $0x258] sm:$0xff]
        %v5774 = vld [vmem:[%s371 + $0x260] sm:$0xff]
        %v5775 = vld [vmem:[%s371 + $0x268] sm:$0xff]
        %v5776 = vld [vmem:[%s371 + $0x270] sm:$0xff]
        %v5777 = vld [vmem:[%s371 + $0x278] sm:$0xff]
        %v5778 = vld [vmem:[%s371 + $0x280] sm:$0xff]
        %v5779 = vld [vmem:[%s371 + $0x288] sm:$0xff]
        %v5780 = vld [vmem:[%s371 + $0x290] sm:$0xff]
        %v5781 = vld [vmem:[%s371 + $0x298] sm:$0xff]
        %v5782 = vld [vmem:[%s371 + $0x2a0] sm:$0xff]
        %v5783 = vld [vmem:[%s371 + $0x2a8] sm:$0xff]
        %v5784 = vld [vmem:[%s371 + $0x2b0] sm:$0xff]
        %v5785 = vld [vmem:[%s371 + $0x2b8] sm:$0xff]
        %v5786 = vld [vmem:[%s371 + $0x2c0] sm:$0xff]
        %v5787 = vld [vmem:[%s371 + $0x2c8] sm:$0xff]
        %v5788 = vld [vmem:[%s371 + $0x2d0] sm:$0xff]
        %v5789 = vld [vmem:[%s371 + $0x2d8] sm:$0xff]
        %v5790 = vld [vmem:[%s371 + $0x2e0] sm:$0xff]
        %v5791 = vld [vmem:[%s371 + $0x2e8] sm:$0xff]
        %v5792 = vld [vmem:[%s371 + $0x2f0] sm:$0xff]
        %v5793 = vld [vmem:[%s371 + $0x2f8] sm:$0xff]
        %v5794 = vld [vmem:[%s371 + $0x300] sm:$0xff]
        %v5795 = vld [vmem:[%s371 + $0x308] sm:$0xff]
        %v5796 = vld [vmem:[%s371 + $0x310] sm:$0xff]
        %v5797 = vld [vmem:[%s371 + $0x318] sm:$0xff]
        %v5798 = vld [vmem:[%s371 + $0x320] sm:$0xff]
        %v5799 = vld [vmem:[%s371 + $0x328] sm:$0xff]
        %v5800 = vld [vmem:[%s371 + $0x330] sm:$0xff]
        %v5801 = vld [vmem:[%s371 + $0x338] sm:$0xff]
        %v5802 = vld [vmem:[%s371 + $0x340] sm:$0xff]
        %v5803 = vld [vmem:[%s371 + $0x348] sm:$0xff]
        %v5804 = vld [vmem:[%s371 + $0x350] sm:$0xff]
        %v5805 = vld [vmem:[%s371 + $0x358] sm:$0xff]
        %v5806 = vld [vmem:[%s371 + $0x360] sm:$0xff]
        %v5807 = vld [vmem:[%s371 + $0x368] sm:$0xff]
        %v5808 = vld [vmem:[%s371 + $0x370] sm:$0xff]
        %v5809 = vld [vmem:[%s371 + $0x378] sm:$0xff]
        %v5810 = vld [vmem:[%s371 + $0x380] sm:$0xff]
        %v5811 = vld [vmem:[%s371 + $0x388] sm:$0xff]
        %v5812 = vld [vmem:[%s371 + $0x390] sm:$0xff]
        %v5813 = vld [vmem:[%s371 + $0x398] sm:$0xff]
        %v5814 = vld [vmem:[%s371 + $0x3a0] sm:$0xff]
        %v5815 = vld [vmem:[%s371 + $0x3a8] sm:$0xff]
        %v5816 = vld [vmem:[%s371 + $0x3b0] sm:$0xff]
        %v5817 = vld [vmem:[%s371 + $0x3b8] sm:$0xff]
        %v5818 = vld [vmem:[%s371 + $0x3c0] sm:$0xff]
        %v5819 = vld [vmem:[%s371 + $0x3c8] sm:$0xff]
        %v5820 = vld [vmem:[%s371 + $0x3d0] sm:$0xff]
        %v5821 = vld [vmem:[%s371 + $0x3d8] sm:$0xff]
        %v5822 = vld [vmem:[%s371 + $0x3e0] sm:$0xff]
        %v5823 = vld [vmem:[%s371 + $0x3e8] sm:$0xff]
        %v5824 = vld [vmem:[%s371 + $0x3f0] sm:$0xff]
        %v5825 = vld [vmem:[%s371 + $0x3f8] sm:$0xff]
        %5826 = vadd.xlane.f32.xlu0 %v5570
        %v5827 = vpop.xlane.xlu0 %5826
        %5828 = vadd.xlane.f32.xlu0 %v5571
        %v5829 = vpop.xlane.xlu0 %5828
        %5830 = vadd.xlane.f32.xlu0 %v5572
        %v5831 = vpop.xlane.xlu0 %5830
        %5832 = vadd.xlane.f32.xlu0 %v5573
        %v5833 = vpop.xlane.xlu0 %5832
        %5834 = vadd.xlane.f32.xlu0 %v5574
        %v5835 = vpop.xlane.xlu0 %5834
        %5836 = vadd.xlane.f32.xlu0 %v5575
        %v5837 = vpop.xlane.xlu0 %5836
        %5838 = vadd.xlane.f32.xlu0 %v5576
        %v5839 = vpop.xlane.xlu0 %5838
        %5840 = vadd.xlane.f32.xlu0 %v5577
        %v5841 = vpop.xlane.xlu0 %5840
        %5842 = vadd.xlane.f32.xlu0 %v5578
        %v5843 = vpop.xlane.xlu0 %5842
        %5844 = vadd.xlane.f32.xlu0 %v5579
        %v5845 = vpop.xlane.xlu0 %5844
        %5846 = vadd.xlane.f32.xlu0 %v5580
        %v5847 = vpop.xlane.xlu0 %5846
        %5848 = vadd.xlane.f32.xlu0 %v5581
        %v5849 = vpop.xlane.xlu0 %5848
        %5850 = vadd.xlane.f32.xlu0 %v5582
        %v5851 = vpop.xlane.xlu0 %5850
        %5852 = vadd.xlane.f32.xlu0 %v5583
        %v5853 = vpop.xlane.xlu0 %5852
        %5854 = vadd.xlane.f32.xlu0 %v5584
        %v5855 = vpop.xlane.xlu0 %5854
        %5856 = vadd.xlane.f32.xlu0 %v5585
        %v5857 = vpop.xlane.xlu0 %5856
        %5858 = vadd.xlane.f32.xlu0 %v5586
        %v5859 = vpop.xlane.xlu0 %5858
        %5860 = vadd.xlane.f32.xlu0 %v5587
        %v5861 = vpop.xlane.xlu0 %5860
        %5862 = vadd.xlane.f32.xlu0 %v5588
        %v5863 = vpop.xlane.xlu0 %5862
        %5864 = vadd.xlane.f32.xlu0 %v5589
        %v5865 = vpop.xlane.xlu0 %5864
        %5866 = vadd.xlane.f32.xlu0 %v5590
        %v5867 = vpop.xlane.xlu0 %5866
        %5868 = vadd.xlane.f32.xlu0 %v5591
        %v5869 = vpop.xlane.xlu0 %5868
        %5870 = vadd.xlane.f32.xlu0 %v5592
        %v5871 = vpop.xlane.xlu0 %5870
        %5872 = vadd.xlane.f32.xlu0 %v5593
        %v5873 = vpop.xlane.xlu0 %5872
        %5874 = vadd.xlane.f32.xlu0 %v5594
        %v5875 = vpop.xlane.xlu0 %5874
        %5876 = vadd.xlane.f32.xlu0 %v5595
        %v5877 = vpop.xlane.xlu0 %5876
        %5878 = vadd.xlane.f32.xlu0 %v5596
        %v5879 = vpop.xlane.xlu0 %5878
        %5880 = vadd.xlane.f32.xlu0 %v5597
        %v5881 = vpop.xlane.xlu0 %5880
        %5882 = vadd.xlane.f32.xlu0 %v5598
        %v5883 = vpop.xlane.xlu0 %5882
        %5884 = vadd.xlane.f32.xlu0 %v5599
        %v5885 = vpop.xlane.xlu0 %5884
        %5886 = vadd.xlane.f32.xlu0 %v5600
        %v5887 = vpop.xlane.xlu0 %5886
        %5888 = vadd.xlane.f32.xlu0 %v5601
        %v5889 = vpop.xlane.xlu0 %5888
        %5890 = vadd.xlane.f32.xlu0 %v5602
        %v5891 = vpop.xlane.xlu0 %5890
        %5892 = vadd.xlane.f32.xlu0 %v5603
        %v5893 = vpop.xlane.xlu0 %5892
        %5894 = vadd.xlane.f32.xlu0 %v5604
        %v5895 = vpop.xlane.xlu0 %5894
        %5896 = vadd.xlane.f32.xlu0 %v5605
        %v5897 = vpop.xlane.xlu0 %5896
        %5898 = vadd.xlane.f32.xlu0 %v5606
        %v5899 = vpop.xlane.xlu0 %5898
        %5900 = vadd.xlane.f32.xlu0 %v5607
        %v5901 = vpop.xlane.xlu0 %5900
        %5902 = vadd.xlane.f32.xlu0 %v5608
        %v5903 = vpop.xlane.xlu0 %5902
        %5904 = vadd.xlane.f32.xlu0 %v5609
        %v5905 = vpop.xlane.xlu0 %5904
        %5906 = vadd.xlane.f32.xlu0 %v5610
        %v5907 = vpop.xlane.xlu0 %5906
        %5908 = vadd.xlane.f32.xlu0 %v5611
        %v5909 = vpop.xlane.xlu0 %5908
        %5910 = vadd.xlane.f32.xlu0 %v5612
        %v5911 = vpop.xlane.xlu0 %5910
        %5912 = vadd.xlane.f32.xlu0 %v5613
        %v5913 = vpop.xlane.xlu0 %5912
        %5914 = vadd.xlane.f32.xlu0 %v5614
        %v5915 = vpop.xlane.xlu0 %5914
        %5916 = vadd.xlane.f32.xlu0 %v5615
        %v5917 = vpop.xlane.xlu0 %5916
        %5918 = vadd.xlane.f32.xlu0 %v5616
        %v5919 = vpop.xlane.xlu0 %5918
        %5920 = vadd.xlane.f32.xlu0 %v5617
        %v5921 = vpop.xlane.xlu0 %5920
        %5922 = vadd.xlane.f32.xlu0 %v5618
        %v5923 = vpop.xlane.xlu0 %5922
        %5924 = vadd.xlane.f32.xlu0 %v5619
        %v5925 = vpop.xlane.xlu0 %5924
        %5926 = vadd.xlane.f32.xlu0 %v5620
        %v5927 = vpop.xlane.xlu0 %5926
        %5928 = vadd.xlane.f32.xlu0 %v5621
        %v5929 = vpop.xlane.xlu0 %5928
        %5930 = vadd.xlane.f32.xlu0 %v5622
        %v5931 = vpop.xlane.xlu0 %5930
        %5932 = vadd.xlane.f32.xlu0 %v5623
        %v5933 = vpop.xlane.xlu0 %5932
        %5934 = vadd.xlane.f32.xlu0 %v5624
        %v5935 = vpop.xlane.xlu0 %5934
        %5936 = vadd.xlane.f32.xlu0 %v5625
        %v5937 = vpop.xlane.xlu0 %5936
        %5938 = vadd.xlane.f32.xlu0 %v5626
        %v5939 = vpop.xlane.xlu0 %5938
        %5940 = vadd.xlane.f32.xlu0 %v5627
        %v5941 = vpop.xlane.xlu0 %5940
        %5942 = vadd.xlane.f32.xlu0 %v5628
        %v5943 = vpop.xlane.xlu0 %5942
        %5944 = vadd.xlane.f32.xlu0 %v5629
        %v5945 = vpop.xlane.xlu0 %5944
        %5946 = vadd.xlane.f32.xlu0 %v5630
        %v5947 = vpop.xlane.xlu0 %5946
        %5948 = vadd.xlane.f32.xlu0 %v5631
        %v5949 = vpop.xlane.xlu0 %5948
        %5950 = vadd.xlane.f32.xlu0 %v5632
        %v5951 = vpop.xlane.xlu0 %5950
        %5952 = vadd.xlane.f32.xlu0 %v5633
        %v5953 = vpop.xlane.xlu0 %5952
        %5954 = vadd.xlane.f32.xlu0 %v5634
        %v5955 = vpop.xlane.xlu0 %5954
        %5956 = vadd.xlane.f32.xlu0 %v5635
        %v5957 = vpop.xlane.xlu0 %5956
        %5958 = vadd.xlane.f32.xlu0 %v5636
        %v5959 = vpop.xlane.xlu0 %5958
        %5960 = vadd.xlane.f32.xlu0 %v5637
        %v5961 = vpop.xlane.xlu0 %5960
        %5962 = vadd.xlane.f32.xlu0 %v5638
        %v5963 = vpop.xlane.xlu0 %5962
        %5964 = vadd.xlane.f32.xlu0 %v5639
        %v5965 = vpop.xlane.xlu0 %5964
        %5966 = vadd.xlane.f32.xlu0 %v5640
        %v5967 = vpop.xlane.xlu0 %5966
        %5968 = vadd.xlane.f32.xlu0 %v5641
        %v5969 = vpop.xlane.xlu0 %5968
        %5970 = vadd.xlane.f32.xlu0 %v5642
        %v5971 = vpop.xlane.xlu0 %5970
        %5972 = vadd.xlane.f32.xlu0 %v5643
        %v5973 = vpop.xlane.xlu0 %5972
        %5974 = vadd.xlane.f32.xlu0 %v5644
        %v5975 = vpop.xlane.xlu0 %5974
        %5976 = vadd.xlane.f32.xlu0 %v5645
        %v5977 = vpop.xlane.xlu0 %5976
        %5978 = vadd.xlane.f32.xlu0 %v5646
        %v5979 = vpop.xlane.xlu0 %5978
        %5980 = vadd.xlane.f32.xlu0 %v5647
        %v5981 = vpop.xlane.xlu0 %5980
        %5982 = vadd.xlane.f32.xlu0 %v5648
        %v5983 = vpop.xlane.xlu0 %5982
        %5984 = vadd.xlane.f32.xlu0 %v5649
        %v5985 = vpop.xlane.xlu0 %5984
        %5986 = vadd.xlane.f32.xlu0 %v5650
        %v5987 = vpop.xlane.xlu0 %5986
        %5988 = vadd.xlane.f32.xlu0 %v5651
        %v5989 = vpop.xlane.xlu0 %5988
        %5990 = vadd.xlane.f32.xlu0 %v5652
        %v5991 = vpop.xlane.xlu0 %5990
        %5992 = vadd.xlane.f32.xlu0 %v5653
        %v5993 = vpop.xlane.xlu0 %5992
        %5994 = vadd.xlane.f32.xlu0 %v5654
        %v5995 = vpop.xlane.xlu0 %5994
        %5996 = vadd.xlane.f32.xlu0 %v5655
        %v5997 = vpop.xlane.xlu0 %5996
        %5998 = vadd.xlane.f32.xlu0 %v5656
        %v5999 = vpop.xlane.xlu0 %5998
        %6000 = vadd.xlane.f32.xlu0 %v5657
        %v6001 = vpop.xlane.xlu0 %6000
        %6002 = vadd.xlane.f32.xlu0 %v5658
        %v6003 = vpop.xlane.xlu0 %6002
        %6004 = vadd.xlane.f32.xlu0 %v5659
        %v6005 = vpop.xlane.xlu0 %6004
        %6006 = vadd.xlane.f32.xlu0 %v5660
        %v6007 = vpop.xlane.xlu0 %6006
        %6008 = vadd.xlane.f32.xlu0 %v5661
        %v6009 = vpop.xlane.xlu0 %6008
        %6010 = vadd.xlane.f32.xlu0 %v5662
        %v6011 = vpop.xlane.xlu0 %6010
        %6012 = vadd.xlane.f32.xlu0 %v5663
        %v6013 = vpop.xlane.xlu0 %6012
        %6014 = vadd.xlane.f32.xlu0 %v5664
        %v6015 = vpop.xlane.xlu0 %6014
        %6016 = vadd.xlane.f32.xlu0 %v5665
        %v6017 = vpop.xlane.xlu0 %6016
        %6018 = vadd.xlane.f32.xlu0 %v5666
        %v6019 = vpop.xlane.xlu0 %6018
        %6020 = vadd.xlane.f32.xlu0 %v5667
        %v6021 = vpop.xlane.xlu0 %6020
        %6022 = vadd.xlane.f32.xlu0 %v5668
        %v6023 = vpop.xlane.xlu0 %6022
        %6024 = vadd.xlane.f32.xlu0 %v5669
        %v6025 = vpop.xlane.xlu0 %6024
        %6026 = vadd.xlane.f32.xlu0 %v5670
        %v6027 = vpop.xlane.xlu0 %6026
        %6028 = vadd.xlane.f32.xlu0 %v5671
        %v6029 = vpop.xlane.xlu0 %6028
        %6030 = vadd.xlane.f32.xlu0 %v5672
        %v6031 = vpop.xlane.xlu0 %6030
        %6032 = vadd.xlane.f32.xlu0 %v5673
        %v6033 = vpop.xlane.xlu0 %6032
        %6034 = vadd.xlane.f32.xlu0 %v5674
        %v6035 = vpop.xlane.xlu0 %6034
        %6036 = vadd.xlane.f32.xlu0 %v5675
        %v6037 = vpop.xlane.xlu0 %6036
        %6038 = vadd.xlane.f32.xlu0 %v5676
        %v6039 = vpop.xlane.xlu0 %6038
        %6040 = vadd.xlane.f32.xlu0 %v5677
        %v6041 = vpop.xlane.xlu0 %6040
        %6042 = vadd.xlane.f32.xlu0 %v5678
        %v6043 = vpop.xlane.xlu0 %6042
        %6044 = vadd.xlane.f32.xlu0 %v5679
        %v6045 = vpop.xlane.xlu0 %6044
        %6046 = vadd.xlane.f32.xlu0 %v5680
        %v6047 = vpop.xlane.xlu0 %6046
        %6048 = vadd.xlane.f32.xlu0 %v5681
        %v6049 = vpop.xlane.xlu0 %6048
        %6050 = vadd.xlane.f32.xlu0 %v5682
        %v6051 = vpop.xlane.xlu0 %6050
        %6052 = vadd.xlane.f32.xlu0 %v5683
        %v6053 = vpop.xlane.xlu0 %6052
        %6054 = vadd.xlane.f32.xlu0 %v5684
        %v6055 = vpop.xlane.xlu0 %6054
        %6056 = vadd.xlane.f32.xlu0 %v5685
        %v6057 = vpop.xlane.xlu0 %6056
        %6058 = vadd.xlane.f32.xlu0 %v5686
        %v6059 = vpop.xlane.xlu0 %6058
        %6060 = vadd.xlane.f32.xlu0 %v5687
        %v6061 = vpop.xlane.xlu0 %6060
        %6062 = vadd.xlane.f32.xlu0 %v5688
        %v6063 = vpop.xlane.xlu0 %6062
        %6064 = vadd.xlane.f32.xlu0 %v5689
        %v6065 = vpop.xlane.xlu0 %6064
        %6066 = vadd.xlane.f32.xlu0 %v5690
        %v6067 = vpop.xlane.xlu0 %6066
        %6068 = vadd.xlane.f32.xlu0 %v5691
        %v6069 = vpop.xlane.xlu0 %6068
        %6070 = vadd.xlane.f32.xlu0 %v5692
        %v6071 = vpop.xlane.xlu0 %6070
        %6072 = vadd.xlane.f32.xlu0 %v5693
        %v6073 = vpop.xlane.xlu0 %6072
        %6074 = vadd.xlane.f32.xlu0 %v5694
        %v6075 = vpop.xlane.xlu0 %6074
        %6076 = vadd.xlane.f32.xlu0 %v5695
        %v6077 = vpop.xlane.xlu0 %6076
        %6078 = vadd.xlane.f32.xlu0 %v5696
        %v6079 = vpop.xlane.xlu0 %6078
        %6080 = vadd.xlane.f32.xlu0 %v5697
        %v6081 = vpop.xlane.xlu0 %6080
        %v6082 = vadd.f32 %v5698, %v5827
        %v6083 = vadd.f32 %v5699, %v5829
        %v6084 = vadd.f32 %v5700, %v5831
        %v6085 = vadd.f32 %v5701, %v5833
        %v6086 = vadd.f32 %v5702, %v5835
        %v6087 = vadd.f32 %v5703, %v5837
        %v6088 = vadd.f32 %v5704, %v5839
        %v6089 = vadd.f32 %v5705, %v5841
        %v6090 = vadd.f32 %v5706, %v5843
        %v6091 = vadd.f32 %v5707, %v5845
        %v6092 = vadd.f32 %v5708, %v5847
        %v6093 = vadd.f32 %v5709, %v5849
        %v6094 = vadd.f32 %v5710, %v5851
        %v6095 = vadd.f32 %v5711, %v5853
        %v6096 = vadd.f32 %v5712, %v5855
        %v6097 = vadd.f32 %v5713, %v5857
        %v6098 = vadd.f32 %v5714, %v5859
        %v6099 = vadd.f32 %v5715, %v5861
        %v6100 = vadd.f32 %v5716, %v5863
        %v6101 = vadd.f32 %v5717, %v5865
        %v6102 = vadd.f32 %v5718, %v5867
        %v6103 = vadd.f32 %v5719, %v5869
        %v6104 = vadd.f32 %v5720, %v5871
        %v6105 = vadd.f32 %v5721, %v5873
        %v6106 = vadd.f32 %v5722, %v5875
        %v6107 = vadd.f32 %v5723, %v5877
        %v6108 = vadd.f32 %v5724, %v5879
        %v6109 = vadd.f32 %v5725, %v5881
        %v6110 = vadd.f32 %v5726, %v5883
        %v6111 = vadd.f32 %v5727, %v5885
        %v6112 = vadd.f32 %v5728, %v5887
        %v6113 = vadd.f32 %v5729, %v5889
        %v6114 = vadd.f32 %v5730, %v5891
        %v6115 = vadd.f32 %v5731, %v5893
        %v6116 = vadd.f32 %v5732, %v5895
        %v6117 = vadd.f32 %v5733, %v5897
        %v6118 = vadd.f32 %v5734, %v5899
        %v6119 = vadd.f32 %v5735, %v5901
        %v6120 = vadd.f32 %v5736, %v5903
        %v6121 = vadd.f32 %v5737, %v5905
        %v6122 = vadd.f32 %v5738, %v5907
        %v6123 = vadd.f32 %v5739, %v5909
        %v6124 = vadd.f32 %v5740, %v5911
        %v6125 = vadd.f32 %v5741, %v5913
        %v6126 = vadd.f32 %v5742, %v5915
        %v6127 = vadd.f32 %v5743, %v5917
        %v6128 = vadd.f32 %v5744, %v5919
        %v6129 = vadd.f32 %v5745, %v5921
        %v6130 = vadd.f32 %v5746, %v5923
        %v6131 = vadd.f32 %v5747, %v5925
        %v6132 = vadd.f32 %v5748, %v5927
        %v6133 = vadd.f32 %v5749, %v5929
        %v6134 = vadd.f32 %v5750, %v5931
        %v6135 = vadd.f32 %v5751, %v5933
        %v6136 = vadd.f32 %v5752, %v5935
        %v6137 = vadd.f32 %v5753, %v5937
        %v6138 = vadd.f32 %v5754, %v5939
        %v6139 = vadd.f32 %v5755, %v5941
        %v6140 = vadd.f32 %v5756, %v5943
        %v6141 = vadd.f32 %v5757, %v5945
        %v6142 = vadd.f32 %v5758, %v5947
        %v6143 = vadd.f32 %v5759, %v5949
        %v6144 = vadd.f32 %v5760, %v5951
        %v6145 = vadd.f32 %v5761, %v5953
        %v6146 = vadd.f32 %v5762, %v5955
        %v6147 = vadd.f32 %v5763, %v5957
        %v6148 = vadd.f32 %v5764, %v5959
        %v6149 = vadd.f32 %v5765, %v5961
        %v6150 = vadd.f32 %v5766, %v5963
        %v6151 = vadd.f32 %v5767, %v5965
        %v6152 = vadd.f32 %v5768, %v5967
        %v6153 = vadd.f32 %v5769, %v5969
        %v6154 = vadd.f32 %v5770, %v5971
        %v6155 = vadd.f32 %v5771, %v5973
        %v6156 = vadd.f32 %v5772, %v5975
        %v6157 = vadd.f32 %v5773, %v5977
        %v6158 = vadd.f32 %v5774, %v5979
        %v6159 = vadd.f32 %v5775, %v5981
        %v6160 = vadd.f32 %v5776, %v5983
        %v6161 = vadd.f32 %v5777, %v5985
        %v6162 = vadd.f32 %v5778, %v5987
        %v6163 = vadd.f32 %v5779, %v5989
        %v6164 = vadd.f32 %v5780, %v5991
        %v6165 = vadd.f32 %v5781, %v5993
        %v6166 = vadd.f32 %v5782, %v5995
        %v6167 = vadd.f32 %v5783, %v5997
        %v6168 = vadd.f32 %v5784, %v5999
        %v6169 = vadd.f32 %v5785, %v6001
        %v6170 = vadd.f32 %v5786, %v6003
        %v6171 = vadd.f32 %v5787, %v6005
        %v6172 = vadd.f32 %v5788, %v6007
        %v6173 = vadd.f32 %v5789, %v6009
        %v6174 = vadd.f32 %v5790, %v6011
        %v6175 = vadd.f32 %v5791, %v6013
        %v6176 = vadd.f32 %v5792, %v6015
        %v6177 = vadd.f32 %v5793, %v6017
        %v6178 = vadd.f32 %v5794, %v6019
        %v6179 = vadd.f32 %v5795, %v6021
        %v6180 = vadd.f32 %v5796, %v6023
        %v6181 = vadd.f32 %v5797, %v6025
        %v6182 = vadd.f32 %v5798, %v6027
        %v6183 = vadd.f32 %v5799, %v6029
        %v6184 = vadd.f32 %v5800, %v6031
        %v6185 = vadd.f32 %v5801, %v6033
        %v6186 = vadd.f32 %v5802, %v6035
        %v6187 = vadd.f32 %v5803, %v6037
        %v6188 = vadd.f32 %v5804, %v6039
        %v6189 = vadd.f32 %v5805, %v6041
        %v6190 = vadd.f32 %v5806, %v6043
        %v6191 = vadd.f32 %v5807, %v6045
        %v6192 = vadd.f32 %v5808, %v6047
        %v6193 = vadd.f32 %v5809, %v6049
        %v6194 = vadd.f32 %v5810, %v6051
        %v6195 = vadd.f32 %v5811, %v6053
        %v6196 = vadd.f32 %v5812, %v6055
        %v6197 = vadd.f32 %v5813, %v6057
        %v6198 = vadd.f32 %v5814, %v6059
        %v6199 = vadd.f32 %v5815, %v6061
        %v6200 = vadd.f32 %v5816, %v6063
        %v6201 = vadd.f32 %v5817, %v6065
        %v6202 = vadd.f32 %v5818, %v6067
        %v6203 = vadd.f32 %v5819, %v6069
        %v6204 = vadd.f32 %v5820, %v6071
        %v6205 = vadd.f32 %v5821, %v6073
        %v6206 = vadd.f32 %v5822, %v6075
        %v6207 = vadd.f32 %v5823, %v6077
        %v6208 = vadd.f32 %v5824, %v6079
        %v6209 = vadd.f32 %v5825, %v6081
        %vm6210 = vcmask 7168
        %6211 = vst.msk [vmem:[%s371] sm:$0xff] %vm6210, %v6082
        %6212 = vst.msk [vmem:[%s371 + $0x8] sm:$0xff] %vm6210, %v6083
        %6213 = vst.msk [vmem:[%s371 + $0x10] sm:$0xff] %vm6210, %v6084
        %6214 = vst.msk [vmem:[%s371 + $0x18] sm:$0xff] %vm6210, %v6085
        %6215 = vst.msk [vmem:[%s371 + $0x20] sm:$0xff] %vm6210, %v6086
        %6216 = vst.msk [vmem:[%s371 + $0x28] sm:$0xff] %vm6210, %v6087
        %6217 = vst.msk [vmem:[%s371 + $0x30] sm:$0xff] %vm6210, %v6088
        %6218 = vst.msk [vmem:[%s371 + $0x38] sm:$0xff] %vm6210, %v6089
        %6219 = vst.msk [vmem:[%s371 + $0x40] sm:$0xff] %vm6210, %v6090
        %6220 = vst.msk [vmem:[%s371 + $0x48] sm:$0xff] %vm6210, %v6091
        %6221 = vst.msk [vmem:[%s371 + $0x50] sm:$0xff] %vm6210, %v6092
        %6222 = vst.msk [vmem:[%s371 + $0x58] sm:$0xff] %vm6210, %v6093
        %6223 = vst.msk [vmem:[%s371 + $0x60] sm:$0xff] %vm6210, %v6094
        %6224 = vst.msk [vmem:[%s371 + $0x68] sm:$0xff] %vm6210, %v6095
        %6225 = vst.msk [vmem:[%s371 + $0x70] sm:$0xff] %vm6210, %v6096
        %6226 = vst.msk [vmem:[%s371 + $0x78] sm:$0xff] %vm6210, %v6097
        %6227 = vst.msk [vmem:[%s371 + $0x80] sm:$0xff] %vm6210, %v6098
        %6228 = vst.msk [vmem:[%s371 + $0x88] sm:$0xff] %vm6210, %v6099
        %6229 = vst.msk [vmem:[%s371 + $0x90] sm:$0xff] %vm6210, %v6100
        %6230 = vst.msk [vmem:[%s371 + $0x98] sm:$0xff] %vm6210, %v6101
        %6231 = vst.msk [vmem:[%s371 + $0xa0] sm:$0xff] %vm6210, %v6102
        %6232 = vst.msk [vmem:[%s371 + $0xa8] sm:$0xff] %vm6210, %v6103
        %6233 = vst.msk [vmem:[%s371 + $0xb0] sm:$0xff] %vm6210, %v6104
        %6234 = vst.msk [vmem:[%s371 + $0xb8] sm:$0xff] %vm6210, %v6105
        %6235 = vst.msk [vmem:[%s371 + $0xc0] sm:$0xff] %vm6210, %v6106
        %6236 = vst.msk [vmem:[%s371 + $0xc8] sm:$0xff] %vm6210, %v6107
        %6237 = vst.msk [vmem:[%s371 + $0xd0] sm:$0xff] %vm6210, %v6108
        %6238 = vst.msk [vmem:[%s371 + $0xd8] sm:$0xff] %vm6210, %v6109
        %6239 = vst.msk [vmem:[%s371 + $0xe0] sm:$0xff] %vm6210, %v6110
        %6240 = vst.msk [vmem:[%s371 + $0xe8] sm:$0xff] %vm6210, %v6111
        %6241 = vst.msk [vmem:[%s371 + $0xf0] sm:$0xff] %vm6210, %v6112
        %6242 = vst.msk [vmem:[%s371 + $0xf8] sm:$0xff] %vm6210, %v6113
        %6243 = vst.msk [vmem:[%s371 + $0x100] sm:$0xff] %vm6210, %v6114
        %6244 = vst.msk [vmem:[%s371 + $0x108] sm:$0xff] %vm6210, %v6115
        %6245 = vst.msk [vmem:[%s371 + $0x110] sm:$0xff] %vm6210, %v6116
        %6246 = vst.msk [vmem:[%s371 + $0x118] sm:$0xff] %vm6210, %v6117
        %6247 = vst.msk [vmem:[%s371 + $0x120] sm:$0xff] %vm6210, %v6118
        %6248 = vst.msk [vmem:[%s371 + $0x128] sm:$0xff] %vm6210, %v6119
        %6249 = vst.msk [vmem:[%s371 + $0x130] sm:$0xff] %vm6210, %v6120
        %6250 = vst.msk [vmem:[%s371 + $0x138] sm:$0xff] %vm6210, %v6121
        %6251 = vst.msk [vmem:[%s371 + $0x140] sm:$0xff] %vm6210, %v6122
        %6252 = vst.msk [vmem:[%s371 + $0x148] sm:$0xff] %vm6210, %v6123
        %6253 = vst.msk [vmem:[%s371 + $0x150] sm:$0xff] %vm6210, %v6124
        %6254 = vst.msk [vmem:[%s371 + $0x158] sm:$0xff] %vm6210, %v6125
        %6255 = vst.msk [vmem:[%s371 + $0x160] sm:$0xff] %vm6210, %v6126
        %6256 = vst.msk [vmem:[%s371 + $0x168] sm:$0xff] %vm6210, %v6127
        %6257 = vst.msk [vmem:[%s371 + $0x170] sm:$0xff] %vm6210, %v6128
        %6258 = vst.msk [vmem:[%s371 + $0x178] sm:$0xff] %vm6210, %v6129
        %6259 = vst.msk [vmem:[%s371 + $0x180] sm:$0xff] %vm6210, %v6130
        %6260 = vst.msk [vmem:[%s371 + $0x188] sm:$0xff] %vm6210, %v6131
        %6261 = vst.msk [vmem:[%s371 + $0x190] sm:$0xff] %vm6210, %v6132
        %6262 = vst.msk [vmem:[%s371 + $0x198] sm:$0xff] %vm6210, %v6133
        %6263 = vst.msk [vmem:[%s371 + $0x1a0] sm:$0xff] %vm6210, %v6134
        %6264 = vst.msk [vmem:[%s371 + $0x1a8] sm:$0xff] %vm6210, %v6135
        %6265 = vst.msk [vmem:[%s371 + $0x1b0] sm:$0xff] %vm6210, %v6136
        %6266 = vst.msk [vmem:[%s371 + $0x1b8] sm:$0xff] %vm6210, %v6137
        %6267 = vst.msk [vmem:[%s371 + $0x1c0] sm:$0xff] %vm6210, %v6138
        %6268 = vst.msk [vmem:[%s371 + $0x1c8] sm:$0xff] %vm6210, %v6139
        %6269 = vst.msk [vmem:[%s371 + $0x1d0] sm:$0xff] %vm6210, %v6140
        %6270 = vst.msk [vmem:[%s371 + $0x1d8] sm:$0xff] %vm6210, %v6141
        %6271 = vst.msk [vmem:[%s371 + $0x1e0] sm:$0xff] %vm6210, %v6142
        %6272 = vst.msk [vmem:[%s371 + $0x1e8] sm:$0xff] %vm6210, %v6143
        %6273 = vst.msk [vmem:[%s371 + $0x1f0] sm:$0xff] %vm6210, %v6144
        %6274 = vst.msk [vmem:[%s371 + $0x1f8] sm:$0xff] %vm6210, %v6145
        %6275 = vst.msk [vmem:[%s371 + $0x200] sm:$0xff] %vm6210, %v6146
        %6276 = vst.msk [vmem:[%s371 + $0x208] sm:$0xff] %vm6210, %v6147
        %6277 = vst.msk [vmem:[%s371 + $0x210] sm:$0xff] %vm6210, %v6148
        %6278 = vst.msk [vmem:[%s371 + $0x218] sm:$0xff] %vm6210, %v6149
        %6279 = vst.msk [vmem:[%s371 + $0x220] sm:$0xff] %vm6210, %v6150
        %6280 = vst.msk [vmem:[%s371 + $0x228] sm:$0xff] %vm6210, %v6151
        %6281 = vst.msk [vmem:[%s371 + $0x230] sm:$0xff] %vm6210, %v6152
        %6282 = vst.msk [vmem:[%s371 + $0x238] sm:$0xff] %vm6210, %v6153
        %6283 = vst.msk [vmem:[%s371 + $0x240] sm:$0xff] %vm6210, %v6154
        %6284 = vst.msk [vmem:[%s371 + $0x248] sm:$0xff] %vm6210, %v6155
        %6285 = vst.msk [vmem:[%s371 + $0x250] sm:$0xff] %vm6210, %v6156
        %6286 = vst.msk [vmem:[%s371 + $0x258] sm:$0xff] %vm6210, %v6157
        %6287 = vst.msk [vmem:[%s371 + $0x260] sm:$0xff] %vm6210, %v6158
        %6288 = vst.msk [vmem:[%s371 + $0x268] sm:$0xff] %vm6210, %v6159
        %6289 = vst.msk [vmem:[%s371 + $0x270] sm:$0xff] %vm6210, %v6160
        %6290 = vst.msk [vmem:[%s371 + $0x278] sm:$0xff] %vm6210, %v6161
        %6291 = vst.msk [vmem:[%s371 + $0x280] sm:$0xff] %vm6210, %v6162
        %6292 = vst.msk [vmem:[%s371 + $0x288] sm:$0xff] %vm6210, %v6163
        %6293 = vst.msk [vmem:[%s371 + $0x290] sm:$0xff] %vm6210, %v6164
        %6294 = vst.msk [vmem:[%s371 + $0x298] sm:$0xff] %vm6210, %v6165
        %6295 = vst.msk [vmem:[%s371 + $0x2a0] sm:$0xff] %vm6210, %v6166
        %6296 = vst.msk [vmem:[%s371 + $0x2a8] sm:$0xff] %vm6210, %v6167
        %6297 = vst.msk [vmem:[%s371 + $0x2b0] sm:$0xff] %vm6210, %v6168
        %6298 = vst.msk [vmem:[%s371 + $0x2b8] sm:$0xff] %vm6210, %v6169
        %6299 = vst.msk [vmem:[%s371 + $0x2c0] sm:$0xff] %vm6210, %v6170
        %6300 = vst.msk [vmem:[%s371 + $0x2c8] sm:$0xff] %vm6210, %v6171
        %6301 = vst.msk [vmem:[%s371 + $0x2d0] sm:$0xff] %vm6210, %v6172
        %6302 = vst.msk [vmem:[%s371 + $0x2d8] sm:$0xff] %vm6210, %v6173
        %6303 = vst.msk [vmem:[%s371 + $0x2e0] sm:$0xff] %vm6210, %v6174
        %6304 = vst.msk [vmem:[%s371 + $0x2e8] sm:$0xff] %vm6210, %v6175
        %6305 = vst.msk [vmem:[%s371 + $0x2f0] sm:$0xff] %vm6210, %v6176
        %6306 = vst.msk [vmem:[%s371 + $0x2f8] sm:$0xff] %vm6210, %v6177
        %6307 = vst.msk [vmem:[%s371 + $0x300] sm:$0xff] %vm6210, %v6178
        %6308 = vst.msk [vmem:[%s371 + $0x308] sm:$0xff] %vm6210, %v6179
        %6309 = vst.msk [vmem:[%s371 + $0x310] sm:$0xff] %vm6210, %v6180
        %6310 = vst.msk [vmem:[%s371 + $0x318] sm:$0xff] %vm6210, %v6181
        %6311 = vst.msk [vmem:[%s371 + $0x320] sm:$0xff] %vm6210, %v6182
        %6312 = vst.msk [vmem:[%s371 + $0x328] sm:$0xff] %vm6210, %v6183
        %6313 = vst.msk [vmem:[%s371 + $0x330] sm:$0xff] %vm6210, %v6184
        %6314 = vst.msk [vmem:[%s371 + $0x338] sm:$0xff] %vm6210, %v6185
        %6315 = vst.msk [vmem:[%s371 + $0x340] sm:$0xff] %vm6210, %v6186
        %6316 = vst.msk [vmem:[%s371 + $0x348] sm:$0xff] %vm6210, %v6187
        %6317 = vst.msk [vmem:[%s371 + $0x350] sm:$0xff] %vm6210, %v6188
        %6318 = vst.msk [vmem:[%s371 + $0x358] sm:$0xff] %vm6210, %v6189
        %6319 = vst.msk [vmem:[%s371 + $0x360] sm:$0xff] %vm6210, %v6190
        %6320 = vst.msk [vmem:[%s371 + $0x368] sm:$0xff] %vm6210, %v6191
        %6321 = vst.msk [vmem:[%s371 + $0x370] sm:$0xff] %vm6210, %v6192
        %6322 = vst.msk [vmem:[%s371 + $0x378] sm:$0xff] %vm6210, %v6193
        %6323 = vst.msk [vmem:[%s371 + $0x380] sm:$0xff] %vm6210, %v6194
        %6324 = vst.msk [vmem:[%s371 + $0x388] sm:$0xff] %vm6210, %v6195
        %6325 = vst.msk [vmem:[%s371 + $0x390] sm:$0xff] %vm6210, %v6196
        %6326 = vst.msk [vmem:[%s371 + $0x398] sm:$0xff] %vm6210, %v6197
        %6327 = vst.msk [vmem:[%s371 + $0x3a0] sm:$0xff] %vm6210, %v6198
        %6328 = vst.msk [vmem:[%s371 + $0x3a8] sm:$0xff] %vm6210, %v6199
        %6329 = vst.msk [vmem:[%s371 + $0x3b0] sm:$0xff] %vm6210, %v6200
        %6330 = vst.msk [vmem:[%s371 + $0x3b8] sm:$0xff] %vm6210, %v6201
        %6331 = vst.msk [vmem:[%s371 + $0x3c0] sm:$0xff] %vm6210, %v6202
        %6332 = vst.msk [vmem:[%s371 + $0x3c8] sm:$0xff] %vm6210, %v6203
        %6333 = vst.msk [vmem:[%s371 + $0x3d0] sm:$0xff] %vm6210, %v6204
        %6334 = vst.msk [vmem:[%s371 + $0x3d8] sm:$0xff] %vm6210, %v6205
        %6335 = vst.msk [vmem:[%s371 + $0x3e0] sm:$0xff] %vm6210, %v6206
        %6336 = vst.msk [vmem:[%s371 + $0x3e8] sm:$0xff] %vm6210, %v6207
        %6337 = vst.msk [vmem:[%s371 + $0x3f0] sm:$0xff] %vm6210, %v6208
        %6338 = vst.msk [vmem:[%s371 + $0x3f8] sm:$0xff] %vm6210, %v6209
        %p6339 = scmp.lt.s32.totalorder %s24, 1
        %s6340 = scalar_select %p6339, %s24, 1
        %s6341 = smul.addr %s6340, 128
        %s6342 = smul.addr %s6341, 8
        %s6343 = scalar_lea.vmem %s8, %s6342
        // Predicated region
        $region61: #{tpu_custom_call.1} parent=51 // pred_check
          %p6344 = pneg %p232
        $region62: #{tpu_custom_call.1} parent=51 // pred_check_branch
          %6346 = sbr.rel (%p6344) target = $region64
        $region63: #{tpu_custom_call.1} parent=51 // pred_region
          _
        $region64: #{tpu_custom_call.1} parent=51 // pred_fallthru
          _
      $region52: #{tpu_custom_call.1} parent=5 // pred_fallthru
        _
      %p6347 = scmp.le.s32.totalorder 2, %s15
      // Predicated region
      $region65: #{tpu_custom_call.1} parent=5 // pred_check
        %p6348 = pneg %p6347
      $region66: #{tpu_custom_call.1} parent=5 // pred_check_branch
        %6350 = sbr.rel (%p6348) target = $region68
      $region67: #{tpu_custom_call.1} parent=5 // pred_region
        %s6351 = ssub.s32 %s15, 2
        // Predicated region
        $region69: #{tpu_custom_call.1} parent=67 // pred_check
          %p6352 = pneg %p238
        $region70: #{tpu_custom_call.1} parent=67 // pred_check_branch
          %6354 = sbr.rel (%p6352) target = $region72
        $region71: #{tpu_custom_call.1} parent=67 // pred_region
          %p6355 = scmp.lt.s32.totalorder %s26, 1
          %s6356 = scalar_select %p6355, %s26, 1
          %s6357 = smul.addr %s6356, 128
          %s6358 = smul.addr %s6357, 8
          %s6359 = scalar_lea.vmem %s8, %s6358
        $region72: #{tpu_custom_call.1} parent=67 // pred_fallthru
          _
      $region68: #{tpu_custom_call.1} parent=5 // pred_fallthru
        _
    $region6: #{tpu_custom_call.1} parent=1 // loop_footer
      %s19 = sadd.s32 1, %s15
    $region7: #{tpu_custom_call.1} parent=1 // loop_footer_branch
      %14 = sbr.rel target = $region3
    $region8: #{tpu_custom_call.1} parent=1 // loop_exit
      _
    %6360 = vsyncpa [#allocation3], 1
    %s6361 = scalar_lea.sflag [#allocation3], 1
    %6362 = vsyncpa %s6361, 1

</llo_original>
